<compile_context>
chip_gen: v7x
topology: tpu7x:2x2x1
jax: 0.10.0
libtpu: 0.0.40
codegen_flags: <defaults>
</compile_context>

<pallas_src>
import functools

import jax
import jax.numpy as jnp
from jax import lax
from jax.experimental import pallas as pl
from jax.experimental.pallas import tpu as pltpu

BN_EPS = 1e-5                      # PyTorch BatchNorm2d default
VMEM_LIMIT = 32 * 1024 * 1024      # safe on v5e/v6e (128 MiB) and v7x (64 MiB physical)


def _round_up(x, m):
    return (x + m - 1) // m * m


# ----------------------------- Pallas kernels ------------------------------ #
def fused_gemm_bn_relu_kernel(a_ref, w_ref, g_ref, b_ref, o_ref, *, groups, rows):
    """One layer in one kernel: GEMM (bf16 in, f32 MXU acc) -> per-channel batch stats
    (combined across the `groups` 128-aligned phase column groups) -> train-mode BN
    scale/shift -> ReLU -> bf16 store."""
    acc = jnp.dot(a_ref[...], w_ref[...], preferred_element_type=jnp.float32)
    mp, ntot = acc.shape
    cpg = ntot // groups
    inv_count = 1.0 / float(rows * groups)

    # per-channel sum over all rows and phase groups (group slices are 128-lane aligned)
    colsum = jnp.zeros((1, cpg), jnp.float32)
    for g in range(groups):
        colsum = colsum + jnp.sum(acc[:, g * cpg:(g + 1) * cpg], axis=0, keepdims=True)
    mean = colsum * inv_count

    # centered (biased) variance in f32; mask zero-padded rows if M was padded
    var = jnp.zeros((1, cpg), jnp.float32)
    for g in range(groups):
        d = acc[:, g * cpg:(g + 1) * cpg] - mean
        if mp != rows:
            row_ok = lax.broadcasted_iota(jnp.int32, (mp, cpg), 0) < rows
            d = jnp.where(row_ok, d, 0.0)
        var = var + jnp.sum(d * d, axis=0, keepdims=True)
    var = var * inv_count

    scale = g_ref[...] * lax.rsqrt(var + BN_EPS)      # (1, cpg) f32
    shift = b_ref[...] - mean * scale
    if groups > 1:                                     # tile per-channel rows over phases
        scale = jnp.concatenate([scale] * groups, axis=1)
        shift = jnp.concatenate([shift] * groups, axis=1)
    o_ref[...] = jnp.maximum(acc * scale + shift, 0.0).astype(o_ref.dtype)


def gemm_bias_kernel(a_ref, w_ref, b_ref, o_ref):
    """Final layer: o = A @ W + bias (no BN, no ReLU), f32 output."""
    acc = jnp.dot(a_ref[...], w_ref[...], preferred_element_type=jnp.float32)
    o_ref[...] = (acc + b_ref[...]).astype(o_ref.dtype)


# ----------------------------- Pallas wrappers ----------------------------- #
def _layer_cost(mp, kp, ntot, out_bytes):
    return pl.CostEstimate(
        flops=2 * mp * kp * ntot + 10 * mp * ntot,
        transcendentals=ntot,
        bytes_accessed=mp * kp * 2 + kp * ntot * 2 + mp * ntot * out_bytes + 4 * ntot * 4)


def fused_layer_call(cols, wmat, gamma_row, beta_row, *, groups, rows):
    mp, kp = cols.shape
    ntot = wmat.shape[1]
    cpg = ntot // groups
    # everything (A, W, f32 acc, bf16 out) must fit in VMEM for the single-call design
    assert mp * kp * 2 + kp * ntot * 2 + mp * ntot * 6 < VMEM_LIMIT, (
        "TODO(synk): add M-tiled two-pass fallback for large inputs")
    kern = functools.partial(fused_gemm_bn_relu_kernel, groups=groups, rows=rows)
    return pl.pallas_call(
        kern,
        out_shape=jax.ShapeDtypeStruct((mp, ntot), jnp.bfloat16),
        grid=(1,),
        in_specs=[pl.BlockSpec((mp, kp), lambda i: (0, 0)),
                  pl.BlockSpec((kp, ntot), lambda i: (0, 0)),
                  pl.BlockSpec((1, cpg), lambda i: (0, 0)),
                  pl.BlockSpec((1, cpg), lambda i: (0, 0))],
        out_specs=pl.BlockSpec((mp, ntot), lambda i: (0, 0)),
        compiler_params=pltpu.CompilerParams(
            dimension_semantics=("arbitrary",), vmem_limit_bytes=VMEM_LIMIT),
        cost_estimate=_layer_cost(mp, kp, ntot, 2),
    )(cols, wmat, gamma_row, beta_row)


def gemm_bias_call(cols, wmat, bias_row):
    mp, kp = cols.shape
    ntot = wmat.shape[1]
    return pl.pallas_call(
        gemm_bias_kernel,
        out_shape=jax.ShapeDtypeStruct((mp, ntot), jnp.float32),
        grid=(1,),
        in_specs=[pl.BlockSpec((mp, kp), lambda i: (0, 0)),
                  pl.BlockSpec((kp, ntot), lambda i: (0, 0)),
                  pl.BlockSpec((1, ntot), lambda i: (0, 0))],
        out_specs=pl.BlockSpec((mp, ntot), lambda i: (0, 0)),
        compiler_params=pltpu.CompilerParams(
            dimension_semantics=("arbitrary",), vmem_limit_bytes=VMEM_LIMIT),
        cost_estimate=_layer_cost(mp, kp, ntot, 4),
    )(cols, wmat, bias_row)


# ------------------------------ JAX glue ----------------------------------- #
def im2col(x, k, stride, pad):
    """x: (N,H,W,C) -> patches (N*OH*OW, k*k*C), tap-major order (kh, kw, cin)."""
    n, h, w, c = x.shape
    xp = jnp.pad(x, ((0, 0), (pad, pad), (pad, pad), (0, 0)))
    oh = (h + 2 * pad - k) // stride + 1
    ow = (w + 2 * pad - k) // stride + 1
    pieces = []
    for i in range(k):
        for j in range(k):
            pieces.append(xp[:, i:i + stride * oh:stride, j:j + stride * ow:stride, :])
    cols = jnp.concatenate(pieces, axis=-1)
    return cols.reshape(n * oh * ow, k * k * c), oh, ow, n


def _pad_cols(cols):
    m, kk = cols.shape
    kp = _round_up(kk, 16)
    mp = _round_up(m, 8)
    if kp != kk or mp != m:
        cols = jnp.pad(cols, ((0, mp - m), (0, kp - kk)))
    return cols, m, kk, kp


def conv_bn_relu(x, w, gamma, beta):
    """Conv2d(k=3, s=2, p=1) + train-mode BN + ReLU.
    Conv bias is omitted: BN mean subtraction cancels any per-channel bias exactly."""
    cout, cin, k, _ = w.shape
    cols, oh, ow, n = im2col(x, k, 2, 1)
    cols, m, kk, kp = _pad_cols(cols)
    cpg = _round_up(cout, 128)
    wmat = jnp.transpose(w, (2, 3, 1, 0)).reshape(kk, cout)
    wmat = jnp.pad(wmat, ((0, kp - kk), (0, cpg - cout))).astype(jnp.bfloat16)
    g_row = jnp.pad(gamma, (0, cpg - cout), constant_values=1.0).reshape(1, cpg).astype(jnp.float32)
    b_row = jnp.pad(beta, (0, cpg - cout)).reshape(1, cpg).astype(jnp.float32)
    out = fused_layer_call(cols, wmat, g_row, b_row, groups=1, rows=m)
    return out[:m, :cout].reshape(n, oh, ow, cout)


# Sub-pixel decomposition of ConvTranspose2d(k=4, stride=2, padding=1):
#   out[2m+a, 2n+b] = sum_{(di,ky) in S_a, (dj,kx) in S_b} in[m+di, n+dj] * W[ci,co,ky,kx]
#   with S_0 = {(0,1), (-1,3)},  S_1 = {(+1,0), (0,2)}
# i.e. each output phase is a stride-1 3x3 conv over the un-upsampled input; all 4 phases
# share one im2col window and one GEMM whose columns are 4 phase groups (each 128-padded).
_PHASE_TAPS = {0: ((0, 1), (-1, 3)), 1: ((1, 0), (0, 2))}


def convT_phase_weight(wt, cpg):
    """wt: (Cin, Cout, 4, 4) -> (9*Cin, 4*cpg) GEMM weight, phase-major 128-padded groups."""
    cin, cout = wt.shape[0], wt.shape[1]
    blocks = []
    for a in (0, 1):
        for b in (0, 1):
            blk = jnp.zeros((3, 3, cin, cout), wt.dtype)
            for di, ky in _PHASE_TAPS[a]:
                for dj, kx in _PHASE_TAPS[b]:
                    blk = blk.at[di + 1, dj + 1].set(wt[:, :, ky, kx])
            blk = blk.reshape(9 * cin, cout)
            blocks.append(jnp.pad(blk, ((0, 0), (0, cpg - cout))))
    return jnp.concatenate(blocks, axis=1)


def _interleave_phases(flat, n, h, w, cout, cpg):
    """(N*H*W, 4*cpg) phase-major (groups padded to cpg) -> (N, 2H, 2W, Cout)."""
    y = flat.reshape(n, h, w, 2, 2, cpg)[..., :cout]   # (n, m, j, a, b, c)
    y = jnp.transpose(y, (0, 1, 3, 2, 4, 5))           # (n, m, a, j, b, c)
    return y.reshape(n, 2 * h, 2 * w, cout)


def convT_bn_relu(x, wt, gamma, beta):
    """ConvTranspose2d(k=4, s=2, p=1) + train-mode BN + ReLU (bias cancelled by BN)."""
    cout = wt.shape[1]
    n, h, w_, _ = x.shape
    cols, _, _, _ = im2col(x, 3, 1, 1)                 # (N*H*W, 9*Cin)
    cols, m, kk, kp = _pad_cols(cols)
    cpg = _round_up(cout, 128)
    wmat = jnp.pad(convT_phase_weight(wt, cpg), ((0, kp - kk), (0, 0))).astype(jnp.bfloat16)
    g_row = jnp.pad(gamma, (0, cpg - cout), constant_values=1.0).reshape(1, cpg).astype(jnp.float32)
    b_row = jnp.pad(beta, (0, cpg - cout)).reshape(1, cpg).astype(jnp.float32)
    out = fused_layer_call(cols, wmat, g_row, b_row, groups=4, rows=m)
    return _interleave_phases(out[:m], n, h, w_, cout, cpg)


def convT_final(x, wt, bias):
    """Final ConvTranspose2d(k=4, s=2, p=1) with bias, no BN / ReLU, f32 output."""
    cout = wt.shape[1]
    n, h, w_, _ = x.shape
    cols, _, _, _ = im2col(x, 3, 1, 1)
    cols, m, kk, kp = _pad_cols(cols)
    cpg = _round_up(cout, 128)
    wmat = jnp.pad(convT_phase_weight(wt, cpg), ((0, kp - kk), (0, 0))).astype(jnp.bfloat16)
    bias_row = jnp.tile(jnp.pad(bias, (0, cpg - cout)), (4,)).reshape(1, 4 * cpg).astype(jnp.float32)
    out = gemm_bias_call(cols, wmat, bias_row)
    return _interleave_phases(out[:m], n, h, w_, cout, cpg)


# ---------------------------- parameters ----------------------------------- #
def init_params(key, num_classes=21):
    ks = jax.random.split(key, 8)
    p = {}

    def w(k, shape, fan_in):
        return jax.random.normal(k, shape, jnp.float32) / jnp.sqrt(fan_in)

    # encoder convs: (Cout, Cin, 3, 3)
    p["w1"] = w(ks[0], (32, 3, 3, 3), 3 * 9)
    p["w2"] = w(ks[1], (64, 32, 3, 3), 32 * 9)
    p["w3"] = w(ks[2], (128, 64, 3, 3), 64 * 9)
    p["g1"], p["be1"] = jnp.ones((32,)), jnp.zeros((32,))
    p["g2"], p["be2"] = jnp.ones((64,)), jnp.zeros((64,))
    p["g3"], p["be3"] = jnp.ones((128,)), jnp.zeros((128,))
    # decoder conv-transposes: (Cin, Cout, 4, 4)
    p["wt1"] = w(ks[3], (128, 64, 4, 4), 128 * 16)
    p["wt2"] = w(ks[4], (64, 32, 4, 4), 64 * 16)
    p["wt3"] = w(ks[5], (32, num_classes, 4, 4), 32 * 16)
    p["bt3"] = 0.01 * jax.random.normal(ks[6], (num_classes,), jnp.float32)
    p["gt1"], p["bet1"] = jnp.ones((64,)), jnp.zeros((64,))
    p["gt2"], p["bet2"] = jnp.ones((32,)), jnp.zeros((32,))
    # Conv/ConvT biases on BN layers are omitted: train-mode BatchNorm subtracts the
    # per-channel batch mean, which cancels any per-channel bias exactly.
    return p


# ------------------------------ forward ------------------------------------ #
@jax.jit
def simple_seg_forward(x_nchw, p):
    x = jnp.transpose(x_nchw, (0, 2, 3, 1)).astype(jnp.bfloat16)   # NCHW -> NHWC, bf16
    # encoder
    x = conv_bn_relu(x, p["w1"], p["g1"], p["be1"])
    x = conv_bn_relu(x, p["w2"], p["g2"], p["be2"])
    x = conv_bn_relu(x, p["w3"], p["g3"], p["be3"])
    # decoder
    x = convT_bn_relu(x, p["wt1"], p["gt1"], p["bet1"])
    x = convT_bn_relu(x, p["wt2"], p["gt2"], p["bet2"])
    x = convT_final(x, p["wt3"], p["bt3"])
    return jnp.transpose(x, (0, 3, 1, 2)).astype(jnp.float32)       # NHWC -> NCHW


if __name__ == "__main__":
    key = jax.random.PRNGKey(0)
    k_x, k_p = jax.random.split(key)
    x = jax.random.normal(k_x, (2, 3, 16, 16), jnp.float32)          # NCHW, like PyTorch
    params = init_params(k_p, num_classes=21)

    out = simple_seg_forward(x, params)
    jax.block_until_ready(out)

    assert out.shape == (2, 21, 16, 16), out.shape
    assert out.dtype == jnp.float32
    assert bool(jnp.all(jnp.isfinite(out)))
    print("KERNEL_OK")
</pallas_src>

<mosaic_0001>
module attributes {stable_mosaic.version = 11 : i64} {
  func.func @fused_gemm_bn_relu_kernel(%arg0: i32, %arg1: memref<128x32xbf16, #tpu.memory_space<vmem>>, %arg2: memref<32x128xbf16, #tpu.memory_space<vmem>>, %arg3: memref<1x128xf32, #tpu.memory_space<vmem>>, %arg4: memref<1x128xf32, #tpu.memory_space<vmem>>, %arg5: memref<128x128xbf16, #tpu.memory_space<vmem>>) attributes {dimension_semantics = [#tpu.dimension_semantics<arbitrary>], iteration_bounds = array<i64: 1>, scalar_prefetch = 0 : i64, scratch_operands = 0 : i64, tpu.core_type = #tpu.core_type<tc>, window_params = [{pipeline_mode = #tpu.pipeline_mode<synchronous>, transform_indices = @transform_0, window_bounds = array<i64: 128, 32>}, {pipeline_mode = #tpu.pipeline_mode<synchronous>, transform_indices = @transform_1, window_bounds = array<i64: 32, 128>}, {pipeline_mode = #tpu.pipeline_mode<synchronous>, transform_indices = @transform_2, window_bounds = array<i64: 1, 128>}, {pipeline_mode = #tpu.pipeline_mode<synchronous>, transform_indices = @transform_3, window_bounds = array<i64: 1, 128>}, {pipeline_mode = #tpu.pipeline_mode<synchronous>, transform_indices = @transform_4, window_bounds = array<i64: 128, 128>}]} {
    %c0 = arith.constant 0 : index
    %c0_0 = arith.constant 0 : index
    %0 = vector.load %arg1[%c0, %c0_0] : memref<128x32xbf16, #tpu.memory_space<vmem>>, vector<128x32xbf16>
    %c0_1 = arith.constant 0 : index
    %c0_2 = arith.constant 0 : index
    %1 = vector.load %arg2[%c0_1, %c0_2] : memref<32x128xbf16, #tpu.memory_space<vmem>>, vector<32x128xbf16>
    %cst = arith.constant dense<0.000000e+00> : vector<128x128xf32>
    %2 = tpu.matmul %0, %1, %cst {dimension_numbers = #tpu.dot_dimension_numbers<[1], [0], [0], [1], [0, 0, 1, 1], [], []>} : vector<128x32xbf16>, vector<32x128xbf16>, vector<128x128xf32> -> vector<128x128xf32>
    %cst_3 = arith.constant 0.000000e+00 : f32
    %3 = vector.broadcast %cst_3 : f32 to vector<1x128xf32>
    %cst_4 = arith.constant dense<0.000000e+00> : vector<128xf32>
    %4 = vector.multi_reduction <add>, %2, %cst_4 [0] : vector<128x128xf32> to vector<128xf32>
    %5 = vector.shape_cast %4 : vector<128xf32> to vector<1x128xf32>
    %6 = arith.addf %3, %5 : vector<1x128xf32>
    %cst_5 = arith.constant 7.812500e-03 : f32
    %7 = vector.broadcast %cst_5 : f32 to vector<1x128xf32>
    %8 = arith.mulf %6, %7 : vector<1x128xf32>
    %cst_6 = arith.constant 0.000000e+00 : f32
    %9 = vector.broadcast %cst_6 : f32 to vector<1x128xf32>
    %10 = vector.broadcast %8 : vector<1x128xf32> to vector<128x128xf32>
    %11 = arith.subf %2, %10 : vector<128x128xf32>
    %12 = arith.mulf %11, %11 : vector<128x128xf32>
    %cst_7 = arith.constant dense<0.000000e+00> : vector<128xf32>
    %13 = vector.multi_reduction <add>, %12, %cst_7 [0] : vector<128x128xf32> to vector<128xf32>
    %14 = vector.shape_cast %13 : vector<128xf32> to vector<1x128xf32>
    %15 = arith.addf %9, %14 : vector<1x128xf32>
    %cst_8 = arith.constant 7.812500e-03 : f32
    %16 = vector.broadcast %cst_8 : f32 to vector<1x128xf32>
    %17 = arith.mulf %15, %16 : vector<1x128xf32>
    %c0_9 = arith.constant 0 : index
    %c0_10 = arith.constant 0 : index
    %18 = vector.load %arg3[%c0_9, %c0_10] : memref<1x128xf32, #tpu.memory_space<vmem>>, vector<1x128xf32>
    %cst_11 = arith.constant 9.99999974E-6 : f32
    %19 = vector.broadcast %cst_11 : f32 to vector<1x128xf32>
    %20 = arith.addf %17, %19 : vector<1x128xf32>
    %21 = math.rsqrt %20 : vector<1x128xf32>
    %22 = arith.mulf %18, %21 : vector<1x128xf32>
    %c0_12 = arith.constant 0 : index
    %c0_13 = arith.constant 0 : index
    %23 = vector.load %arg4[%c0_12, %c0_13] : memref<1x128xf32, #tpu.memory_space<vmem>>, vector<1x128xf32>
    %24 = arith.mulf %8, %22 : vector<1x128xf32>
    %25 = arith.subf %23, %24 : vector<1x128xf32>
    %26 = vector.broadcast %22 : vector<1x128xf32> to vector<128x128xf32>
    %27 = arith.mulf %2, %26 : vector<128x128xf32>
    %28 = vector.broadcast %25 : vector<1x128xf32> to vector<128x128xf32>
    %29 = arith.addf %27, %28 : vector<128x128xf32>
    %cst_14 = arith.constant 0.000000e+00 : f32
    %30 = vector.broadcast %cst_14 : f32 to vector<128x128xf32>
    %31 = arith.maximumf %29, %30 : vector<128x128xf32>
    %32 = arith.truncf %31 : vector<128x128xf32> to vector<128x128xbf16>
    %c0_15 = arith.constant 0 : index
    %c0_16 = arith.constant 0 : index
    %33 = vector.load %arg5[%c0_15, %c0_16] : memref<128x128xbf16, #tpu.memory_space<vmem>>, vector<128x128xbf16>
    tpu.vector_store %arg5[%c0_15, %c0_16], %32 {strides = array<i32>} : memref<128x128xbf16, #tpu.memory_space<vmem>>, vector<128x128xbf16>,
    return
  }
  func.func @transform_0(%arg0: i32) -> (i32, i32) {
    %c0_i32 = arith.constant 0 : i32
    %c0_i32_0 = arith.constant 0 : i32
    %c0_i32_1 = arith.constant 0 : i32
    return %c0_i32, %c0_i32_0 : i32, i32
  }
  func.func @transform_1(%arg0: i32) -> (i32, i32) {
    %c0_i32 = arith.constant 0 : i32
    %c0_i32_0 = arith.constant 0 : i32
    %c0_i32_1 = arith.constant 0 : i32
    return %c0_i32, %c0_i32_0 : i32, i32
  }
  func.func @transform_2(%arg0: i32) -> (i32, i32) {
    %c0_i32 = arith.constant 0 : i32
    %c0_i32_0 = arith.constant 0 : i32
    %c0_i32_1 = arith.constant 0 : i32
    return %c0_i32, %c0_i32_0 : i32, i32
  }
  func.func @transform_3(%arg0: i32) -> (i32, i32) {
    %c0_i32 = arith.constant 0 : i32
    %c0_i32_0 = arith.constant 0 : i32
    %c0_i32_1 = arith.constant 0 : i32
    return %c0_i32, %c0_i32_0 : i32, i32
  }
  func.func @transform_4(%arg0: i32) -> (i32, i32) {
    %c0_i32 = arith.constant 0 : i32
    %c0_i32_0 = arith.constant 0 : i32
    %c0_i32_1 = arith.constant 0 : i32
    return %c0_i32, %c0_i32_0 : i32, i32
  }
}

module attributes {stable_mosaic.version = 11 : i64} {
  func.func @fused_gemm_bn_relu_kernel(%arg0: i32, %arg1: memref<32x288xbf16, #tpu.memory_space<vmem>>, %arg2: memref<288x128xbf16, #tpu.memory_space<vmem>>, %arg3: memref<1x128xf32, #tpu.memory_space<vmem>>, %arg4: memref<1x128xf32, #tpu.memory_space<vmem>>, %arg5: memref<32x128xbf16, #tpu.memory_space<vmem>>) attributes {dimension_semantics = [#tpu.dimension_semantics<arbitrary>], iteration_bounds = array<i64: 1>, scalar_prefetch = 0 : i64, scratch_operands = 0 : i64, tpu.core_type = #tpu.core_type<tc>, window_params = [{pipeline_mode = #tpu.pipeline_mode<synchronous>, transform_indices = @transform_0, window_bounds = array<i64: 32, 288>}, {pipeline_mode = #tpu.pipeline_mode<synchronous>, transform_indices = @transform_1, window_bounds = array<i64: 288, 128>}, {pipeline_mode = #tpu.pipeline_mode<synchronous>, transform_indices = @transform_2, window_bounds = array<i64: 1, 128>}, {pipeline_mode = #tpu.pipeline_mode<synchronous>, transform_indices = @transform_3, window_bounds = array<i64: 1, 128>}, {pipeline_mode = #tpu.pipeline_mode<synchronous>, transform_indices = @transform_4, window_bounds = array<i64: 32, 128>}]} {
    %c0 = arith.constant 0 : index
    %c0_0 = arith.constant 0 : index
    %0 = vector.load %arg1[%c0, %c0_0] : memref<32x288xbf16, #tpu.memory_space<vmem>>, vector<32x288xbf16>
    %c0_1 = arith.constant 0 : index
    %c0_2 = arith.constant 0 : index
    %1 = vector.load %arg2[%c0_1, %c0_2] : memref<288x128xbf16, #tpu.memory_space<vmem>>, vector<288x128xbf16>
    %cst = arith.constant dense<0.000000e+00> : vector<32x128xf32>
    %2 = tpu.matmul %0, %1, %cst {dimension_numbers = #tpu.dot_dimension_numbers<[1], [0], [0], [1], [0, 0, 1, 1], [], []>} : vector<32x288xbf16>, vector<288x128xbf16>, vector<32x128xf32> -> vector<32x128xf32>
    %cst_3 = arith.constant 0.000000e+00 : f32
    %3 = vector.broadcast %cst_3 : f32 to vector<1x128xf32>
    %cst_4 = arith.constant dense<0.000000e+00> : vector<128xf32>
    %4 = vector.multi_reduction <add>, %2, %cst_4 [0] : vector<32x128xf32> to vector<128xf32>
    %5 = vector.shape_cast %4 : vector<128xf32> to vector<1x128xf32>
    %6 = arith.addf %3, %5 : vector<1x128xf32>
    %cst_5 = arith.constant 3.125000e-02 : f32
    %7 = vector.broadcast %cst_5 : f32 to vector<1x128xf32>
    %8 = arith.mulf %6, %7 : vector<1x128xf32>
    %cst_6 = arith.constant 0.000000e+00 : f32
    %9 = vector.broadcast %cst_6 : f32 to vector<1x128xf32>
    %10 = vector.broadcast %8 : vector<1x128xf32> to vector<32x128xf32>
    %11 = arith.subf %2, %10 : vector<32x128xf32>
    %12 = arith.mulf %11, %11 : vector<32x128xf32>
    %cst_7 = arith.constant dense<0.000000e+00> : vector<128xf32>
    %13 = vector.multi_reduction <add>, %12, %cst_7 [0] : vector<32x128xf32> to vector<128xf32>
    %14 = vector.shape_cast %13 : vector<128xf32> to vector<1x128xf32>
    %15 = arith.addf %9, %14 : vector<1x128xf32>
    %cst_8 = arith.constant 3.125000e-02 : f32
    %16 = vector.broadcast %cst_8 : f32 to vector<1x128xf32>
    %17 = arith.mulf %15, %16 : vector<1x128xf32>
    %c0_9 = arith.constant 0 : index
    %c0_10 = arith.constant 0 : index
    %18 = vector.load %arg3[%c0_9, %c0_10] : memref<1x128xf32, #tpu.memory_space<vmem>>, vector<1x128xf32>
    %cst_11 = arith.constant 9.99999974E-6 : f32
    %19 = vector.broadcast %cst_11 : f32 to vector<1x128xf32>
    %20 = arith.addf %17, %19 : vector<1x128xf32>
    %21 = math.rsqrt %20 : vector<1x128xf32>
    %22 = arith.mulf %18, %21 : vector<1x128xf32>
    %c0_12 = arith.constant 0 : index
    %c0_13 = arith.constant 0 : index
    %23 = vector.load %arg4[%c0_12, %c0_13] : memref<1x128xf32, #tpu.memory_space<vmem>>, vector<1x128xf32>
    %24 = arith.mulf %8, %22 : vector<1x128xf32>
    %25 = arith.subf %23, %24 : vector<1x128xf32>
    %26 = vector.broadcast %22 : vector<1x128xf32> to vector<32x128xf32>
    %27 = arith.mulf %2, %26 : vector<32x128xf32>
    %28 = vector.broadcast %25 : vector<1x128xf32> to vector<32x128xf32>
    %29 = arith.addf %27, %28 : vector<32x128xf32>
    %cst_14 = arith.constant 0.000000e+00 : f32
    %30 = vector.broadcast %cst_14 : f32 to vector<32x128xf32>
    %31 = arith.maximumf %29, %30 : vector<32x128xf32>
    %32 = arith.truncf %31 : vector<32x128xf32> to vector<32x128xbf16>
    %c0_15 = arith.constant 0 : index
    %c0_16 = arith.constant 0 : index
    %33 = vector.load %arg5[%c0_15, %c0_16] : memref<32x128xbf16, #tpu.memory_space<vmem>>, vector<32x128xbf16>
    tpu.vector_store %arg5[%c0_15, %c0_16], %32 {strides = array<i32>} : memref<32x128xbf16, #tpu.memory_space<vmem>>, vector<32x128xbf16>,
    return
  }
  func.func @transform_0(%arg0: i32) -> (i32, i32) {
    %c0_i32 = arith.constant 0 : i32
    %c0_i32_0 = arith.constant 0 : i32
    %c0_i32_1 = arith.constant 0 : i32
    return %c0_i32, %c0_i32_0 : i32, i32
  }
  func.func @transform_1(%arg0: i32) -> (i32, i32) {
    %c0_i32 = arith.constant 0 : i32
    %c0_i32_0 = arith.constant 0 : i32
    %c0_i32_1 = arith.constant 0 : i32
    return %c0_i32, %c0_i32_0 : i32, i32
  }
  func.func @transform_2(%arg0: i32) -> (i32, i32) {
    %c0_i32 = arith.constant 0 : i32
    %c0_i32_0 = arith.constant 0 : i32
    %c0_i32_1 = arith.constant 0 : i32
    return %c0_i32, %c0_i32_0 : i32, i32
  }
  func.func @transform_3(%arg0: i32) -> (i32, i32) {
    %c0_i32 = arith.constant 0 : i32
    %c0_i32_0 = arith.constant 0 : i32
    %c0_i32_1 = arith.constant 0 : i32
    return %c0_i32, %c0_i32_0 : i32, i32
  }
  func.func @transform_4(%arg0: i32) -> (i32, i32) {
    %c0_i32 = arith.constant 0 : i32
    %c0_i32_0 = arith.constant 0 : i32
    %c0_i32_1 = arith.constant 0 : i32
    return %c0_i32, %c0_i32_0 : i32, i32
  }
}

module attributes {stable_mosaic.version = 11 : i64} {
  func.func @fused_gemm_bn_relu_kernel(%arg0: i32, %arg1: memref<8x576xbf16, #tpu.memory_space<vmem>>, %arg2: memref<576x128xbf16, #tpu.memory_space<vmem>>, %arg3: memref<1x128xf32, #tpu.memory_space<vmem>>, %arg4: memref<1x128xf32, #tpu.memory_space<vmem>>, %arg5: memref<8x128xbf16, #tpu.memory_space<vmem>>) attributes {dimension_semantics = [#tpu.dimension_semantics<arbitrary>], iteration_bounds = array<i64: 1>, scalar_prefetch = 0 : i64, scratch_operands = 0 : i64, tpu.core_type = #tpu.core_type<tc>, window_params = [{pipeline_mode = #tpu.pipeline_mode<synchronous>, transform_indices = @transform_0, window_bounds = array<i64: 8, 576>}, {pipeline_mode = #tpu.pipeline_mode<synchronous>, transform_indices = @transform_1, window_bounds = array<i64: 576, 128>}, {pipeline_mode = #tpu.pipeline_mode<synchronous>, transform_indices = @transform_2, window_bounds = array<i64: 1, 128>}, {pipeline_mode = #tpu.pipeline_mode<synchronous>, transform_indices = @transform_3, window_bounds = array<i64: 1, 128>}, {pipeline_mode = #tpu.pipeline_mode<synchronous>, transform_indices = @transform_4, window_bounds = array<i64: 8, 128>}]} {
    %c0 = arith.constant 0 : index
    %c0_0 = arith.constant 0 : index
    %0 = vector.load %arg1[%c0, %c0_0] : memref<8x576xbf16, #tpu.memory_space<vmem>>, vector<8x576xbf16>
    %c0_1 = arith.constant 0 : index
    %c0_2 = arith.constant 0 : index
    %1 = vector.load %arg2[%c0_1, %c0_2] : memref<576x128xbf16, #tpu.memory_space<vmem>>, vector<576x128xbf16>
    %cst = arith.constant dense<0.000000e+00> : vector<8x128xf32>
    %2 = tpu.matmul %0, %1, %cst {dimension_numbers = #tpu.dot_dimension_numbers<[1], [0], [0], [1], [0, 0, 1, 1], [], []>} : vector<8x576xbf16>, vector<576x128xbf16>, vector<8x128xf32> -> vector<8x128xf32>
    %cst_3 = arith.constant 0.000000e+00 : f32
    %3 = vector.broadcast %cst_3 : f32 to vector<1x128xf32>
    %cst_4 = arith.constant dense<0.000000e+00> : vector<128xf32>
    %4 = vector.multi_reduction <add>, %2, %cst_4 [0] : vector<8x128xf32> to vector<128xf32>
    %5 = vector.shape_cast %4 : vector<128xf32> to vector<1x128xf32>
    %6 = arith.addf %3, %5 : vector<1x128xf32>
    %cst_5 = arith.constant 1.250000e-01 : f32
    %7 = vector.broadcast %cst_5 : f32 to vector<1x128xf32>
    %8 = arith.mulf %6, %7 : vector<1x128xf32>
    %cst_6 = arith.constant 0.000000e+00 : f32
    %9 = vector.broadcast %cst_6 : f32 to vector<1x128xf32>
    %10 = vector.broadcast %8 : vector<1x128xf32> to vector<8x128xf32>
    %11 = arith.subf %2, %10 : vector<8x128xf32>
    %12 = arith.mulf %11, %11 : vector<8x128xf32>
    %cst_7 = arith.constant dense<0.000000e+00> : vector<128xf32>
    %13 = vector.multi_reduction <add>, %12, %cst_7 [0] : vector<8x128xf32> to vector<128xf32>
    %14 = vector.shape_cast %13 : vector<128xf32> to vector<1x128xf32>
    %15 = arith.addf %9, %14 : vector<1x128xf32>
    %cst_8 = arith.constant 1.250000e-01 : f32
    %16 = vector.broadcast %cst_8 : f32 to vector<1x128xf32>
    %17 = arith.mulf %15, %16 : vector<1x128xf32>
    %c0_9 = arith.constant 0 : index
    %c0_10 = arith.constant 0 : index
    %18 = vector.load %arg3[%c0_9, %c0_10] : memref<1x128xf32, #tpu.memory_space<vmem>>, vector<1x128xf32>
    %cst_11 = arith.constant 9.99999974E-6 : f32
    %19 = vector.broadcast %cst_11 : f32 to vector<1x128xf32>
    %20 = arith.addf %17, %19 : vector<1x128xf32>
    %21 = math.rsqrt %20 : vector<1x128xf32>
    %22 = arith.mulf %18, %21 : vector<1x128xf32>
    %c0_12 = arith.constant 0 : index
    %c0_13 = arith.constant 0 : index
    %23 = vector.load %arg4[%c0_12, %c0_13] : memref<1x128xf32, #tpu.memory_space<vmem>>, vector<1x128xf32>
    %24 = arith.mulf %8, %22 : vector<1x128xf32>
    %25 = arith.subf %23, %24 : vector<1x128xf32>
    %26 = vector.broadcast %22 : vector<1x128xf32> to vector<8x128xf32>
    %27 = arith.mulf %2, %26 : vector<8x128xf32>
    %28 = vector.broadcast %25 : vector<1x128xf32> to vector<8x128xf32>
    %29 = arith.addf %27, %28 : vector<8x128xf32>
    %cst_14 = arith.constant 0.000000e+00 : f32
    %30 = vector.broadcast %cst_14 : f32 to vector<8x128xf32>
    %31 = arith.maximumf %29, %30 : vector<8x128xf32>
    %32 = arith.truncf %31 : vector<8x128xf32> to vector<8x128xbf16>
    %c0_15 = arith.constant 0 : index
    %c0_16 = arith.constant 0 : index
    %33 = vector.load %arg5[%c0_15, %c0_16] : memref<8x128xbf16, #tpu.memory_space<vmem>>, vector<8x128xbf16>
    tpu.vector_store %arg5[%c0_15, %c0_16], %32 {strides = array<i32>} : memref<8x128xbf16, #tpu.memory_space<vmem>>, vector<8x128xbf16>,
    return
  }
  func.func @transform_0(%arg0: i32) -> (i32, i32) {
    %c0_i32 = arith.constant 0 : i32
    %c0_i32_0 = arith.constant 0 : i32
    %c0_i32_1 = arith.constant 0 : i32
    return %c0_i32, %c0_i32_0 : i32, i32
  }
  func.func @transform_1(%arg0: i32) -> (i32, i32) {
    %c0_i32 = arith.constant 0 : i32
    %c0_i32_0 = arith.constant 0 : i32
    %c0_i32_1 = arith.constant 0 : i32
    return %c0_i32, %c0_i32_0 : i32, i32
  }
  func.func @transform_2(%arg0: i32) -> (i32, i32) {
    %c0_i32 = arith.constant 0 : i32
    %c0_i32_0 = arith.constant 0 : i32
    %c0_i32_1 = arith.constant 0 : i32
    return %c0_i32, %c0_i32_0 : i32, i32
  }
  func.func @transform_3(%arg0: i32) -> (i32, i32) {
    %c0_i32 = arith.constant 0 : i32
    %c0_i32_0 = arith.constant 0 : i32
    %c0_i32_1 = arith.constant 0 : i32
    return %c0_i32, %c0_i32_0 : i32, i32
  }
  func.func @transform_4(%arg0: i32) -> (i32, i32) {
    %c0_i32 = arith.constant 0 : i32
    %c0_i32_0 = arith.constant 0 : i32
    %c0_i32_1 = arith.constant 0 : i32
    return %c0_i32, %c0_i32_0 : i32, i32
  }
}

module attributes {stable_mosaic.version = 11 : i64} {
  func.func @fused_gemm_bn_relu_kernel(%arg0: i32, %arg1: memref<8x1152xbf16, #tpu.memory_space<vmem>>, %arg2: memref<1152x512xbf16, #tpu.memory_space<vmem>>, %arg3: memref<1x128xf32, #tpu.memory_space<vmem>>, %arg4: memref<1x128xf32, #tpu.memory_space<vmem>>, %arg5: memref<8x512xbf16, #tpu.memory_space<vmem>>) attributes {dimension_semantics = [#tpu.dimension_semantics<arbitrary>], iteration_bounds = array<i64: 1>, scalar_prefetch = 0 : i64, scratch_operands = 0 : i64, tpu.core_type = #tpu.core_type<tc>, window_params = [{pipeline_mode = #tpu.pipeline_mode<synchronous>, transform_indices = @transform_0, window_bounds = array<i64: 8, 1152>}, {pipeline_mode = #tpu.pipeline_mode<synchronous>, transform_indices = @transform_1, window_bounds = array<i64: 1152, 512>}, {pipeline_mode = #tpu.pipeline_mode<synchronous>, transform_indices = @transform_2, window_bounds = array<i64: 1, 128>}, {pipeline_mode = #tpu.pipeline_mode<synchronous>, transform_indices = @transform_3, window_bounds = array<i64: 1, 128>}, {pipeline_mode = #tpu.pipeline_mode<synchronous>, transform_indices = @transform_4, window_bounds = array<i64: 8, 512>}]} {
    %c0 = arith.constant 0 : index
    %c0_0 = arith.constant 0 : index
    %0 = vector.load %arg1[%c0, %c0_0] : memref<8x1152xbf16, #tpu.memory_space<vmem>>, vector<8x1152xbf16>
    %c0_1 = arith.constant 0 : index
    %c0_2 = arith.constant 0 : index
    %1 = vector.load %arg2[%c0_1, %c0_2] : memref<1152x512xbf16, #tpu.memory_space<vmem>>, vector<1152x512xbf16>
    %cst = arith.constant dense<0.000000e+00> : vector<8x512xf32>
    %2 = tpu.matmul %0, %1, %cst {dimension_numbers = #tpu.dot_dimension_numbers<[1], [0], [0], [1], [0, 0, 1, 1], [], []>} : vector<8x1152xbf16>, vector<1152x512xbf16>, vector<8x512xf32> -> vector<8x512xf32>
    %cst_3 = arith.constant 0.000000e+00 : f32
    %3 = vector.broadcast %cst_3 : f32 to vector<1x128xf32>
    %4 = vector.extract_strided_slice %2 {offsets = [0, 0], sizes = [8, 128], strides = [1, 1]} : vector<8x512xf32> to vector<8x128xf32>
    %cst_4 = arith.constant dense<0.000000e+00> : vector<128xf32>
    %5 = vector.multi_reduction <add>, %4, %cst_4 [0] : vector<8x128xf32> to vector<128xf32>
    %6 = vector.shape_cast %5 : vector<128xf32> to vector<1x128xf32>
    %7 = arith.addf %3, %6 : vector<1x128xf32>
    %8 = vector.extract_strided_slice %2 {offsets = [0, 128], sizes = [8, 128], strides = [1, 1]} : vector<8x512xf32> to vector<8x128xf32>
    %cst_5 = arith.constant dense<0.000000e+00> : vector<128xf32>
    %9 = vector.multi_reduction <add>, %8, %cst_5 [0] : vector<8x128xf32> to vector<128xf32>
    %10 = vector.shape_cast %9 : vector<128xf32> to vector<1x128xf32>
    %11 = arith.addf %7, %10 : vector<1x128xf32>
    %12 = vector.extract_strided_slice %2 {offsets = [0, 256], sizes = [8, 128], strides = [1, 1]} : vector<8x512xf32> to vector<8x128xf32>
    %cst_6 = arith.constant dense<0.000000e+00> : vector<128xf32>
    %13 = vector.multi_reduction <add>, %12, %cst_6 [0] : vector<8x128xf32> to vector<128xf32>
    %14 = vector.shape_cast %13 : vector<128xf32> to vector<1x128xf32>
    %15 = arith.addf %11, %14 : vector<1x128xf32>
    %16 = vector.extract_strided_slice %2 {offsets = [0, 384], sizes = [8, 128], strides = [1, 1]} : vector<8x512xf32> to vector<8x128xf32>
    %cst_7 = arith.constant dense<0.000000e+00> : vector<128xf32>
    %17 = vector.multi_reduction <add>, %16, %cst_7 [0] : vector<8x128xf32> to vector<128xf32>
    %18 = vector.shape_cast %17 : vector<128xf32> to vector<1x128xf32>
    %19 = arith.addf %15, %18 : vector<1x128xf32>
    %cst_8 = arith.constant 3.125000e-02 : f32
    %20 = vector.broadcast %cst_8 : f32 to vector<1x128xf32>
    %21 = arith.mulf %19, %20 : vector<1x128xf32>
    %cst_9 = arith.constant 0.000000e+00 : f32
    %22 = vector.broadcast %cst_9 : f32 to vector<1x128xf32>
    %23 = vector.extract_strided_slice %2 {offsets = [0, 0], sizes = [8, 128], strides = [1, 1]} : vector<8x512xf32> to vector<8x128xf32>
    %24 = vector.broadcast %21 : vector<1x128xf32> to vector<8x128xf32>
    %25 = arith.subf %23, %24 : vector<8x128xf32>
    %26 = arith.mulf %25, %25 : vector<8x128xf32>
    %cst_10 = arith.constant dense<0.000000e+00> : vector<128xf32>
    %27 = vector.multi_reduction <add>, %26, %cst_10 [0] : vector<8x128xf32> to vector<128xf32>
    %28 = vector.shape_cast %27 : vector<128xf32> to vector<1x128xf32>
    %29 = arith.addf %22, %28 : vector<1x128xf32>
    %30 = vector.extract_strided_slice %2 {offsets = [0, 128], sizes = [8, 128], strides = [1, 1]} : vector<8x512xf32> to vector<8x128xf32>
    %31 = vector.broadcast %21 : vector<1x128xf32> to vector<8x128xf32>
    %32 = arith.subf %30, %31 : vector<8x128xf32>
    %33 = arith.mulf %32, %32 : vector<8x128xf32>
    %cst_11 = arith.constant dense<0.000000e+00> : vector<128xf32>
    %34 = vector.multi_reduction <add>, %33, %cst_11 [0] : vector<8x128xf32> to vector<128xf32>
    %35 = vector.shape_cast %34 : vector<128xf32> to vector<1x128xf32>
    %36 = arith.addf %29, %35 : vector<1x128xf32>
    %37 = vector.extract_strided_slice %2 {offsets = [0, 256], sizes = [8, 128], strides = [1, 1]} : vector<8x512xf32> to vector<8x128xf32>
    %38 = vector.broadcast %21 : vector<1x128xf32> to vector<8x128xf32>
    %39 = arith.subf %37, %38 : vector<8x128xf32>
    %40 = arith.mulf %39, %39 : vector<8x128xf32>
    %cst_12 = arith.constant dense<0.000000e+00> : vector<128xf32>
    %41 = vector.multi_reduction <add>, %40, %cst_12 [0] : vector<8x128xf32> to vector<128xf32>
    %42 = vector.shape_cast %41 : vector<128xf32> to vector<1x128xf32>
    %43 = arith.addf %36, %42 : vector<1x128xf32>
    %44 = vector.extract_strided_slice %2 {offsets = [0, 384], sizes = [8, 128], strides = [1, 1]} : vector<8x512xf32> to vector<8x128xf32>
    %45 = vector.broadcast %21 : vector<1x128xf32> to vector<8x128xf32>
    %46 = arith.subf %44, %45 : vector<8x128xf32>
    %47 = arith.mulf %46, %46 : vector<8x128xf32>
    %cst_13 = arith.constant dense<0.000000e+00> : vector<128xf32>
    %48 = vector.multi_reduction <add>, %47, %cst_13 [0] : vector<8x128xf32> to vector<128xf32>
    %49 = vector.shape_cast %48 : vector<128xf32> to vector<1x128xf32>
    %50 = arith.addf %43, %49 : vector<1x128xf32>
    %cst_14 = arith.constant 3.125000e-02 : f32
    %51 = vector.broadcast %cst_14 : f32 to vector<1x128xf32>
    %52 = arith.mulf %50, %51 : vector<1x128xf32>
    %c0_15 = arith.constant 0 : index
    %c0_16 = arith.constant 0 : index
    %53 = vector.load %arg3[%c0_15, %c0_16] : memref<1x128xf32, #tpu.memory_space<vmem>>, vector<1x128xf32>
    %cst_17 = arith.constant 9.99999974E-6 : f32
    %54 = vector.broadcast %cst_17 : f32 to vector<1x128xf32>
    %55 = arith.addf %52, %54 : vector<1x128xf32>
    %56 = math.rsqrt %55 : vector<1x128xf32>
    %57 = arith.mulf %53, %56 : vector<1x128xf32>
    %c0_18 = arith.constant 0 : index
    %c0_19 = arith.constant 0 : index
    %58 = vector.load %arg4[%c0_18, %c0_19] : memref<1x128xf32, #tpu.memory_space<vmem>>, vector<1x128xf32>
    %59 = arith.mulf %21, %57 : vector<1x128xf32>
    %60 = arith.subf %58, %59 : vector<1x128xf32>
    %61 = tpu.concatenate %57, %57, %57, %57 in 1 : vector<1x128xf32>, vector<1x128xf32>, vector<1x128xf32>, vector<1x128xf32> -> vector<1x512xf32>
    %62 = tpu.concatenate %60, %60, %60, %60 in 1 : vector<1x128xf32>, vector<1x128xf32>, vector<1x128xf32>, vector<1x128xf32> -> vector<1x512xf32>
    %63 = vector.broadcast %61 : vector<1x512xf32> to vector<8x512xf32>
    %64 = arith.mulf %2, %63 : vector<8x512xf32>
    %65 = vector.broadcast %62 : vector<1x512xf32> to vector<8x512xf32>
    %66 = arith.addf %64, %65 : vector<8x512xf32>
    %cst_20 = arith.constant 0.000000e+00 : f32
    %67 = vector.broadcast %cst_20 : f32 to vector<8x512xf32>
    %68 = arith.maximumf %66, %67 : vector<8x512xf32>
    %69 = arith.truncf %68 : vector<8x512xf32> to vector<8x512xbf16>
    %c0_21 = arith.constant 0 : index
    %c0_22 = arith.constant 0 : index
    %70 = vector.load %arg5[%c0_21, %c0_22] : memref<8x512xbf16, #tpu.memory_space<vmem>>, vector<8x512xbf16>
    tpu.vector_store %arg5[%c0_21, %c0_22], %69 {strides = array<i32>} : memref<8x512xbf16, #tpu.memory_space<vmem>>, vector<8x512xbf16>,
    return
  }
  func.func @transform_0(%arg0: i32) -> (i32, i32) {
    %c0_i32 = arith.constant 0 : i32
    %c0_i32_0 = arith.constant 0 : i32
    %c0_i32_1 = arith.constant 0 : i32
    return %c0_i32, %c0_i32_0 : i32, i32
  }
  func.func @transform_1(%arg0: i32) -> (i32, i32) {
    %c0_i32 = arith.constant 0 : i32
    %c0_i32_0 = arith.constant 0 : i32
    %c0_i32_1 = arith.constant 0 : i32
    return %c0_i32, %c0_i32_0 : i32, i32
  }
  func.func @transform_2(%arg0: i32) -> (i32, i32) {
    %c0_i32 = arith.constant 0 : i32
    %c0_i32_0 = arith.constant 0 : i32
    %c0_i32_1 = arith.constant 0 : i32
    return %c0_i32, %c0_i32_0 : i32, i32
  }
  func.func @transform_3(%arg0: i32) -> (i32, i32) {
    %c0_i32 = arith.constant 0 : i32
    %c0_i32_0 = arith.constant 0 : i32
    %c0_i32_1 = arith.constant 0 : i32
    return %c0_i32, %c0_i32_0 : i32, i32
  }
  func.func @transform_4(%arg0: i32) -> (i32, i32) {
    %c0_i32 = arith.constant 0 : i32
    %c0_i32_0 = arith.constant 0 : i32
    %c0_i32_1 = arith.constant 0 : i32
    return %c0_i32, %c0_i32_0 : i32, i32
  }
}

module attributes {stable_mosaic.version = 11 : i64} {
  func.func @fused_gemm_bn_relu_kernel(%arg0: i32, %arg1: memref<32x576xbf16, #tpu.memory_space<vmem>>, %arg2: memref<576x512xbf16, #tpu.memory_space<vmem>>, %arg3: memref<1x128xf32, #tpu.memory_space<vmem>>, %arg4: memref<1x128xf32, #tpu.memory_space<vmem>>, %arg5: memref<32x512xbf16, #tpu.memory_space<vmem>>) attributes {dimension_semantics = [#tpu.dimension_semantics<arbitrary>], iteration_bounds = array<i64: 1>, scalar_prefetch = 0 : i64, scratch_operands = 0 : i64, tpu.core_type = #tpu.core_type<tc>, window_params = [{pipeline_mode = #tpu.pipeline_mode<synchronous>, transform_indices = @transform_0, window_bounds = array<i64: 32, 576>}, {pipeline_mode = #tpu.pipeline_mode<synchronous>, transform_indices = @transform_1, window_bounds = array<i64: 576, 512>}, {pipeline_mode = #tpu.pipeline_mode<synchronous>, transform_indices = @transform_2, window_bounds = array<i64: 1, 128>}, {pipeline_mode = #tpu.pipeline_mode<synchronous>, transform_indices = @transform_3, window_bounds = array<i64: 1, 128>}, {pipeline_mode = #tpu.pipeline_mode<synchronous>, transform_indices = @transform_4, window_bounds = array<i64: 32, 512>}]} {
    %c0 = arith.constant 0 : index
    %c0_0 = arith.constant 0 : index
    %0 = vector.load %arg1[%c0, %c0_0] : memref<32x576xbf16, #tpu.memory_space<vmem>>, vector<32x576xbf16>
    %c0_1 = arith.constant 0 : index
    %c0_2 = arith.constant 0 : index
    %1 = vector.load %arg2[%c0_1, %c0_2] : memref<576x512xbf16, #tpu.memory_space<vmem>>, vector<576x512xbf16>
    %cst = arith.constant dense<0.000000e+00> : vector<32x512xf32>
    %2 = tpu.matmul %0, %1, %cst {dimension_numbers = #tpu.dot_dimension_numbers<[1], [0], [0], [1], [0, 0, 1, 1], [], []>} : vector<32x576xbf16>, vector<576x512xbf16>, vector<32x512xf32> -> vector<32x512xf32>
    %cst_3 = arith.constant 0.000000e+00 : f32
    %3 = vector.broadcast %cst_3 : f32 to vector<1x128xf32>
    %4 = vector.extract_strided_slice %2 {offsets = [0, 0], sizes = [32, 128], strides = [1, 1]} : vector<32x512xf32> to vector<32x128xf32>
    %cst_4 = arith.constant dense<0.000000e+00> : vector<128xf32>
    %5 = vector.multi_reduction <add>, %4, %cst_4 [0] : vector<32x128xf32> to vector<128xf32>
    %6 = vector.shape_cast %5 : vector<128xf32> to vector<1x128xf32>
    %7 = arith.addf %3, %6 : vector<1x128xf32>
    %8 = vector.extract_strided_slice %2 {offsets = [0, 128], sizes = [32, 128], strides = [1, 1]} : vector<32x512xf32> to vector<32x128xf32>
    %cst_5 = arith.constant dense<0.000000e+00> : vector<128xf32>
    %9 = vector.multi_reduction <add>, %8, %cst_5 [0] : vector<32x128xf32> to vector<128xf32>
    %10 = vector.shape_cast %9 : vector<128xf32> to vector<1x128xf32>
    %11 = arith.addf %7, %10 : vector<1x128xf32>
    %12 = vector.extract_strided_slice %2 {offsets = [0, 256], sizes = [32, 128], strides = [1, 1]} : vector<32x512xf32> to vector<32x128xf32>
    %cst_6 = arith.constant dense<0.000000e+00> : vector<128xf32>
    %13 = vector.multi_reduction <add>, %12, %cst_6 [0] : vector<32x128xf32> to vector<128xf32>
    %14 = vector.shape_cast %13 : vector<128xf32> to vector<1x128xf32>
    %15 = arith.addf %11, %14 : vector<1x128xf32>
    %16 = vector.extract_strided_slice %2 {offsets = [0, 384], sizes = [32, 128], strides = [1, 1]} : vector<32x512xf32> to vector<32x128xf32>
    %cst_7 = arith.constant dense<0.000000e+00> : vector<128xf32>
    %17 = vector.multi_reduction <add>, %16, %cst_7 [0] : vector<32x128xf32> to vector<128xf32>
    %18 = vector.shape_cast %17 : vector<128xf32> to vector<1x128xf32>
    %19 = arith.addf %15, %18 : vector<1x128xf32>
    %cst_8 = arith.constant 7.812500e-03 : f32
    %20 = vector.broadcast %cst_8 : f32 to vector<1x128xf32>
    %21 = arith.mulf %19, %20 : vector<1x128xf32>
    %cst_9 = arith.constant 0.000000e+00 : f32
    %22 = vector.broadcast %cst_9 : f32 to vector<1x128xf32>
    %23 = vector.extract_strided_slice %2 {offsets = [0, 0], sizes = [32, 128], strides = [1, 1]} : vector<32x512xf32> to vector<32x128xf32>
    %24 = vector.broadcast %21 : vector<1x128xf32> to vector<32x128xf32>
    %25 = arith.subf %23, %24 : vector<32x128xf32>
    %26 = arith.mulf %25, %25 : vector<32x128xf32>
    %cst_10 = arith.constant dense<0.000000e+00> : vector<128xf32>
    %27 = vector.multi_reduction <add>, %26, %cst_10 [0] : vector<32x128xf32> to vector<128xf32>
    %28 = vector.shape_cast %27 : vector<128xf32> to vector<1x128xf32>
    %29 = arith.addf %22, %28 : vector<1x128xf32>
    %30 = vector.extract_strided_slice %2 {offsets = [0, 128], sizes = [32, 128], strides = [1, 1]} : vector<32x512xf32> to vector<32x128xf32>
    %31 = vector.broadcast %21 : vector<1x128xf32> to vector<32x128xf32>
    %32 = arith.subf %30, %31 : vector<32x128xf32>
    %33 = arith.mulf %32, %32 : vector<32x128xf32>
    %cst_11 = arith.constant dense<0.000000e+00> : vector<128xf32>
    %34 = vector.multi_reduction <add>, %33, %cst_11 [0] : vector<32x128xf32> to vector<128xf32>
    %35 = vector.shape_cast %34 : vector<128xf32> to vector<1x128xf32>
    %36 = arith.addf %29, %35 : vector<1x128xf32>
    %37 = vector.extract_strided_slice %2 {offsets = [0, 256], sizes = [32, 128], strides = [1, 1]} : vector<32x512xf32> to vector<32x128xf32>
    %38 = vector.broadcast %21 : vector<1x128xf32> to vector<32x128xf32>
    %39 = arith.subf %37, %38 : vector<32x128xf32>
    %40 = arith.mulf %39, %39 : vector<32x128xf32>
    %cst_12 = arith.constant dense<0.000000e+00> : vector<128xf32>
    %41 = vector.multi_reduction <add>, %40, %cst_12 [0] : vector<32x128xf32> to vector<128xf32>
    %42 = vector.shape_cast %41 : vector<128xf32> to vector<1x128xf32>
    %43 = arith.addf %36, %42 : vector<1x128xf32>
    %44 = vector.extract_strided_slice %2 {offsets = [0, 384], sizes = [32, 128], strides = [1, 1]} : vector<32x512xf32> to vector<32x128xf32>
    %45 = vector.broadcast %21 : vector<1x128xf32> to vector<32x128xf32>
    %46 = arith.subf %44, %45 : vector<32x128xf32>
    %47 = arith.mulf %46, %46 : vector<32x128xf32>
    %cst_13 = arith.constant dense<0.000000e+00> : vector<128xf32>
    %48 = vector.multi_reduction <add>, %47, %cst_13 [0] : vector<32x128xf32> to vector<128xf32>
    %49 = vector.shape_cast %48 : vector<128xf32> to vector<1x128xf32>
    %50 = arith.addf %43, %49 : vector<1x128xf32>
    %cst_14 = arith.constant 7.812500e-03 : f32
    %51 = vector.broadcast %cst_14 : f32 to vector<1x128xf32>
    %52 = arith.mulf %50, %51 : vector<1x128xf32>
    %c0_15 = arith.constant 0 : index
    %c0_16 = arith.constant 0 : index
    %53 = vector.load %arg3[%c0_15, %c0_16] : memref<1x128xf32, #tpu.memory_space<vmem>>, vector<1x128xf32>
    %cst_17 = arith.constant 9.99999974E-6 : f32
    %54 = vector.broadcast %cst_17 : f32 to vector<1x128xf32>
    %55 = arith.addf %52, %54 : vector<1x128xf32>
    %56 = math.rsqrt %55 : vector<1x128xf32>
    %57 = arith.mulf %53, %56 : vector<1x128xf32>
    %c0_18 = arith.constant 0 : index
    %c0_19 = arith.constant 0 : index
    %58 = vector.load %arg4[%c0_18, %c0_19] : memref<1x128xf32, #tpu.memory_space<vmem>>, vector<1x128xf32>
    %59 = arith.mulf %21, %57 : vector<1x128xf32>
    %60 = arith.subf %58, %59 : vector<1x128xf32>
    %61 = tpu.concatenate %57, %57, %57, %57 in 1 : vector<1x128xf32>, vector<1x128xf32>, vector<1x128xf32>, vector<1x128xf32> -> vector<1x512xf32>
    %62 = tpu.concatenate %60, %60, %60, %60 in 1 : vector<1x128xf32>, vector<1x128xf32>, vector<1x128xf32>, vector<1x128xf32> -> vector<1x512xf32>
    %63 = vector.broadcast %61 : vector<1x512xf32> to vector<32x512xf32>
    %64 = arith.mulf %2, %63 : vector<32x512xf32>
    %65 = vector.broadcast %62 : vector<1x512xf32> to vector<32x512xf32>
    %66 = arith.addf %64, %65 : vector<32x512xf32>
    %cst_20 = arith.constant 0.000000e+00 : f32
    %67 = vector.broadcast %cst_20 : f32 to vector<32x512xf32>
    %68 = arith.maximumf %66, %67 : vector<32x512xf32>
    %69 = arith.truncf %68 : vector<32x512xf32> to vector<32x512xbf16>
    %c0_21 = arith.constant 0 : index
    %c0_22 = arith.constant 0 : index
    %70 = vector.load %arg5[%c0_21, %c0_22] : memref<32x512xbf16, #tpu.memory_space<vmem>>, vector<32x512xbf16>
    tpu.vector_store %arg5[%c0_21, %c0_22], %69 {strides = array<i32>} : memref<32x512xbf16, #tpu.memory_space<vmem>>, vector<32x512xbf16>,
    return
  }
  func.func @transform_0(%arg0: i32) -> (i32, i32) {
    %c0_i32 = arith.constant 0 : i32
    %c0_i32_0 = arith.constant 0 : i32
    %c0_i32_1 = arith.constant 0 : i32
    return %c0_i32, %c0_i32_0 : i32, i32
  }
  func.func @transform_1(%arg0: i32) -> (i32, i32) {
    %c0_i32 = arith.constant 0 : i32
    %c0_i32_0 = arith.constant 0 : i32
    %c0_i32_1 = arith.constant 0 : i32
    return %c0_i32, %c0_i32_0 : i32, i32
  }
  func.func @transform_2(%arg0: i32) -> (i32, i32) {
    %c0_i32 = arith.constant 0 : i32
    %c0_i32_0 = arith.constant 0 : i32
    %c0_i32_1 = arith.constant 0 : i32
    return %c0_i32, %c0_i32_0 : i32, i32
  }
  func.func @transform_3(%arg0: i32) -> (i32, i32) {
    %c0_i32 = arith.constant 0 : i32
    %c0_i32_0 = arith.constant 0 : i32
    %c0_i32_1 = arith.constant 0 : i32
    return %c0_i32, %c0_i32_0 : i32, i32
  }
  func.func @transform_4(%arg0: i32) -> (i32, i32) {
    %c0_i32 = arith.constant 0 : i32
    %c0_i32_0 = arith.constant 0 : i32
    %c0_i32_1 = arith.constant 0 : i32
    return %c0_i32, %c0_i32_0 : i32, i32
  }
}

module attributes {stable_mosaic.version = 11 : i64} {
  func.func @gemm_bias_kernel(%arg0: i32, %arg1: memref<128x288xbf16, #tpu.memory_space<vmem>>, %arg2: memref<288x512xbf16, #tpu.memory_space<vmem>>, %arg3: memref<1x512xf32, #tpu.memory_space<vmem>>, %arg4: memref<128x512xf32, #tpu.memory_space<vmem>>) attributes {dimension_semantics = [#tpu.dimension_semantics<arbitrary>], iteration_bounds = array<i64: 1>, scalar_prefetch = 0 : i64, scratch_operands = 0 : i64, tpu.core_type = #tpu.core_type<tc>, window_params = [{pipeline_mode = #tpu.pipeline_mode<synchronous>, transform_indices = @transform_0, window_bounds = array<i64: 128, 288>}, {pipeline_mode = #tpu.pipeline_mode<synchronous>, transform_indices = @transform_1, window_bounds = array<i64: 288, 512>}, {pipeline_mode = #tpu.pipeline_mode<synchronous>, transform_indices = @transform_2, window_bounds = array<i64: 1, 512>}, {pipeline_mode = #tpu.pipeline_mode<synchronous>, transform_indices = @transform_3, window_bounds = array<i64: 128, 512>}]} {
    %c0 = arith.constant 0 : index
    %c0_0 = arith.constant 0 : index
    %0 = vector.load %arg1[%c0, %c0_0] : memref<128x288xbf16, #tpu.memory_space<vmem>>, vector<128x288xbf16>
    %c0_1 = arith.constant 0 : index
    %c0_2 = arith.constant 0 : index
    %1 = vector.load %arg2[%c0_1, %c0_2] : memref<288x512xbf16, #tpu.memory_space<vmem>>, vector<288x512xbf16>
    %cst = arith.constant dense<0.000000e+00> : vector<128x512xf32>
    %2 = tpu.matmul %0, %1, %cst {dimension_numbers = #tpu.dot_dimension_numbers<[1], [0], [0], [1], [0, 0, 1, 1], [], []>} : vector<128x288xbf16>, vector<288x512xbf16>, vector<128x512xf32> -> vector<128x512xf32>
    %c0_3 = arith.constant 0 : index
    %c0_4 = arith.constant 0 : index
    %3 = vector.load %arg3[%c0_3, %c0_4] : memref<1x512xf32, #tpu.memory_space<vmem>>, vector<1x512xf32>
    %4 = vector.broadcast %3 : vector<1x512xf32> to vector<128x512xf32>
    %5 = arith.addf %2, %4 : vector<128x512xf32>
    %c0_5 = arith.constant 0 : index
    %c0_6 = arith.constant 0 : index
    %6 = vector.load %arg4[%c0_5, %c0_6] : memref<128x512xf32, #tpu.memory_space<vmem>>, vector<128x512xf32>
    tpu.vector_store %arg4[%c0_5, %c0_6], %5 {strides = array<i32>} : memref<128x512xf32, #tpu.memory_space<vmem>>, vector<128x512xf32>,
    return
  }
  func.func @transform_0(%arg0: i32) -> (i32, i32) {
    %c0_i32 = arith.constant 0 : i32
    %c0_i32_0 = arith.constant 0 : i32
    %c0_i32_1 = arith.constant 0 : i32
    return %c0_i32, %c0_i32_0 : i32, i32
  }
  func.func @transform_1(%arg0: i32) -> (i32, i32) {
    %c0_i32 = arith.constant 0 : i32
    %c0_i32_0 = arith.constant 0 : i32
    %c0_i32_1 = arith.constant 0 : i32
    return %c0_i32, %c0_i32_0 : i32, i32
  }
  func.func @transform_2(%arg0: i32) -> (i32, i32) {
    %c0_i32 = arith.constant 0 : i32
    %c0_i32_0 = arith.constant 0 : i32
    %c0_i32_1 = arith.constant 0 : i32
    return %c0_i32, %c0_i32_0 : i32, i32
  }
  func.func @transform_3(%arg0: i32) -> (i32, i32) {
    %c0_i32 = arith.constant 0 : i32
    %c0_i32_0 = arith.constant 0 : i32
    %c0_i32_1 = arith.constant 0 : i32
    return %c0_i32, %c0_i32_0 : i32, i32
  }
}

</mosaic_0001>

<llo_original>
// kernel: simple_seg_forward.6
$region0: #{simple_seg_forward.6}
  #allocation0 [shape = 'u32[]', space=smem, size = 0x4, offset = 0x4, fixed_abs, tag = 'smem constant byte address 0x4 - core index']
  #allocation1 [shape = 'u32[144,128]{1,0:T(1,128)}', space=vmem, size = 0x12000, scoped, tag = 'internal scratch']
  %s0 = inlined_call_operand.vmem [shape: bf16[128,32], index: 0, kind: input, shape index: {}]
  %s1 = inlined_call_operand.vmem [shape: bf16[32,128], index: 1, kind: input, shape index: {}]
  %s2 = inlined_call_operand.vmem [shape: f32[1,128], index: 2, kind: input, shape index: {}]
  %s3 = inlined_call_operand.vmem [shape: f32[1,128], index: 3, kind: input, shape index: {}]
  %s4 = inlined_call_operand.vmem [shape: bf16[128,128], index: 4, kind: output, shape index: {}]
  %s5 = sld [smem:[#allocation0]]
  $region26: #{simple_seg_forward.6} parent=0
    _
  %s7 = ssub.s32 1, %s5
  %s8 = scalar_select 0, %s7, %s5
  // Predicated region
  $region2: #{simple_seg_forward.6} parent=0 // pred_check
    _
  $region3: #{simple_seg_forward.6} parent=0 // pred_check_branch
    %10 = sbr.rel (0) target = $region5
  $region4: #{simple_seg_forward.6} parent=0 // pred_region
    _
  $region5: #{simple_seg_forward.6} parent=0 // pred_fallthru
    _
  // Predicated region
  $region6: #{simple_seg_forward.6} parent=0 // pred_check
    _
  $region7: #{simple_seg_forward.6} parent=0 // pred_check_branch
    %12 = sbr.rel (0) target = $region9
  $region8: #{simple_seg_forward.6} parent=0 // pred_region
    _
  $region9: #{simple_seg_forward.6} parent=0 // pred_fallthru
    _
  // Predicated region
  $region10: #{simple_seg_forward.6} parent=0 // pred_check
    _
  $region11: #{simple_seg_forward.6} parent=0 // pred_check_branch
    %14 = sbr.rel (0) target = $region13
  $region12: #{simple_seg_forward.6} parent=0 // pred_region
    _
  $region13: #{simple_seg_forward.6} parent=0 // pred_fallthru
    _
  // Predicated region
  $region14: #{simple_seg_forward.6} parent=0 // pred_check
    _
  $region15: #{simple_seg_forward.6} parent=0 // pred_check_branch
    %16 = sbr.rel (0) target = $region17
  $region16: #{simple_seg_forward.6} parent=0 // pred_region
    _
  $region17: #{simple_seg_forward.6} parent=0 // pred_fallthru
    _
  %v18 = vld [vmem:[%s0] sm:$0xf]
  %v19 = vld [vmem:[%s0 + $0x4] sm:$0xf]
  %v20 = vld [vmem:[%s0 + $0x8] sm:$0xf]
  %v21 = vld [vmem:[%s0 + $0xc] sm:$0xf]
  %v22 = vld [vmem:[%s0 + $0x10] sm:$0xf]
  %v23 = vld [vmem:[%s0 + $0x14] sm:$0xf]
  %v24 = vld [vmem:[%s0 + $0x18] sm:$0xf]
  %v25 = vld [vmem:[%s0 + $0x1c] sm:$0xf]
  %v26 = vld [vmem:[%s0 + $0x20] sm:$0xf]
  %v27 = vld [vmem:[%s0 + $0x24] sm:$0xf]
  %v28 = vld [vmem:[%s0 + $0x28] sm:$0xf]
  %v29 = vld [vmem:[%s0 + $0x2c] sm:$0xf]
  %v30 = vld [vmem:[%s0 + $0x30] sm:$0xf]
  %v31 = vld [vmem:[%s0 + $0x34] sm:$0xf]
  %v32 = vld [vmem:[%s0 + $0x38] sm:$0xf]
  %v33 = vld [vmem:[%s0 + $0x3c] sm:$0xf]
  %v34 = vld [vmem:[%s1] sm:$0xf]
  %v35 = vld [vmem:[%s1 + $0x4] sm:$0xf]
  %v36 = vld [vmem:[%s1 + $0x8] sm:$0xf]
  %v37 = vld [vmem:[%s1 + $0xc] sm:$0xf]
  %v54 = vunpack.c.l.b16 %v18
  %v55 = vunpack.c.l.b16 %v19
  %v56 = vunpack.c.l.b16 %v20
  %v57 = vunpack.c.l.b16 %v21
  %v58 = vunpack.c.l.b16 %v22
  %v59 = vunpack.c.l.b16 %v23
  %v60 = vunpack.c.l.b16 %v24
  %v61 = vunpack.c.l.b16 %v25
  %v62 = vunpack.c.l.b16 %v26
  %v63 = vunpack.c.l.b16 %v27
  %v64 = vunpack.c.l.b16 %v28
  %v65 = vunpack.c.l.b16 %v29
  %v66 = vunpack.c.l.b16 %v30
  %v67 = vunpack.c.l.b16 %v31
  %v68 = vunpack.c.l.b16 %v32
  %v69 = vunpack.c.l.b16 %v33
  %v70 = vpack.c.b16 %v55, %v54
  %v71 = vpack.c.b16 %v57, %v56
  %v72 = vpack.c.b16 %v59, %v58
  %v73 = vpack.c.b16 %v61, %v60
  %v74 = vpack.c.b16 %v63, %v62
  %v75 = vpack.c.b16 %v65, %v64
  %v76 = vpack.c.b16 %v67, %v66
  %v77 = vpack.c.b16 %v69, %v68
  %v82 = vunpack.c.l.b16 %v34
  %v83 = vunpack.c.l.b16 %v35
  %v84 = vunpack.c.l.b16 %v36
  %v85 = vunpack.c.l.b16 %v37
  %v86 = vpack.c.b16 %v83, %v82
  %v87 = vpack.c.b16 %v85, %v84
  %vm90 = vcmask 261120
  %v92 = vsel %vm90, %v70, 0
  %v95 = vsel %vm90, %v71, 0
  %v98 = vsel %vm90, %v72, 0
  %v101 = vsel %vm90, %v73, 0
  %v104 = vsel %vm90, %v74, 0
  %v107 = vsel %vm90, %v75, 0
  %v110 = vsel %vm90, %v76, 0
  %v113 = vsel %vm90, %v77, 0
  %115 = vmatprep.subr.bf16.mxu0 0
  %116 = vmatpush1.bf16.msra.mxu0 %v86
  %117 = vmatprep.subr.bf16.mxu0 0
  %118 = vmatpush1.bf16.msra.mxu0 %v87
  %119 = vmatprep.subr.bf16.mxu0 0
  %120 = vmatpush1.bf16.msra.mxu0 0
  %121 = vmatprep.subr.bf16.mxu0 0
  %122 = vmatpush1.bf16.msra.mxu0 0
  %123 = vmatprep.subr.bf16.mxu0 0
  %124 = vmatpush1.bf16.msra.mxu0 0
  %125 = vmatprep.subr.bf16.mxu0 0
  %126 = vmatpush1.bf16.msra.mxu0 0
  %127 = vmatprep.subr.bf16.mxu0 0
  %128 = vmatpush1.bf16.msra.mxu0 0
  %129 = vmatprep.subr.bf16.mxu0 0
  %130 = vmatpush1.bf16.msra.mxu0 0
  %131 = vmatprep.subr.bf16.mxu0 0
  %132 = vmatpush1.bf16.msra.mxu0 0
  %133 = vmatprep.subr.bf16.mxu0 0
  %134 = vmatpush1.bf16.msra.mxu0 0
  %135 = vmatprep.subr.bf16.mxu0 0
  %136 = vmatpush1.bf16.msra.mxu0 0
  %137 = vmatprep.subr.bf16.mxu0 0
  %138 = vmatpush1.bf16.msra.mxu0 0
  %139 = vmatprep.subr.bf16.mxu0 0
  %140 = vmatpush1.bf16.msra.mxu0 0
  %141 = vmatprep.subr.bf16.mxu0 0
  %142 = vmatpush1.bf16.msra.mxu0 0
  %143 = vmatprep.subr.bf16.mxu0 0
  %144 = vmatpush1.bf16.msra.mxu0 0
  %145 = vmatprep.subr.bf16.mxu0 0
  %146 = vmatpush1.bf16.msra.mxu0 0
  %147 = vmatprep.mubr.bf16.mxu0 0
  %148 = vmatmul.mubr.bf16.gmra.mrb[0].mxu0 %v92
  %v149 = vpop.f32.mrb[0].mxu0
  %v150 = vadd.f32 0.0, %v149
  %v151 = vpop.f32.mrb[0].mxu0
  %v152 = vpop.f32.mrb[0].mxu0
  %v153 = vadd.f32 0.0, %v152
  %v154 = vpop.f32.mrb[0].mxu0
  %155 = vmatprep.mubr.bf16.mxu0 0
  %156 = vmatmul.mubr.bf16.gmra.mrb[0].mxu0 %v95
  %v157 = vpop.f32.mrb[0].mxu0
  %v158 = vadd.f32 0.0, %v157
  %v159 = vpop.f32.mrb[0].mxu0
  %v160 = vpop.f32.mrb[0].mxu0
  %v161 = vadd.f32 0.0, %v160
  %v162 = vpop.f32.mrb[0].mxu0
  %163 = vmatprep.mubr.bf16.mxu0 0
  %164 = vmatmul.mubr.bf16.gmra.mrb[0].mxu0 %v98
  %v165 = vpop.f32.mrb[0].mxu0
  %v166 = vadd.f32 0.0, %v165
  %v167 = vpop.f32.mrb[0].mxu0
  %v168 = vpop.f32.mrb[0].mxu0
  %v169 = vadd.f32 0.0, %v168
  %v170 = vpop.f32.mrb[0].mxu0
  %171 = vmatprep.mubr.bf16.mxu0 0
  %172 = vmatmul.mubr.bf16.gmra.mrb[0].mxu0 %v101
  %v173 = vpop.f32.mrb[0].mxu0
  %v174 = vadd.f32 0.0, %v173
  %v175 = vpop.f32.mrb[0].mxu0
  %v176 = vpop.f32.mrb[0].mxu0
  %v177 = vadd.f32 0.0, %v176
  %v178 = vpop.f32.mrb[0].mxu0
  %179 = vmatprep.mubr.bf16.mxu0 0
  %180 = vmatmul.mubr.bf16.gmra.mrb[0].mxu0 %v104
  %v181 = vpop.f32.mrb[0].mxu0
  %v182 = vadd.f32 0.0, %v181
  %v183 = vpop.f32.mrb[0].mxu0
  %v184 = vpop.f32.mrb[0].mxu0
  %v185 = vadd.f32 0.0, %v184
  %v186 = vpop.f32.mrb[0].mxu0
  %187 = vmatprep.mubr.bf16.mxu0 0
  %188 = vmatmul.mubr.bf16.gmra.mrb[0].mxu0 %v107
  %v189 = vpop.f32.mrb[0].mxu0
  %v190 = vadd.f32 0.0, %v189
  %v191 = vpop.f32.mrb[0].mxu0
  %v192 = vpop.f32.mrb[0].mxu0
  %v193 = vadd.f32 0.0, %v192
  %v194 = vpop.f32.mrb[0].mxu0
  %195 = vmatprep.mubr.bf16.mxu0 0
  %196 = vmatmul.mubr.bf16.gmra.mrb[0].mxu0 %v110
  %v197 = vpop.f32.mrb[0].mxu0
  %v198 = vadd.f32 0.0, %v197
  %v199 = vpop.f32.mrb[0].mxu0
  %v200 = vpop.f32.mrb[0].mxu0
  %v201 = vadd.f32 0.0, %v200
  %v202 = vpop.f32.mrb[0].mxu0
  %203 = vmatprep.mubr.bf16.mxu0 0
  %204 = vmatmul.mubr.bf16.gmra.mrb[0].mxu0 %v113
  %v205 = vpop.f32.mrb[0].mxu0
  %v206 = vadd.f32 0.0, %v205
  %v207 = vpop.f32.mrb[0].mxu0
  %v208 = vpop.f32.mrb[0].mxu0
  %v209 = vadd.f32 0.0, %v208
  %v210 = vpop.f32.mrb[0].mxu0
  %211 = vdwg.mxu0
  %v212 = vadd.f32 %v150, %v153
  %v213 = vadd.f32 %v212, %v158
  %v214 = vadd.f32 %v213, %v161
  %v215 = vadd.f32 %v214, %v166
  %v216 = vadd.f32 %v215, %v169
  %v217 = vadd.f32 %v216, %v174
  %v218 = vadd.f32 %v217, %v177
  %v219 = vadd.f32 %v218, %v182
  %v220 = vadd.f32 %v219, %v185
  %v221 = vadd.f32 %v220, %v190
  %v222 = vadd.f32 %v221, %v193
  %v223 = vadd.f32 %v222, %v198
  %v224 = vadd.f32 %v223, %v201
  %v225 = vadd.f32 %v224, %v206
  %v226 = vadd.f32 %v225, %v209
  %v227 = vrot.slane %v226, 4
  %v228 = vadd.f32 %v226, %v227
  %v229 = vrot.slane %v228, 2
  %v230 = vadd.f32 %v228, %v229
  %v231 = vrot.slane %v230, 1
  %v232 = vadd.f32 %v230, %v231
  %v233 = vadd.f32 %v232, 0.0
  %v234 = vmul.f32 %v233, 0.0078125
  %v235 = vsub.f32 %v150, %v234
  %v236 = vsub.f32 %v153, %v234
  %v237 = vsub.f32 %v158, %v234
  %v238 = vsub.f32 %v161, %v234
  %v239 = vsub.f32 %v166, %v234
  %v240 = vsub.f32 %v169, %v234
  %v241 = vsub.f32 %v174, %v234
  %v242 = vsub.f32 %v177, %v234
  %v243 = vsub.f32 %v182, %v234
  %v244 = vsub.f32 %v185, %v234
  %v245 = vsub.f32 %v190, %v234
  %v246 = vsub.f32 %v193, %v234
  %v247 = vsub.f32 %v198, %v234
  %v248 = vsub.f32 %v201, %v234
  %v249 = vsub.f32 %v206, %v234
  %v250 = vsub.f32 %v209, %v234
  %v251 = vmul.f32 %v235, %v235
  %v252 = vmul.f32 %v236, %v236
  %v253 = vmul.f32 %v237, %v237
  %v254 = vmul.f32 %v238, %v238
  %v255 = vmul.f32 %v239, %v239
  %v256 = vmul.f32 %v240, %v240
  %v257 = vmul.f32 %v241, %v241
  %v258 = vmul.f32 %v242, %v242
  %v259 = vmul.f32 %v243, %v243
  %v260 = vmul.f32 %v244, %v244
  %v261 = vmul.f32 %v245, %v245
  %v262 = vmul.f32 %v246, %v246
  %v263 = vmul.f32 %v247, %v247
  %v264 = vmul.f32 %v248, %v248
  %v265 = vmul.f32 %v249, %v249
  %v266 = vmul.f32 %v250, %v250
  %v267 = vadd.f32 %v251, %v252
  %v268 = vadd.f32 %v267, %v253
  %v269 = vadd.f32 %v268, %v254
  %v270 = vadd.f32 %v269, %v255
  %v271 = vadd.f32 %v270, %v256
  %v272 = vadd.f32 %v271, %v257
  %v273 = vadd.f32 %v272, %v258
  %v274 = vadd.f32 %v273, %v259
  %v275 = vadd.f32 %v274, %v260
  %v276 = vadd.f32 %v275, %v261
  %v277 = vadd.f32 %v276, %v262
  %v278 = vadd.f32 %v277, %v263
  %v279 = vadd.f32 %v278, %v264
  %v280 = vadd.f32 %v279, %v265
  %v281 = vadd.f32 %v280, %v266
  %v282 = vrot.slane %v281, 4
  %v283 = vadd.f32 %v281, %v282
  %v284 = vrot.slane %v283, 2
  %v285 = vadd.f32 %v283, %v284
  %v286 = vrot.slane %v285, 1
  %v287 = vadd.f32 %v285, %v286
  %v288 = vadd.f32 %v287, 0.0
  %v289 = vmul.f32 %v288, 0.0078125
  %v290 = vld [vmem:[%s2] sm:$0x1]
  %v291 = vadd.f32 %v289, 1e-05
  %v292 = vrsqrt.pop %v291
  %v293 = vmul.f32 %v290, %v292
  %v294 = vld [vmem:[%s3] sm:$0x1]
  %v295 = vmul.f32 %v234, %v293
  %v296 = vsub.f32 %v294, %v295
  %v298 = vlaneseq
  %v299 = vshrl.u32 %v298, 7
  %v300 = vsub.s32 0, %v299
  %v301 = vrot.slane %v293, %v300
  %v303 = vmul.f32 %v150, %v301
  %v304 = vmul.f32 %v153, %v301
  %v305 = vmul.f32 %v158, %v301
  %v306 = vmul.f32 %v161, %v301
  %v307 = vmul.f32 %v166, %v301
  %v308 = vmul.f32 %v169, %v301
  %v309 = vmul.f32 %v174, %v301
  %v310 = vmul.f32 %v177, %v301
  %v311 = vmul.f32 %v182, %v301
  %v312 = vmul.f32 %v185, %v301
  %v313 = vmul.f32 %v190, %v301
  %v314 = vmul.f32 %v193, %v301
  %v315 = vmul.f32 %v198, %v301
  %v316 = vmul.f32 %v201, %v301
  %v317 = vmul.f32 %v206, %v301
  %v318 = vmul.f32 %v209, %v301
  %v320 = vlaneseq
  %v321 = vshrl.u32 %v320, 7
  %v322 = vsub.s32 0, %v321
  %v323 = vrot.slane %v296, %v322
  %v325 = vadd.f32 %v303, %v323
  %v326 = vadd.f32 %v304, %v323
  %v327 = vadd.f32 %v305, %v323
  %v328 = vadd.f32 %v306, %v323
  %v329 = vadd.f32 %v307, %v323
  %v330 = vadd.f32 %v308, %v323
  %v331 = vadd.f32 %v309, %v323
  %v332 = vadd.f32 %v310, %v323
  %v333 = vadd.f32 %v311, %v323
  %v334 = vadd.f32 %v312, %v323
  %v335 = vadd.f32 %v313, %v323
  %v336 = vadd.f32 %v314, %v323
  %v337 = vadd.f32 %v315, %v323
  %v338 = vadd.f32 %v316, %v323
  %v339 = vadd.f32 %v317, %v323
  %v340 = vadd.f32 %v318, %v323
  %v341 = vmax.f32 %v325, 0.0
  %v342 = vmax.f32 %v326, 0.0
  %v343 = vmax.f32 %v327, 0.0
  %v344 = vmax.f32 %v328, 0.0
  %v345 = vmax.f32 %v329, 0.0
  %v346 = vmax.f32 %v330, 0.0
  %v347 = vmax.f32 %v331, 0.0
  %v348 = vmax.f32 %v332, 0.0
  %v349 = vmax.f32 %v333, 0.0
  %v350 = vmax.f32 %v334, 0.0
  %v351 = vmax.f32 %v335, 0.0
  %v352 = vmax.f32 %v336, 0.0
  %v353 = vmax.f32 %v337, 0.0
  %v354 = vmax.f32 %v338, 0.0
  %v355 = vmax.f32 %v339, 0.0
  %v356 = vmax.f32 %v340, 0.0
  %v357 = vpack.c.bf16 %v342, %v341
  %v358 = vpack.c.bf16 %v344, %v343
  %v359 = vpack.c.bf16 %v346, %v345
  %v360 = vpack.c.bf16 %v348, %v347
  %v361 = vpack.c.bf16 %v350, %v349
  %v362 = vpack.c.bf16 %v352, %v351
  %v363 = vpack.c.bf16 %v354, %v353
  %v364 = vpack.c.bf16 %v356, %v355
  %v373 = vunpack.c.l.b16 %v357
  %v374 = vunpack.c.h.b16 %v357
  %v375 = vunpack.c.l.b16 %v358
  %v376 = vunpack.c.h.b16 %v358
  %v377 = vunpack.c.l.b16 %v359
  %v378 = vunpack.c.h.b16 %v359
  %v379 = vunpack.c.l.b16 %v360
  %v380 = vunpack.c.h.b16 %v360
  %v381 = vunpack.c.l.b16 %v361
  %v382 = vunpack.c.h.b16 %v361
  %v383 = vunpack.c.l.b16 %v362
  %v384 = vunpack.c.h.b16 %v362
  %v385 = vunpack.c.l.b16 %v363
  %v386 = vunpack.c.h.b16 %v363
  %v387 = vunpack.c.l.b16 %v364
  %v388 = vunpack.c.h.b16 %v364
  %v389 = vpack.c.b16 %v373, %v373
  %v390 = vpack.c.b16 %v374, %v374
  %v391 = vpack.c.b16 %v375, %v375
  %v392 = vpack.c.b16 %v376, %v376
  %v393 = vpack.c.b16 %v377, %v377
  %v394 = vpack.c.b16 %v378, %v378
  %v395 = vpack.c.b16 %v379, %v379
  %v396 = vpack.c.b16 %v380, %v380
  %v397 = vpack.c.b16 %v381, %v381
  %v398 = vpack.c.b16 %v382, %v382
  %v399 = vpack.c.b16 %v383, %v383
  %v400 = vpack.c.b16 %v384, %v384
  %v401 = vpack.c.b16 %v385, %v385
  %v402 = vpack.c.b16 %v386, %v386
  %v403 = vpack.c.b16 %v387, %v387
  %v404 = vpack.c.b16 %v388, %v388
  %421 = vst [vmem:[%s4] sm:$0xf] %v389
  %422 = vst [vmem:[%s4 + $0x4] sm:$0xf] %v390
  %423 = vst [vmem:[%s4 + $0x8] sm:$0xf] %v391
  %424 = vst [vmem:[%s4 + $0xc] sm:$0xf] %v392
  %425 = vst [vmem:[%s4 + $0x10] sm:$0xf] %v393
  %426 = vst [vmem:[%s4 + $0x14] sm:$0xf] %v394
  %427 = vst [vmem:[%s4 + $0x18] sm:$0xf] %v395
  %428 = vst [vmem:[%s4 + $0x1c] sm:$0xf] %v396
  %429 = vst [vmem:[%s4 + $0x20] sm:$0xf] %v397
  %430 = vst [vmem:[%s4 + $0x24] sm:$0xf] %v398
  %431 = vst [vmem:[%s4 + $0x28] sm:$0xf] %v399
  %432 = vst [vmem:[%s4 + $0x2c] sm:$0xf] %v400
  %433 = vst [vmem:[%s4 + $0x30] sm:$0xf] %v401
  %434 = vst [vmem:[%s4 + $0x34] sm:$0xf] %v402
  %435 = vst [vmem:[%s4 + $0x38] sm:$0xf] %v403
  %436 = vst [vmem:[%s4 + $0x3c] sm:$0xf] %v404
  // Predicated region
  $region18: #{simple_seg_forward.6} parent=0 // pred_check
    _
  $region19: #{simple_seg_forward.6} parent=0 // pred_check_branch
    %438 = sbr.rel (0) target = $region21
  $region20: #{simple_seg_forward.6} parent=0 // pred_region
    _
  $region21: #{simple_seg_forward.6} parent=0 // pred_fallthru
    _
  // Predicated region
  $region22: #{simple_seg_forward.6} parent=0 // pred_check
    _
  $region23: #{simple_seg_forward.6} parent=0 // pred_check_branch
    %440 = sbr.rel (0) target = $region25
  $region24: #{simple_seg_forward.6} parent=0 // pred_region
    _
  $region25: #{simple_seg_forward.6} parent=0 // pred_fallthru
    _

// kernel: simple_seg_forward.7
$region0: #{simple_seg_forward.7}
  #allocation0 [shape = 'u32[]', space=smem, size = 0x4, offset = 0x4, fixed_abs, tag = 'smem constant byte address 0x4 - core index']
  #allocation1 [shape = 'u32[144,128]{1,0:T(1,128)}', space=vmem, size = 0x12000, scoped, tag = 'internal scratch']
  %s0 = inlined_call_operand.vmem [shape: bf16[32,288], index: 0, kind: input, shape index: {}]
  %s1 = inlined_call_operand.vmem [shape: bf16[288,128], index: 1, kind: input, shape index: {}]
  %s2 = inlined_call_operand.vmem [shape: f32[1,128], index: 2, kind: input, shape index: {}]
  %s3 = inlined_call_operand.vmem [shape: f32[1,128], index: 3, kind: input, shape index: {}]
  %s4 = inlined_call_operand.vmem [shape: bf16[32,128], index: 4, kind: output, shape index: {}]
  %s5 = sld [smem:[#allocation0]]
  $region26: #{simple_seg_forward.7} parent=0
    _
  %s7 = ssub.s32 1, %s5
  %s8 = scalar_select 0, %s7, %s5
  // Predicated region
  $region2: #{simple_seg_forward.7} parent=0 // pred_check
    _
  $region3: #{simple_seg_forward.7} parent=0 // pred_check_branch
    %10 = sbr.rel (0) target = $region5
  $region4: #{simple_seg_forward.7} parent=0 // pred_region
    _
  $region5: #{simple_seg_forward.7} parent=0 // pred_fallthru
    _
  // Predicated region
  $region6: #{simple_seg_forward.7} parent=0 // pred_check
    _
  $region7: #{simple_seg_forward.7} parent=0 // pred_check_branch
    %12 = sbr.rel (0) target = $region9
  $region8: #{simple_seg_forward.7} parent=0 // pred_region
    _
  $region9: #{simple_seg_forward.7} parent=0 // pred_fallthru
    _
  // Predicated region
  $region10: #{simple_seg_forward.7} parent=0 // pred_check
    _
  $region11: #{simple_seg_forward.7} parent=0 // pred_check_branch
    %14 = sbr.rel (0) target = $region13
  $region12: #{simple_seg_forward.7} parent=0 // pred_region
    _
  $region13: #{simple_seg_forward.7} parent=0 // pred_fallthru
    _
  // Predicated region
  $region14: #{simple_seg_forward.7} parent=0 // pred_check
    _
  $region15: #{simple_seg_forward.7} parent=0 // pred_check_branch
    %16 = sbr.rel (0) target = $region17
  $region16: #{simple_seg_forward.7} parent=0 // pred_region
    _
  $region17: #{simple_seg_forward.7} parent=0 // pred_fallthru
    _
  %v18 = vld [vmem:[%s0] sm:$0xff]
  %v19 = vld [vmem:[%s0 + $0x8] sm:$0xf]
  %v20 = vld [vmem:[%s0 + $0xc] sm:$0xff]
  %v21 = vld [vmem:[%s0 + $0x14] sm:$0xf]
  %v22 = vld [vmem:[%s0 + $0x18] sm:$0xff]
  %v23 = vld [vmem:[%s0 + $0x20] sm:$0xf]
  %v24 = vld [vmem:[%s0 + $0x24] sm:$0xff]
  %v25 = vld [vmem:[%s0 + $0x2c] sm:$0xf]
  %v26 = vld [vmem:[%s1] sm:$0xf]
  %v27 = vld [vmem:[%s1 + $0x4] sm:$0xf]
  %v28 = vld [vmem:[%s1 + $0x8] sm:$0xf]
  %v29 = vld [vmem:[%s1 + $0xc] sm:$0xf]
  %v30 = vld [vmem:[%s1 + $0x10] sm:$0xf]
  %v31 = vld [vmem:[%s1 + $0x14] sm:$0xf]
  %v32 = vld [vmem:[%s1 + $0x18] sm:$0xf]
  %v33 = vld [vmem:[%s1 + $0x1c] sm:$0xf]
  %v34 = vld [vmem:[%s1 + $0x20] sm:$0xf]
  %v35 = vld [vmem:[%s1 + $0x24] sm:$0xf]
  %v36 = vld [vmem:[%s1 + $0x28] sm:$0xf]
  %v37 = vld [vmem:[%s1 + $0x2c] sm:$0xf]
  %v38 = vld [vmem:[%s1 + $0x30] sm:$0xf]
  %v39 = vld [vmem:[%s1 + $0x34] sm:$0xf]
  %v40 = vld [vmem:[%s1 + $0x38] sm:$0xf]
  %v41 = vld [vmem:[%s1 + $0x3c] sm:$0xf]
  %v42 = vld [vmem:[%s1 + $0x40] sm:$0xf]
  %v43 = vld [vmem:[%s1 + $0x44] sm:$0xf]
  %v44 = vld [vmem:[%s1 + $0x48] sm:$0xf]
  %v45 = vld [vmem:[%s1 + $0x4c] sm:$0xf]
  %v46 = vld [vmem:[%s1 + $0x50] sm:$0xf]
  %v47 = vld [vmem:[%s1 + $0x54] sm:$0xf]
  %v48 = vld [vmem:[%s1 + $0x58] sm:$0xf]
  %v49 = vld [vmem:[%s1 + $0x5c] sm:$0xf]
  %v50 = vld [vmem:[%s1 + $0x60] sm:$0xf]
  %v51 = vld [vmem:[%s1 + $0x64] sm:$0xf]
  %v52 = vld [vmem:[%s1 + $0x68] sm:$0xf]
  %v53 = vld [vmem:[%s1 + $0x6c] sm:$0xf]
  %v54 = vld [vmem:[%s1 + $0x70] sm:$0xf]
  %v55 = vld [vmem:[%s1 + $0x74] sm:$0xf]
  %v56 = vld [vmem:[%s1 + $0x78] sm:$0xf]
  %v57 = vld [vmem:[%s1 + $0x7c] sm:$0xf]
  %v58 = vld [vmem:[%s1 + $0x80] sm:$0xf]
  %v59 = vld [vmem:[%s1 + $0x84] sm:$0xf]
  %v60 = vld [vmem:[%s1 + $0x88] sm:$0xf]
  %v61 = vld [vmem:[%s1 + $0x8c] sm:$0xf]
  %v70 = vunpack.c.l.b16 %v18
  %v71 = vunpack.c.h.b16 %v18
  %v72 = vunpack.c.l.b16 %v19
  %v73 = vunpack.c.l.b16 %v20
  %v74 = vunpack.c.h.b16 %v20
  %v75 = vunpack.c.l.b16 %v21
  %v76 = vunpack.c.l.b16 %v22
  %v77 = vunpack.c.h.b16 %v22
  %v78 = vunpack.c.l.b16 %v23
  %v79 = vunpack.c.l.b16 %v24
  %v80 = vunpack.c.h.b16 %v24
  %v81 = vunpack.c.l.b16 %v25
  %v82 = vpack.c.b16 %v73, %v70
  %v83 = vpack.c.b16 %v74, %v71
  %v84 = vpack.c.b16 %v75, %v72
  %v85 = vpack.c.b16 %v79, %v76
  %v86 = vpack.c.b16 %v80, %v77
  %v87 = vpack.c.b16 %v81, %v78
  %v128 = vunpack.c.l.b16 %v26
  %v129 = vunpack.c.l.b16 %v27
  %v130 = vunpack.c.l.b16 %v28
  %v131 = vunpack.c.l.b16 %v29
  %v132 = vunpack.c.l.b16 %v30
  %v133 = vunpack.c.l.b16 %v31
  %v134 = vunpack.c.l.b16 %v32
  %v135 = vunpack.c.l.b16 %v33
  %v136 = vunpack.c.l.b16 %v34
  %v137 = vunpack.c.l.b16 %v35
  %v138 = vunpack.c.l.b16 %v36
  %v139 = vunpack.c.l.b16 %v37
  %v140 = vunpack.c.l.b16 %v38
  %v141 = vunpack.c.l.b16 %v39
  %v142 = vunpack.c.l.b16 %v40
  %v143 = vunpack.c.l.b16 %v41
  %v144 = vunpack.c.l.b16 %v42
  %v145 = vunpack.c.l.b16 %v43
  %v146 = vunpack.c.l.b16 %v44
  %v147 = vunpack.c.l.b16 %v45
  %v148 = vunpack.c.l.b16 %v46
  %v149 = vunpack.c.l.b16 %v47
  %v150 = vunpack.c.l.b16 %v48
  %v151 = vunpack.c.l.b16 %v49
  %v152 = vunpack.c.l.b16 %v50
  %v153 = vunpack.c.l.b16 %v51
  %v154 = vunpack.c.l.b16 %v52
  %v155 = vunpack.c.l.b16 %v53
  %v156 = vunpack.c.l.b16 %v54
  %v157 = vunpack.c.l.b16 %v55
  %v158 = vunpack.c.l.b16 %v56
  %v159 = vunpack.c.l.b16 %v57
  %v160 = vunpack.c.l.b16 %v58
  %v161 = vunpack.c.l.b16 %v59
  %v162 = vunpack.c.l.b16 %v60
  %v163 = vunpack.c.l.b16 %v61
  %v164 = vpack.c.b16 %v129, %v128
  %v165 = vpack.c.b16 %v131, %v130
  %v166 = vpack.c.b16 %v133, %v132
  %v167 = vpack.c.b16 %v135, %v134
  %v168 = vpack.c.b16 %v137, %v136
  %v169 = vpack.c.b16 %v139, %v138
  %v170 = vpack.c.b16 %v141, %v140
  %v171 = vpack.c.b16 %v143, %v142
  %v172 = vpack.c.b16 %v145, %v144
  %v173 = vpack.c.b16 %v147, %v146
  %v174 = vpack.c.b16 %v149, %v148
  %v175 = vpack.c.b16 %v151, %v150
  %v176 = vpack.c.b16 %v153, %v152
  %v177 = vpack.c.b16 %v155, %v154
  %v178 = vpack.c.b16 %v157, %v156
  %v179 = vpack.c.b16 %v159, %v158
  %v180 = vpack.c.b16 %v161, %v160
  %v181 = vpack.c.b16 %v163, %v162
  %vm200 = vcmask 261120
  %v202 = vsel %vm200, %v84, 0
  %v205 = vsel %vm200, %v87, 0
  %207 = vmatprep.subr.bf16.mxu0 0
  %208 = vmatpush1.bf16.msra.mxu0 %v164
  %209 = vmatprep.subr.bf16.mxu0 0
  %210 = vmatpush1.bf16.msra.mxu0 %v165
  %211 = vmatprep.subr.bf16.mxu0 0
  %212 = vmatpush1.bf16.msra.mxu0 %v166
  %213 = vmatprep.subr.bf16.mxu0 0
  %214 = vmatpush1.bf16.msra.mxu0 %v167
  %215 = vmatprep.subr.bf16.mxu0 0
  %216 = vmatpush1.bf16.msra.mxu0 %v168
  %217 = vmatprep.subr.bf16.mxu0 0
  %218 = vmatpush1.bf16.msra.mxu0 %v169
  %219 = vmatprep.subr.bf16.mxu0 0
  %220 = vmatpush1.bf16.msra.mxu0 %v170
  %221 = vmatprep.subr.bf16.mxu0 0
  %222 = vmatpush1.bf16.msra.mxu0 %v171
  %223 = vmatprep.subr.bf16.mxu0 0
  %224 = vmatpush1.bf16.msra.mxu0 %v172
  %225 = vmatprep.subr.bf16.mxu0 0
  %226 = vmatpush1.bf16.msra.mxu0 %v173
  %227 = vmatprep.subr.bf16.mxu0 0
  %228 = vmatpush1.bf16.msra.mxu0 %v174
  %229 = vmatprep.subr.bf16.mxu0 0
  %230 = vmatpush1.bf16.msra.mxu0 %v175
  %231 = vmatprep.subr.bf16.mxu0 0
  %232 = vmatpush1.bf16.msra.mxu0 %v176
  %233 = vmatprep.subr.bf16.mxu0 0
  %234 = vmatpush1.bf16.msra.mxu0 %v177
  %235 = vmatprep.subr.bf16.mxu0 0
  %236 = vmatpush1.bf16.msra.mxu0 %v178
  %237 = vmatprep.subr.bf16.mxu0 0
  %238 = vmatpush1.bf16.msra.mxu0 %v179
  %239 = vmatprep.mubr.bf16.mxu0 %v83
  %240 = vmatmul.mubr.bf16.gmra.mrb[0].mxu0 %v82
  %v241 = vpop.f32.mrb[0].mxu0
  %v242 = vadd.f32 0.0, %v241
  %v243 = vpop.f32.mrb[0].mxu0
  %v244 = vpop.f32.mrb[0].mxu0
  %v245 = vadd.f32 0.0, %v244
  %v246 = vpop.f32.mrb[0].mxu0
  %247 = vmatprep.mubr.bf16.mxu0 %v86
  %248 = vmatmul.mubr.bf16.gmra.mrb[0].mxu0 %v85
  %v249 = vpop.f32.mrb[0].mxu0
  %v250 = vadd.f32 0.0, %v249
  %v251 = vpop.f32.mrb[0].mxu0
  %v252 = vpop.f32.mrb[0].mxu0
  %v253 = vadd.f32 0.0, %v252
  %v254 = vpop.f32.mrb[0].mxu0
  %255 = vdwg.mxu0
  %256 = vmatprep.subr.bf16.mxu0 0
  %257 = vmatpush1.bf16.msra.mxu0 %v180
  %258 = vmatprep.subr.bf16.mxu0 0
  %259 = vmatpush1.bf16.msra.mxu0 %v181
  %260 = vmatprep.subr.bf16.mxu0 0
  %261 = vmatpush1.bf16.msra.mxu0 0
  %262 = vmatprep.subr.bf16.mxu0 0
  %263 = vmatpush1.bf16.msra.mxu0 0
  %264 = vmatprep.subr.bf16.mxu0 0
  %265 = vmatpush1.bf16.msra.mxu0 0
  %266 = vmatprep.subr.bf16.mxu0 0
  %267 = vmatpush1.bf16.msra.mxu0 0
  %268 = vmatprep.subr.bf16.mxu0 0
  %269 = vmatpush1.bf16.msra.mxu0 0
  %270 = vmatprep.subr.bf16.mxu0 0
  %271 = vmatpush1.bf16.msra.mxu0 0
  %272 = vmatprep.subr.bf16.mxu0 0
  %273 = vmatpush1.bf16.msra.mxu0 0
  %274 = vmatprep.subr.bf16.mxu0 0
  %275 = vmatpush1.bf16.msra.mxu0 0
  %276 = vmatprep.subr.bf16.mxu0 0
  %277 = vmatpush1.bf16.msra.mxu0 0
  %278 = vmatprep.subr.bf16.mxu0 0
  %279 = vmatpush1.bf16.msra.mxu0 0
  %280 = vmatprep.subr.bf16.mxu0 0
  %281 = vmatpush1.bf16.msra.mxu0 0
  %282 = vmatprep.subr.bf16.mxu0 0
  %283 = vmatpush1.bf16.msra.mxu0 0
  %284 = vmatprep.subr.bf16.mxu0 0
  %285 = vmatpush1.bf16.msra.mxu0 0
  %286 = vmatprep.subr.bf16.mxu0 0
  %287 = vmatpush1.bf16.msra.mxu0 0
  %288 = vmatprep.mubr.bf16.mxu0 0
  %289 = vmatmul.mubr.bf16.gmra.mrb[0].mxu0 %v202
  %v290 = vpop.f32.mrb[0].mxu0
  %v291 = vadd.f32 %v242, %v290
  %v292 = vpop.f32.mrb[0].mxu0
  %v293 = vpop.f32.mrb[0].mxu0
  %v294 = vadd.f32 %v245, %v293
  %v295 = vpop.f32.mrb[0].mxu0
  %296 = vmatprep.mubr.bf16.mxu0 0
  %297 = vmatmul.mubr.bf16.gmra.mrb[0].mxu0 %v205
  %v298 = vpop.f32.mrb[0].mxu0
  %v299 = vadd.f32 %v250, %v298
  %v300 = vpop.f32.mrb[0].mxu0
  %v301 = vpop.f32.mrb[0].mxu0
  %v302 = vadd.f32 %v253, %v301
  %v303 = vpop.f32.mrb[0].mxu0
  %304 = vdwg.mxu0
  %v305 = vadd.f32 %v291, %v294
  %v306 = vadd.f32 %v305, %v299
  %v307 = vadd.f32 %v306, %v302
  %v308 = vrot.slane %v307, 4
  %v309 = vadd.f32 %v307, %v308
  %v310 = vrot.slane %v309, 2
  %v311 = vadd.f32 %v309, %v310
  %v312 = vrot.slane %v311, 1
  %v313 = vadd.f32 %v311, %v312
  %v314 = vadd.f32 %v313, 0.0
  %v315 = vmul.f32 %v314, 0.03125
  %v316 = vsub.f32 %v291, %v315
  %v317 = vsub.f32 %v294, %v315
  %v318 = vsub.f32 %v299, %v315
  %v319 = vsub.f32 %v302, %v315
  %v320 = vmul.f32 %v316, %v316
  %v321 = vmul.f32 %v317, %v317
  %v322 = vmul.f32 %v318, %v318
  %v323 = vmul.f32 %v319, %v319
  %v324 = vadd.f32 %v320, %v321
  %v325 = vadd.f32 %v324, %v322
  %v326 = vadd.f32 %v325, %v323
  %v327 = vrot.slane %v326, 4
  %v328 = vadd.f32 %v326, %v327
  %v329 = vrot.slane %v328, 2
  %v330 = vadd.f32 %v328, %v329
  %v331 = vrot.slane %v330, 1
  %v332 = vadd.f32 %v330, %v331
  %v333 = vadd.f32 %v332, 0.0
  %v334 = vmul.f32 %v333, 0.03125
  %v335 = vld [vmem:[%s2] sm:$0x1]
  %v336 = vadd.f32 %v334, 1e-05
  %v337 = vrsqrt.pop %v336
  %v338 = vmul.f32 %v335, %v337
  %v339 = vld [vmem:[%s3] sm:$0x1]
  %v340 = vmul.f32 %v315, %v338
  %v341 = vsub.f32 %v339, %v340
  %v343 = vlaneseq
  %v344 = vshrl.u32 %v343, 7
  %v345 = vsub.s32 0, %v344
  %v346 = vrot.slane %v338, %v345
  %v348 = vmul.f32 %v291, %v346
  %v349 = vmul.f32 %v294, %v346
  %v350 = vmul.f32 %v299, %v346
  %v351 = vmul.f32 %v302, %v346
  %v353 = vlaneseq
  %v354 = vshrl.u32 %v353, 7
  %v355 = vsub.s32 0, %v354
  %v356 = vrot.slane %v341, %v355
  %v358 = vadd.f32 %v348, %v356
  %v359 = vadd.f32 %v349, %v356
  %v360 = vadd.f32 %v350, %v356
  %v361 = vadd.f32 %v351, %v356
  %v362 = vmax.f32 %v358, 0.0
  %v363 = vmax.f32 %v359, 0.0
  %v364 = vmax.f32 %v360, 0.0
  %v365 = vmax.f32 %v361, 0.0
  %v366 = vpack.c.bf16 %v363, %v362
  %v367 = vpack.c.bf16 %v365, %v364
  %v370 = vunpack.c.l.b16 %v366
  %v371 = vunpack.c.h.b16 %v366
  %v372 = vunpack.c.l.b16 %v367
  %v373 = vunpack.c.h.b16 %v367
  %v374 = vpack.c.b16 %v370, %v370
  %v375 = vpack.c.b16 %v371, %v371
  %v376 = vpack.c.b16 %v372, %v372
  %v377 = vpack.c.b16 %v373, %v373
  %382 = vst [vmem:[%s4] sm:$0xf] %v374
  %383 = vst [vmem:[%s4 + $0x4] sm:$0xf] %v375
  %384 = vst [vmem:[%s4 + $0x8] sm:$0xf] %v376
  %385 = vst [vmem:[%s4 + $0xc] sm:$0xf] %v377
  // Predicated region
  $region18: #{simple_seg_forward.7} parent=0 // pred_check
    _
  $region19: #{simple_seg_forward.7} parent=0 // pred_check_branch
    %387 = sbr.rel (0) target = $region21
  $region20: #{simple_seg_forward.7} parent=0 // pred_region
    _
  $region21: #{simple_seg_forward.7} parent=0 // pred_fallthru
    _
  // Predicated region
  $region22: #{simple_seg_forward.7} parent=0 // pred_check
    _
  $region23: #{simple_seg_forward.7} parent=0 // pred_check_branch
    %389 = sbr.rel (0) target = $region25
  $region24: #{simple_seg_forward.7} parent=0 // pred_region
    _
  $region25: #{simple_seg_forward.7} parent=0 // pred_fallthru
    _

// kernel: simple_seg_forward.8
$region0: #{simple_seg_forward.8}
  #allocation0 [shape = 'u32[]', space=smem, size = 0x4, offset = 0x4, fixed_abs, tag = 'smem constant byte address 0x4 - core index']
  #allocation1 [shape = 'u32[144,128]{1,0:T(1,128)}', space=vmem, size = 0x12000, scoped, tag = 'internal scratch']
  %s0 = inlined_call_operand.vmem [shape: bf16[8,576], index: 0, kind: input, shape index: {}]
  %s1 = inlined_call_operand.vmem [shape: bf16[576,128], index: 1, kind: input, shape index: {}]
  %s2 = inlined_call_operand.vmem [shape: f32[1,128], index: 2, kind: input, shape index: {}]
  %s3 = inlined_call_operand.vmem [shape: f32[1,128], index: 3, kind: input, shape index: {}]
  %s4 = inlined_call_operand.vmem [shape: bf16[8,128], index: 4, kind: output, shape index: {}]
  %s5 = sld [smem:[#allocation0]]
  $region26: #{simple_seg_forward.8} parent=0
    _
  %s7 = ssub.s32 1, %s5
  %s8 = scalar_select 0, %s7, %s5
  // Predicated region
  $region2: #{simple_seg_forward.8} parent=0 // pred_check
    _
  $region3: #{simple_seg_forward.8} parent=0 // pred_check_branch
    %10 = sbr.rel (0) target = $region5
  $region4: #{simple_seg_forward.8} parent=0 // pred_region
    _
  $region5: #{simple_seg_forward.8} parent=0 // pred_fallthru
    _
  // Predicated region
  $region6: #{simple_seg_forward.8} parent=0 // pred_check
    _
  $region7: #{simple_seg_forward.8} parent=0 // pred_check_branch
    %12 = sbr.rel (0) target = $region9
  $region8: #{simple_seg_forward.8} parent=0 // pred_region
    _
  $region9: #{simple_seg_forward.8} parent=0 // pred_fallthru
    _
  // Predicated region
  $region10: #{simple_seg_forward.8} parent=0 // pred_check
    _
  $region11: #{simple_seg_forward.8} parent=0 // pred_check_branch
    %14 = sbr.rel (0) target = $region13
  $region12: #{simple_seg_forward.8} parent=0 // pred_region
    _
  $region13: #{simple_seg_forward.8} parent=0 // pred_fallthru
    _
  // Predicated region
  $region14: #{simple_seg_forward.8} parent=0 // pred_check
    _
  $region15: #{simple_seg_forward.8} parent=0 // pred_check_branch
    %16 = sbr.rel (0) target = $region17
  $region16: #{simple_seg_forward.8} parent=0 // pred_region
    _
  $region17: #{simple_seg_forward.8} parent=0 // pred_fallthru
    _
  %v18 = vld [vmem:[%s0] sm:$0xff]
  %v19 = vld [vmem:[%s0 + $0x8] sm:$0xff]
  %v20 = vld [vmem:[%s0 + $0x10] sm:$0xf]
  %v21 = vld [vmem:[%s1] sm:$0xf]
  %v22 = vld [vmem:[%s1 + $0x4] sm:$0xf]
  %v23 = vld [vmem:[%s1 + $0x8] sm:$0xf]
  %v24 = vld [vmem:[%s1 + $0xc] sm:$0xf]
  %v25 = vld [vmem:[%s1 + $0x10] sm:$0xf]
  %v26 = vld [vmem:[%s1 + $0x14] sm:$0xf]
  %v27 = vld [vmem:[%s1 + $0x18] sm:$0xf]
  %v28 = vld [vmem:[%s1 + $0x1c] sm:$0xf]
  %v29 = vld [vmem:[%s1 + $0x20] sm:$0xf]
  %v30 = vld [vmem:[%s1 + $0x24] sm:$0xf]
  %v31 = vld [vmem:[%s1 + $0x28] sm:$0xf]
  %v32 = vld [vmem:[%s1 + $0x2c] sm:$0xf]
  %v33 = vld [vmem:[%s1 + $0x30] sm:$0xf]
  %v34 = vld [vmem:[%s1 + $0x34] sm:$0xf]
  %v35 = vld [vmem:[%s1 + $0x38] sm:$0xf]
  %v36 = vld [vmem:[%s1 + $0x3c] sm:$0xf]
  %v37 = vld [vmem:[%s1 + $0x40] sm:$0xf]
  %v38 = vld [vmem:[%s1 + $0x44] sm:$0xf]
  %v39 = vld [vmem:[%s1 + $0x48] sm:$0xf]
  %v40 = vld [vmem:[%s1 + $0x4c] sm:$0xf]
  %v41 = vld [vmem:[%s1 + $0x50] sm:$0xf]
  %v42 = vld [vmem:[%s1 + $0x54] sm:$0xf]
  %v43 = vld [vmem:[%s1 + $0x58] sm:$0xf]
  %v44 = vld [vmem:[%s1 + $0x5c] sm:$0xf]
  %v45 = vld [vmem:[%s1 + $0x60] sm:$0xf]
  %v46 = vld [vmem:[%s1 + $0x64] sm:$0xf]
  %v47 = vld [vmem:[%s1 + $0x68] sm:$0xf]
  %v48 = vld [vmem:[%s1 + $0x6c] sm:$0xf]
  %v49 = vld [vmem:[%s1 + $0x70] sm:$0xf]
  %v50 = vld [vmem:[%s1 + $0x74] sm:$0xf]
  %v51 = vld [vmem:[%s1 + $0x78] sm:$0xf]
  %v52 = vld [vmem:[%s1 + $0x7c] sm:$0xf]
  %v53 = vld [vmem:[%s1 + $0x80] sm:$0xf]
  %v54 = vld [vmem:[%s1 + $0x84] sm:$0xf]
  %v55 = vld [vmem:[%s1 + $0x88] sm:$0xf]
  %v56 = vld [vmem:[%s1 + $0x8c] sm:$0xf]
  %v57 = vld [vmem:[%s1 + $0x90] sm:$0xf]
  %v58 = vld [vmem:[%s1 + $0x94] sm:$0xf]
  %v59 = vld [vmem:[%s1 + $0x98] sm:$0xf]
  %v60 = vld [vmem:[%s1 + $0x9c] sm:$0xf]
  %v61 = vld [vmem:[%s1 + $0xa0] sm:$0xf]
  %v62 = vld [vmem:[%s1 + $0xa4] sm:$0xf]
  %v63 = vld [vmem:[%s1 + $0xa8] sm:$0xf]
  %v64 = vld [vmem:[%s1 + $0xac] sm:$0xf]
  %v65 = vld [vmem:[%s1 + $0xb0] sm:$0xf]
  %v66 = vld [vmem:[%s1 + $0xb4] sm:$0xf]
  %v67 = vld [vmem:[%s1 + $0xb8] sm:$0xf]
  %v68 = vld [vmem:[%s1 + $0xbc] sm:$0xf]
  %v69 = vld [vmem:[%s1 + $0xc0] sm:$0xf]
  %v70 = vld [vmem:[%s1 + $0xc4] sm:$0xf]
  %v71 = vld [vmem:[%s1 + $0xc8] sm:$0xf]
  %v72 = vld [vmem:[%s1 + $0xcc] sm:$0xf]
  %v73 = vld [vmem:[%s1 + $0xd0] sm:$0xf]
  %v74 = vld [vmem:[%s1 + $0xd4] sm:$0xf]
  %v75 = vld [vmem:[%s1 + $0xd8] sm:$0xf]
  %v76 = vld [vmem:[%s1 + $0xdc] sm:$0xf]
  %v77 = vld [vmem:[%s1 + $0xe0] sm:$0xf]
  %v78 = vld [vmem:[%s1 + $0xe4] sm:$0xf]
  %v79 = vld [vmem:[%s1 + $0xe8] sm:$0xf]
  %v80 = vld [vmem:[%s1 + $0xec] sm:$0xf]
  %v81 = vld [vmem:[%s1 + $0xf0] sm:$0xf]
  %v82 = vld [vmem:[%s1 + $0xf4] sm:$0xf]
  %v83 = vld [vmem:[%s1 + $0xf8] sm:$0xf]
  %v84 = vld [vmem:[%s1 + $0xfc] sm:$0xf]
  %v85 = vld [vmem:[%s1 + $0x100] sm:$0xf]
  %v86 = vld [vmem:[%s1 + $0x104] sm:$0xf]
  %v87 = vld [vmem:[%s1 + $0x108] sm:$0xf]
  %v88 = vld [vmem:[%s1 + $0x10c] sm:$0xf]
  %v89 = vld [vmem:[%s1 + $0x110] sm:$0xf]
  %v90 = vld [vmem:[%s1 + $0x114] sm:$0xf]
  %v91 = vld [vmem:[%s1 + $0x118] sm:$0xf]
  %v92 = vld [vmem:[%s1 + $0x11c] sm:$0xf]
  %v96 = vunpack.c.l.b16 %v18
  %v97 = vunpack.c.h.b16 %v18
  %v98 = vunpack.c.l.b16 %v19
  %v99 = vunpack.c.h.b16 %v19
  %v100 = vunpack.c.l.b16 %v20
  %v101 = vpack.c.b16 %v96, %v96
  %v102 = vpack.c.b16 %v97, %v97
  %v103 = vpack.c.b16 %v98, %v98
  %v104 = vpack.c.b16 %v99, %v99
  %v105 = vpack.c.b16 %v100, %v100
  %v182 = vunpack.c.l.b16 %v21
  %v183 = vunpack.c.l.b16 %v22
  %v184 = vunpack.c.l.b16 %v23
  %v185 = vunpack.c.l.b16 %v24
  %v186 = vunpack.c.l.b16 %v25
  %v187 = vunpack.c.l.b16 %v26
  %v188 = vunpack.c.l.b16 %v27
  %v189 = vunpack.c.l.b16 %v28
  %v190 = vunpack.c.l.b16 %v29
  %v191 = vunpack.c.l.b16 %v30
  %v192 = vunpack.c.l.b16 %v31
  %v193 = vunpack.c.l.b16 %v32
  %v194 = vunpack.c.l.b16 %v33
  %v195 = vunpack.c.l.b16 %v34
  %v196 = vunpack.c.l.b16 %v35
  %v197 = vunpack.c.l.b16 %v36
  %v198 = vunpack.c.l.b16 %v37
  %v199 = vunpack.c.l.b16 %v38
  %v200 = vunpack.c.l.b16 %v39
  %v201 = vunpack.c.l.b16 %v40
  %v202 = vunpack.c.l.b16 %v41
  %v203 = vunpack.c.l.b16 %v42
  %v204 = vunpack.c.l.b16 %v43
  %v205 = vunpack.c.l.b16 %v44
  %v206 = vunpack.c.l.b16 %v45
  %v207 = vunpack.c.l.b16 %v46
  %v208 = vunpack.c.l.b16 %v47
  %v209 = vunpack.c.l.b16 %v48
  %v210 = vunpack.c.l.b16 %v49
  %v211 = vunpack.c.l.b16 %v50
  %v212 = vunpack.c.l.b16 %v51
  %v213 = vunpack.c.l.b16 %v52
  %v214 = vunpack.c.l.b16 %v53
  %v215 = vunpack.c.l.b16 %v54
  %v216 = vunpack.c.l.b16 %v55
  %v217 = vunpack.c.l.b16 %v56
  %v218 = vunpack.c.l.b16 %v57
  %v219 = vunpack.c.l.b16 %v58
  %v220 = vunpack.c.l.b16 %v59
  %v221 = vunpack.c.l.b16 %v60
  %v222 = vunpack.c.l.b16 %v61
  %v223 = vunpack.c.l.b16 %v62
  %v224 = vunpack.c.l.b16 %v63
  %v225 = vunpack.c.l.b16 %v64
  %v226 = vunpack.c.l.b16 %v65
  %v227 = vunpack.c.l.b16 %v66
  %v228 = vunpack.c.l.b16 %v67
  %v229 = vunpack.c.l.b16 %v68
  %v230 = vunpack.c.l.b16 %v69
  %v231 = vunpack.c.l.b16 %v70
  %v232 = vunpack.c.l.b16 %v71
  %v233 = vunpack.c.l.b16 %v72
  %v234 = vunpack.c.l.b16 %v73
  %v235 = vunpack.c.l.b16 %v74
  %v236 = vunpack.c.l.b16 %v75
  %v237 = vunpack.c.l.b16 %v76
  %v238 = vunpack.c.l.b16 %v77
  %v239 = vunpack.c.l.b16 %v78
  %v240 = vunpack.c.l.b16 %v79
  %v241 = vunpack.c.l.b16 %v80
  %v242 = vunpack.c.l.b16 %v81
  %v243 = vunpack.c.l.b16 %v82
  %v244 = vunpack.c.l.b16 %v83
  %v245 = vunpack.c.l.b16 %v84
  %v246 = vunpack.c.l.b16 %v85
  %v247 = vunpack.c.l.b16 %v86
  %v248 = vunpack.c.l.b16 %v87
  %v249 = vunpack.c.l.b16 %v88
  %v250 = vunpack.c.l.b16 %v89
  %v251 = vunpack.c.l.b16 %v90
  %v252 = vunpack.c.l.b16 %v91
  %v253 = vunpack.c.l.b16 %v92
  %v254 = vpack.c.b16 %v183, %v182
  %v255 = vpack.c.b16 %v185, %v184
  %v256 = vpack.c.b16 %v187, %v186
  %v257 = vpack.c.b16 %v189, %v188
  %v258 = vpack.c.b16 %v191, %v190
  %v259 = vpack.c.b16 %v193, %v192
  %v260 = vpack.c.b16 %v195, %v194
  %v261 = vpack.c.b16 %v197, %v196
  %v262 = vpack.c.b16 %v199, %v198
  %v263 = vpack.c.b16 %v201, %v200
  %v264 = vpack.c.b16 %v203, %v202
  %v265 = vpack.c.b16 %v205, %v204
  %v266 = vpack.c.b16 %v207, %v206
  %v267 = vpack.c.b16 %v209, %v208
  %v268 = vpack.c.b16 %v211, %v210
  %v269 = vpack.c.b16 %v213, %v212
  %v270 = vpack.c.b16 %v215, %v214
  %v271 = vpack.c.b16 %v217, %v216
  %v272 = vpack.c.b16 %v219, %v218
  %v273 = vpack.c.b16 %v221, %v220
  %v274 = vpack.c.b16 %v223, %v222
  %v275 = vpack.c.b16 %v225, %v224
  %v276 = vpack.c.b16 %v227, %v226
  %v277 = vpack.c.b16 %v229, %v228
  %v278 = vpack.c.b16 %v231, %v230
  %v279 = vpack.c.b16 %v233, %v232
  %v280 = vpack.c.b16 %v235, %v234
  %v281 = vpack.c.b16 %v237, %v236
  %v282 = vpack.c.b16 %v239, %v238
  %v283 = vpack.c.b16 %v241, %v240
  %v284 = vpack.c.b16 %v243, %v242
  %v285 = vpack.c.b16 %v245, %v244
  %v286 = vpack.c.b16 %v247, %v246
  %v287 = vpack.c.b16 %v249, %v248
  %v288 = vpack.c.b16 %v251, %v250
  %v289 = vpack.c.b16 %v253, %v252
  %vm326 = vcmask 523264
  %v328 = vsel %vm326, %v105, 0
  %330 = vmatprep.subr.bf16.mxu0 0
  %331 = vmatpush1.bf16.msra.mxu0 %v254
  %332 = vmatprep.subr.bf16.mxu0 0
  %333 = vmatpush1.bf16.msra.mxu0 %v255
  %334 = vmatprep.subr.bf16.mxu0 0
  %335 = vmatpush1.bf16.msra.mxu0 %v256
  %336 = vmatprep.subr.bf16.mxu0 0
  %337 = vmatpush1.bf16.msra.mxu0 %v257
  %338 = vmatprep.subr.bf16.mxu0 0
  %339 = vmatpush1.bf16.msra.mxu0 %v258
  %340 = vmatprep.subr.bf16.mxu0 0
  %341 = vmatpush1.bf16.msra.mxu0 %v259
  %342 = vmatprep.subr.bf16.mxu0 0
  %343 = vmatpush1.bf16.msra.mxu0 %v260
  %344 = vmatprep.subr.bf16.mxu0 0
  %345 = vmatpush1.bf16.msra.mxu0 %v261
  %346 = vmatprep.subr.bf16.mxu0 0
  %347 = vmatpush1.bf16.msra.mxu0 %v262
  %348 = vmatprep.subr.bf16.mxu0 0
  %349 = vmatpush1.bf16.msra.mxu0 %v263
  %350 = vmatprep.subr.bf16.mxu0 0
  %351 = vmatpush1.bf16.msra.mxu0 %v264
  %352 = vmatprep.subr.bf16.mxu0 0
  %353 = vmatpush1.bf16.msra.mxu0 %v265
  %354 = vmatprep.subr.bf16.mxu0 0
  %355 = vmatpush1.bf16.msra.mxu0 %v266
  %356 = vmatprep.subr.bf16.mxu0 0
  %357 = vmatpush1.bf16.msra.mxu0 %v267
  %358 = vmatprep.subr.bf16.mxu0 0
  %359 = vmatpush1.bf16.msra.mxu0 %v268
  %360 = vmatprep.subr.bf16.mxu0 0
  %361 = vmatpush1.bf16.msra.mxu0 %v269
  %362 = vmatprep.mubr.bf16.mxu0 %v102
  %363 = vmatmul.mubr.bf16.gmra.mrb[0].mxu0 %v101
  %v364 = vpop.f32.mrb[0].mxu0
  %v365 = vadd.f32 0.0, %v364
  %v366 = vpop.f32.mrb[0].mxu0
  %v367 = vpop.f32.mrb[0].mxu0
  %v368 = vpop.f32.mrb[0].mxu0
  %369 = vdwg.mxu0
  %370 = vmatprep.subr.bf16.mxu0 0
  %371 = vmatpush1.bf16.msra.mxu0 %v270
  %372 = vmatprep.subr.bf16.mxu0 0
  %373 = vmatpush1.bf16.msra.mxu0 %v271
  %374 = vmatprep.subr.bf16.mxu0 0
  %375 = vmatpush1.bf16.msra.mxu0 %v272
  %376 = vmatprep.subr.bf16.mxu0 0
  %377 = vmatpush1.bf16.msra.mxu0 %v273
  %378 = vmatprep.subr.bf16.mxu0 0
  %379 = vmatpush1.bf16.msra.mxu0 %v274
  %380 = vmatprep.subr.bf16.mxu0 0
  %381 = vmatpush1.bf16.msra.mxu0 %v275
  %382 = vmatprep.subr.bf16.mxu0 0
  %383 = vmatpush1.bf16.msra.mxu0 %v276
  %384 = vmatprep.subr.bf16.mxu0 0
  %385 = vmatpush1.bf16.msra.mxu0 %v277
  %386 = vmatprep.subr.bf16.mxu0 0
  %387 = vmatpush1.bf16.msra.mxu0 %v278
  %388 = vmatprep.subr.bf16.mxu0 0
  %389 = vmatpush1.bf16.msra.mxu0 %v279
  %390 = vmatprep.subr.bf16.mxu0 0
  %391 = vmatpush1.bf16.msra.mxu0 %v280
  %392 = vmatprep.subr.bf16.mxu0 0
  %393 = vmatpush1.bf16.msra.mxu0 %v281
  %394 = vmatprep.subr.bf16.mxu0 0
  %395 = vmatpush1.bf16.msra.mxu0 %v282
  %396 = vmatprep.subr.bf16.mxu0 0
  %397 = vmatpush1.bf16.msra.mxu0 %v283
  %398 = vmatprep.subr.bf16.mxu0 0
  %399 = vmatpush1.bf16.msra.mxu0 %v284
  %400 = vmatprep.subr.bf16.mxu0 0
  %401 = vmatpush1.bf16.msra.mxu0 %v285
  %402 = vmatprep.mubr.bf16.mxu0 %v104
  %403 = vmatmul.mubr.bf16.gmra.mrb[0].mxu0 %v103
  %v404 = vpop.f32.mrb[0].mxu0
  %v405 = vadd.f32 %v365, %v404
  %v406 = vpop.f32.mrb[0].mxu0
  %v407 = vpop.f32.mrb[0].mxu0
  %v408 = vpop.f32.mrb[0].mxu0
  %409 = vdwg.mxu0
  %410 = vmatprep.subr.bf16.mxu0 0
  %411 = vmatpush1.bf16.msra.mxu0 %v286
  %412 = vmatprep.subr.bf16.mxu0 0
  %413 = vmatpush1.bf16.msra.mxu0 %v287
  %414 = vmatprep.subr.bf16.mxu0 0
  %415 = vmatpush1.bf16.msra.mxu0 %v288
  %416 = vmatprep.subr.bf16.mxu0 0
  %417 = vmatpush1.bf16.msra.mxu0 %v289
  %418 = vmatprep.subr.bf16.mxu0 0
  %419 = vmatpush1.bf16.msra.mxu0 0
  %420 = vmatprep.subr.bf16.mxu0 0
  %421 = vmatpush1.bf16.msra.mxu0 0
  %422 = vmatprep.subr.bf16.mxu0 0
  %423 = vmatpush1.bf16.msra.mxu0 0
  %424 = vmatprep.subr.bf16.mxu0 0
  %425 = vmatpush1.bf16.msra.mxu0 0
  %426 = vmatprep.subr.bf16.mxu0 0
  %427 = vmatpush1.bf16.msra.mxu0 0
  %428 = vmatprep.subr.bf16.mxu0 0
  %429 = vmatpush1.bf16.msra.mxu0 0
  %430 = vmatprep.subr.bf16.mxu0 0
  %431 = vmatpush1.bf16.msra.mxu0 0
  %432 = vmatprep.subr.bf16.mxu0 0
  %433 = vmatpush1.bf16.msra.mxu0 0
  %434 = vmatprep.subr.bf16.mxu0 0
  %435 = vmatpush1.bf16.msra.mxu0 0
  %436 = vmatprep.subr.bf16.mxu0 0
  %437 = vmatpush1.bf16.msra.mxu0 0
  %438 = vmatprep.subr.bf16.mxu0 0
  %439 = vmatpush1.bf16.msra.mxu0 0
  %440 = vmatprep.subr.bf16.mxu0 0
  %441 = vmatpush1.bf16.msra.mxu0 0
  %442 = vmatprep.mubr.bf16.mxu0 0
  %443 = vmatmul.mubr.bf16.gmra.mrb[0].mxu0 %v328
  %v444 = vpop.f32.mrb[0].mxu0
  %v445 = vadd.f32 %v405, %v444
  %v446 = vpop.f32.mrb[0].mxu0
  %v447 = vpop.f32.mrb[0].mxu0
  %v448 = vpop.f32.mrb[0].mxu0
  %449 = vdwg.mxu0
  %v450 = vrot.slane %v445, 4
  %v451 = vadd.f32 %v445, %v450
  %v452 = vrot.slane %v451, 2
  %v453 = vadd.f32 %v451, %v452
  %v454 = vrot.slane %v453, 1
  %v455 = vadd.f32 %v453, %v454
  %v456 = vadd.f32 %v455, 0.0
  %v457 = vmul.f32 %v456, 0.125
  %v458 = vsub.f32 %v445, %v457
  %v459 = vmul.f32 %v458, %v458
  %v460 = vrot.slane %v459, 4
  %v461 = vadd.f32 %v459, %v460
  %v462 = vrot.slane %v461, 2
  %v463 = vadd.f32 %v461, %v462
  %v464 = vrot.slane %v463, 1
  %v465 = vadd.f32 %v463, %v464
  %v466 = vadd.f32 %v465, 0.0
  %v467 = vmul.f32 %v466, 0.125
  %v468 = vld [vmem:[%s2] sm:$0x1]
  %v469 = vadd.f32 %v467, 1e-05
  %v470 = vrsqrt.pop %v469
  %v471 = vmul.f32 %v468, %v470
  %v472 = vld [vmem:[%s3] sm:$0x1]
  %v473 = vmul.f32 %v457, %v471
  %v474 = vsub.f32 %v472, %v473
  %v476 = vlaneseq
  %v477 = vshrl.u32 %v476, 7
  %v478 = vsub.s32 0, %v477
  %v479 = vrot.slane %v471, %v478
  %v481 = vmul.f32 %v445, %v479
  %v483 = vlaneseq
  %v484 = vshrl.u32 %v483, 7
  %v485 = vsub.s32 0, %v484
  %v486 = vrot.slane %v474, %v485
  %v488 = vadd.f32 %v481, %v486
  %v489 = vmax.f32 %v488, 0.0
  %v490 = vpack.c.bf16 %v489, %v489
  %491 = vst [vmem:[%s4] sm:$0xf] %v490
  // Predicated region
  $region18: #{simple_seg_forward.8} parent=0 // pred_check
    _
  $region19: #{simple_seg_forward.8} parent=0 // pred_check_branch
    %493 = sbr.rel (0) target = $region21
  $region20: #{simple_seg_forward.8} parent=0 // pred_region
    _
  $region21: #{simple_seg_forward.8} parent=0 // pred_fallthru
    _
  // Predicated region
  $region22: #{simple_seg_forward.8} parent=0 // pred_check
    _
  $region23: #{simple_seg_forward.8} parent=0 // pred_check_branch
    %495 = sbr.rel (0) target = $region25
  $region24: #{simple_seg_forward.8} parent=0 // pred_region
    _
  $region25: #{simple_seg_forward.8} parent=0 // pred_fallthru
    _

// kernel: simple_seg_forward.9
$region0: #{simple_seg_forward.9}
  #allocation0 [shape = 'u32[]', space=smem, size = 0x4, offset = 0x4, fixed_abs, tag = 'smem constant byte address 0x4 - core index']
  #allocation1 [shape = 'u32[144,128]{1,0:T(1,128)}', space=vmem, size = 0x12000, scoped, tag = 'internal scratch']
  %s0 = inlined_call_operand.vmem [shape: bf16[8,1152], index: 0, kind: input, shape index: {}]
  %s1 = inlined_call_operand.vmem [shape: bf16[1152,512], index: 1, kind: input, shape index: {}]
  %s2 = inlined_call_operand.vmem [shape: f32[1,128], index: 2, kind: input, shape index: {}]
  %s3 = inlined_call_operand.vmem [shape: f32[1,128], index: 3, kind: input, shape index: {}]
  %s4 = inlined_call_operand.vmem [shape: bf16[8,512], index: 4, kind: output, shape index: {}]
  %s5 = sld [smem:[#allocation0]]
  $region26: #{simple_seg_forward.9} parent=0
    _
  %s7 = ssub.s32 1, %s5
  %s8 = scalar_select 0, %s7, %s5
  // Predicated region
  $region2: #{simple_seg_forward.9} parent=0 // pred_check
    _
  $region3: #{simple_seg_forward.9} parent=0 // pred_check_branch
    %10 = sbr.rel (0) target = $region5
  $region4: #{simple_seg_forward.9} parent=0 // pred_region
    _
  $region5: #{simple_seg_forward.9} parent=0 // pred_fallthru
    _
  // Predicated region
  $region6: #{simple_seg_forward.9} parent=0 // pred_check
    _
  $region7: #{simple_seg_forward.9} parent=0 // pred_check_branch
    %12 = sbr.rel (0) target = $region9
  $region8: #{simple_seg_forward.9} parent=0 // pred_region
    _
  $region9: #{simple_seg_forward.9} parent=0 // pred_fallthru
    _
  // Predicated region
  $region10: #{simple_seg_forward.9} parent=0 // pred_check
    _
  $region11: #{simple_seg_forward.9} parent=0 // pred_check_branch
    %14 = sbr.rel (0) target = $region13
  $region12: #{simple_seg_forward.9} parent=0 // pred_region
    _
  $region13: #{simple_seg_forward.9} parent=0 // pred_fallthru
    _
  // Predicated region
  $region14: #{simple_seg_forward.9} parent=0 // pred_check
    _
  $region15: #{simple_seg_forward.9} parent=0 // pred_check_branch
    %16 = sbr.rel (0) target = $region17
  $region16: #{simple_seg_forward.9} parent=0 // pred_region
    _
  $region17: #{simple_seg_forward.9} parent=0 // pred_fallthru
    _
  %v18 = vld [vmem:[%s0] sm:$0xff]
  %v19 = vld [vmem:[%s0 + $0x8] sm:$0xff]
  %v20 = vld [vmem:[%s0 + $0x10] sm:$0xff]
  %v21 = vld [vmem:[%s0 + $0x18] sm:$0xff]
  %v22 = vld [vmem:[%s0 + $0x20] sm:$0xf]
  %v23 = vld [vmem:[%s1] sm:$0xff]
  %v24 = vld [vmem:[%s1 + $0x8] sm:$0xff]
  %v25 = vld [vmem:[%s1 + $0x10] sm:$0xff]
  %v26 = vld [vmem:[%s1 + $0x18] sm:$0xff]
  %v27 = vld [vmem:[%s1 + $0x20] sm:$0xff]
  %v28 = vld [vmem:[%s1 + $0x28] sm:$0xff]
  %v29 = vld [vmem:[%s1 + $0x30] sm:$0xff]
  %v30 = vld [vmem:[%s1 + $0x38] sm:$0xff]
  %v31 = vld [vmem:[%s1 + $0x40] sm:$0xff]
  %v32 = vld [vmem:[%s1 + $0x48] sm:$0xff]
  %v33 = vld [vmem:[%s1 + $0x50] sm:$0xff]
  %v34 = vld [vmem:[%s1 + $0x58] sm:$0xff]
  %v35 = vld [vmem:[%s1 + $0x60] sm:$0xff]
  %v36 = vld [vmem:[%s1 + $0x68] sm:$0xff]
  %v37 = vld [vmem:[%s1 + $0x70] sm:$0xff]
  %v38 = vld [vmem:[%s1 + $0x78] sm:$0xff]
  %v39 = vld [vmem:[%s1 + $0x80] sm:$0xff]
  %v40 = vld [vmem:[%s1 + $0x88] sm:$0xff]
  %v41 = vld [vmem:[%s1 + $0x90] sm:$0xff]
  %v42 = vld [vmem:[%s1 + $0x98] sm:$0xff]
  %v43 = vld [vmem:[%s1 + $0xa0] sm:$0xff]
  %v44 = vld [vmem:[%s1 + $0xa8] sm:$0xff]
  %v45 = vld [vmem:[%s1 + $0xb0] sm:$0xff]
  %v46 = vld [vmem:[%s1 + $0xb8] sm:$0xff]
  %v47 = vld [vmem:[%s1 + $0xc0] sm:$0xff]
  %v48 = vld [vmem:[%s1 + $0xc8] sm:$0xff]
  %v49 = vld [vmem:[%s1 + $0xd0] sm:$0xff]
  %v50 = vld [vmem:[%s1 + $0xd8] sm:$0xff]
  %v51 = vld [vmem:[%s1 + $0xe0] sm:$0xff]
  %v52 = vld [vmem:[%s1 + $0xe8] sm:$0xff]
  %v53 = vld [vmem:[%s1 + $0xf0] sm:$0xff]
  %v54 = vld [vmem:[%s1 + $0xf8] sm:$0xff]
  %v55 = vld [vmem:[%s1 + $0x100] sm:$0xff]
  %v56 = vld [vmem:[%s1 + $0x108] sm:$0xff]
  %v57 = vld [vmem:[%s1 + $0x110] sm:$0xff]
  %v58 = vld [vmem:[%s1 + $0x118] sm:$0xff]
  %v59 = vld [vmem:[%s1 + $0x120] sm:$0xff]
  %v60 = vld [vmem:[%s1 + $0x128] sm:$0xff]
  %v61 = vld [vmem:[%s1 + $0x130] sm:$0xff]
  %v62 = vld [vmem:[%s1 + $0x138] sm:$0xff]
  %v63 = vld [vmem:[%s1 + $0x140] sm:$0xff]
  %v64 = vld [vmem:[%s1 + $0x148] sm:$0xff]
  %v65 = vld [vmem:[%s1 + $0x150] sm:$0xff]
  %v66 = vld [vmem:[%s1 + $0x158] sm:$0xff]
  %v67 = vld [vmem:[%s1 + $0x160] sm:$0xff]
  %v68 = vld [vmem:[%s1 + $0x168] sm:$0xff]
  %v69 = vld [vmem:[%s1 + $0x170] sm:$0xff]
  %v70 = vld [vmem:[%s1 + $0x178] sm:$0xff]
  %v71 = vld [vmem:[%s1 + $0x180] sm:$0xff]
  %v72 = vld [vmem:[%s1 + $0x188] sm:$0xff]
  %v73 = vld [vmem:[%s1 + $0x190] sm:$0xff]
  %v74 = vld [vmem:[%s1 + $0x198] sm:$0xff]
  %v75 = vld [vmem:[%s1 + $0x1a0] sm:$0xff]
  %v76 = vld [vmem:[%s1 + $0x1a8] sm:$0xff]
  %v77 = vld [vmem:[%s1 + $0x1b0] sm:$0xff]
  %v78 = vld [vmem:[%s1 + $0x1b8] sm:$0xff]
  %v79 = vld [vmem:[%s1 + $0x1c0] sm:$0xff]
  %v80 = vld [vmem:[%s1 + $0x1c8] sm:$0xff]
  %v81 = vld [vmem:[%s1 + $0x1d0] sm:$0xff]
  %v82 = vld [vmem:[%s1 + $0x1d8] sm:$0xff]
  %v83 = vld [vmem:[%s1 + $0x1e0] sm:$0xff]
  %v84 = vld [vmem:[%s1 + $0x1e8] sm:$0xff]
  %v85 = vld [vmem:[%s1 + $0x1f0] sm:$0xff]
  %v86 = vld [vmem:[%s1 + $0x1f8] sm:$0xff]
  %v87 = vld [vmem:[%s1 + $0x200] sm:$0xff]
  %v88 = vld [vmem:[%s1 + $0x208] sm:$0xff]
  %v89 = vld [vmem:[%s1 + $0x210] sm:$0xff]
  %v90 = vld [vmem:[%s1 + $0x218] sm:$0xff]
  %v91 = vld [vmem:[%s1 + $0x220] sm:$0xff]
  %v92 = vld [vmem:[%s1 + $0x228] sm:$0xff]
  %v93 = vld [vmem:[%s1 + $0x230] sm:$0xff]
  %v94 = vld [vmem:[%s1 + $0x238] sm:$0xff]
  %v95 = vld [vmem:[%s1 + $0x240] sm:$0xff]
  %v96 = vld [vmem:[%s1 + $0x248] sm:$0xff]
  %v97 = vld [vmem:[%s1 + $0x250] sm:$0xff]
  %v98 = vld [vmem:[%s1 + $0x258] sm:$0xff]
  %v99 = vld [vmem:[%s1 + $0x260] sm:$0xff]
  %v100 = vld [vmem:[%s1 + $0x268] sm:$0xff]
  %v101 = vld [vmem:[%s1 + $0x270] sm:$0xff]
  %v102 = vld [vmem:[%s1 + $0x278] sm:$0xff]
  %v103 = vld [vmem:[%s1 + $0x280] sm:$0xff]
  %v104 = vld [vmem:[%s1 + $0x288] sm:$0xff]
  %v105 = vld [vmem:[%s1 + $0x290] sm:$0xff]
  %v106 = vld [vmem:[%s1 + $0x298] sm:$0xff]
  %v107 = vld [vmem:[%s1 + $0x2a0] sm:$0xff]
  %v108 = vld [vmem:[%s1 + $0x2a8] sm:$0xff]
  %v109 = vld [vmem:[%s1 + $0x2b0] sm:$0xff]
  %v110 = vld [vmem:[%s1 + $0x2b8] sm:$0xff]
  %v111 = vld [vmem:[%s1 + $0x2c0] sm:$0xff]
  %v112 = vld [vmem:[%s1 + $0x2c8] sm:$0xff]
  %v113 = vld [vmem:[%s1 + $0x2d0] sm:$0xff]
  %v114 = vld [vmem:[%s1 + $0x2d8] sm:$0xff]
  %v115 = vld [vmem:[%s1 + $0x2e0] sm:$0xff]
  %v116 = vld [vmem:[%s1 + $0x2e8] sm:$0xff]
  %v117 = vld [vmem:[%s1 + $0x2f0] sm:$0xff]
  %v118 = vld [vmem:[%s1 + $0x2f8] sm:$0xff]
  %v119 = vld [vmem:[%s1 + $0x300] sm:$0xff]
  %v120 = vld [vmem:[%s1 + $0x308] sm:$0xff]
  %v121 = vld [vmem:[%s1 + $0x310] sm:$0xff]
  %v122 = vld [vmem:[%s1 + $0x318] sm:$0xff]
  %v123 = vld [vmem:[%s1 + $0x320] sm:$0xff]
  %v124 = vld [vmem:[%s1 + $0x328] sm:$0xff]
  %v125 = vld [vmem:[%s1 + $0x330] sm:$0xff]
  %v126 = vld [vmem:[%s1 + $0x338] sm:$0xff]
  %v127 = vld [vmem:[%s1 + $0x340] sm:$0xff]
  %v128 = vld [vmem:[%s1 + $0x348] sm:$0xff]
  %v129 = vld [vmem:[%s1 + $0x350] sm:$0xff]
  %v130 = vld [vmem:[%s1 + $0x358] sm:$0xff]
  %v131 = vld [vmem:[%s1 + $0x360] sm:$0xff]
  %v132 = vld [vmem:[%s1 + $0x368] sm:$0xff]
  %v133 = vld [vmem:[%s1 + $0x370] sm:$0xff]
  %v134 = vld [vmem:[%s1 + $0x378] sm:$0xff]
  %v135 = vld [vmem:[%s1 + $0x380] sm:$0xff]
  %v136 = vld [vmem:[%s1 + $0x388] sm:$0xff]
  %v137 = vld [vmem:[%s1 + $0x390] sm:$0xff]
  %v138 = vld [vmem:[%s1 + $0x398] sm:$0xff]
  %v139 = vld [vmem:[%s1 + $0x3a0] sm:$0xff]
  %v140 = vld [vmem:[%s1 + $0x3a8] sm:$0xff]
  %v141 = vld [vmem:[%s1 + $0x3b0] sm:$0xff]
  %v142 = vld [vmem:[%s1 + $0x3b8] sm:$0xff]
  %v143 = vld [vmem:[%s1 + $0x3c0] sm:$0xff]
  %v144 = vld [vmem:[%s1 + $0x3c8] sm:$0xff]
  %v145 = vld [vmem:[%s1 + $0x3d0] sm:$0xff]
  %v146 = vld [vmem:[%s1 + $0x3d8] sm:$0xff]
  %v147 = vld [vmem:[%s1 + $0x3e0] sm:$0xff]
  %v148 = vld [vmem:[%s1 + $0x3e8] sm:$0xff]
  %v149 = vld [vmem:[%s1 + $0x3f0] sm:$0xff]
  %v150 = vld [vmem:[%s1 + $0x3f8] sm:$0xff]
  %v151 = vld [vmem:[%s1 + $0x400] sm:$0xff]
  %v152 = vld [vmem:[%s1 + $0x408] sm:$0xff]
  %v153 = vld [vmem:[%s1 + $0x410] sm:$0xff]
  %v154 = vld [vmem:[%s1 + $0x418] sm:$0xff]
  %v155 = vld [vmem:[%s1 + $0x420] sm:$0xff]
  %v156 = vld [vmem:[%s1 + $0x428] sm:$0xff]
  %v157 = vld [vmem:[%s1 + $0x430] sm:$0xff]
  %v158 = vld [vmem:[%s1 + $0x438] sm:$0xff]
  %v159 = vld [vmem:[%s1 + $0x440] sm:$0xff]
  %v160 = vld [vmem:[%s1 + $0x448] sm:$0xff]
  %v161 = vld [vmem:[%s1 + $0x450] sm:$0xff]
  %v162 = vld [vmem:[%s1 + $0x458] sm:$0xff]
  %v163 = vld [vmem:[%s1 + $0x460] sm:$0xff]
  %v164 = vld [vmem:[%s1 + $0x468] sm:$0xff]
  %v165 = vld [vmem:[%s1 + $0x470] sm:$0xff]
  %v166 = vld [vmem:[%s1 + $0x478] sm:$0xff]
  %v167 = vld [vmem:[%s1 + $0x480] sm:$0xff]
  %v168 = vld [vmem:[%s1 + $0x488] sm:$0xff]
  %v169 = vld [vmem:[%s1 + $0x490] sm:$0xff]
  %v170 = vld [vmem:[%s1 + $0x498] sm:$0xff]
  %v171 = vld [vmem:[%s1 + $0x4a0] sm:$0xff]
  %v172 = vld [vmem:[%s1 + $0x4a8] sm:$0xff]
  %v173 = vld [vmem:[%s1 + $0x4b0] sm:$0xff]
  %v174 = vld [vmem:[%s1 + $0x4b8] sm:$0xff]
  %v175 = vld [vmem:[%s1 + $0x4c0] sm:$0xff]
  %v176 = vld [vmem:[%s1 + $0x4c8] sm:$0xff]
  %v177 = vld [vmem:[%s1 + $0x4d0] sm:$0xff]
  %v178 = vld [vmem:[%s1 + $0x4d8] sm:$0xff]
  %v179 = vld [vmem:[%s1 + $0x4e0] sm:$0xff]
  %v180 = vld [vmem:[%s1 + $0x4e8] sm:$0xff]
  %v181 = vld [vmem:[%s1 + $0x4f0] sm:$0xff]
  %v182 = vld [vmem:[%s1 + $0x4f8] sm:$0xff]
  %v183 = vld [vmem:[%s1 + $0x500] sm:$0xff]
  %v184 = vld [vmem:[%s1 + $0x508] sm:$0xff]
  %v185 = vld [vmem:[%s1 + $0x510] sm:$0xff]
  %v186 = vld [vmem:[%s1 + $0x518] sm:$0xff]
  %v187 = vld [vmem:[%s1 + $0x520] sm:$0xff]
  %v188 = vld [vmem:[%s1 + $0x528] sm:$0xff]
  %v189 = vld [vmem:[%s1 + $0x530] sm:$0xff]
  %v190 = vld [vmem:[%s1 + $0x538] sm:$0xff]
  %v191 = vld [vmem:[%s1 + $0x540] sm:$0xff]
  %v192 = vld [vmem:[%s1 + $0x548] sm:$0xff]
  %v193 = vld [vmem:[%s1 + $0x550] sm:$0xff]
  %v194 = vld [vmem:[%s1 + $0x558] sm:$0xff]
  %v195 = vld [vmem:[%s1 + $0x560] sm:$0xff]
  %v196 = vld [vmem:[%s1 + $0x568] sm:$0xff]
  %v197 = vld [vmem:[%s1 + $0x570] sm:$0xff]
  %v198 = vld [vmem:[%s1 + $0x578] sm:$0xff]
  %v199 = vld [vmem:[%s1 + $0x580] sm:$0xff]
  %v200 = vld [vmem:[%s1 + $0x588] sm:$0xff]
  %v201 = vld [vmem:[%s1 + $0x590] sm:$0xff]
  %v202 = vld [vmem:[%s1 + $0x598] sm:$0xff]
  %v203 = vld [vmem:[%s1 + $0x5a0] sm:$0xff]
  %v204 = vld [vmem:[%s1 + $0x5a8] sm:$0xff]
  %v205 = vld [vmem:[%s1 + $0x5b0] sm:$0xff]
  %v206 = vld [vmem:[%s1 + $0x5b8] sm:$0xff]
  %v207 = vld [vmem:[%s1 + $0x5c0] sm:$0xff]
  %v208 = vld [vmem:[%s1 + $0x5c8] sm:$0xff]
  %v209 = vld [vmem:[%s1 + $0x5d0] sm:$0xff]
  %v210 = vld [vmem:[%s1 + $0x5d8] sm:$0xff]
  %v211 = vld [vmem:[%s1 + $0x5e0] sm:$0xff]
  %v212 = vld [vmem:[%s1 + $0x5e8] sm:$0xff]
  %v213 = vld [vmem:[%s1 + $0x5f0] sm:$0xff]
  %v214 = vld [vmem:[%s1 + $0x5f8] sm:$0xff]
  %v215 = vld [vmem:[%s1 + $0x600] sm:$0xff]
  %v216 = vld [vmem:[%s1 + $0x608] sm:$0xff]
  %v217 = vld [vmem:[%s1 + $0x610] sm:$0xff]
  %v218 = vld [vmem:[%s1 + $0x618] sm:$0xff]
  %v219 = vld [vmem:[%s1 + $0x620] sm:$0xff]
  %v220 = vld [vmem:[%s1 + $0x628] sm:$0xff]
  %v221 = vld [vmem:[%s1 + $0x630] sm:$0xff]
  %v222 = vld [vmem:[%s1 + $0x638] sm:$0xff]
  %v223 = vld [vmem:[%s1 + $0x640] sm:$0xff]
  %v224 = vld [vmem:[%s1 + $0x648] sm:$0xff]
  %v225 = vld [vmem:[%s1 + $0x650] sm:$0xff]
  %v226 = vld [vmem:[%s1 + $0x658] sm:$0xff]
  %v227 = vld [vmem:[%s1 + $0x660] sm:$0xff]
  %v228 = vld [vmem:[%s1 + $0x668] sm:$0xff]
  %v229 = vld [vmem:[%s1 + $0x670] sm:$0xff]
  %v230 = vld [vmem:[%s1 + $0x678] sm:$0xff]
  %v231 = vld [vmem:[%s1 + $0x680] sm:$0xff]
  %v232 = vld [vmem:[%s1 + $0x688] sm:$0xff]
  %v233 = vld [vmem:[%s1 + $0x690] sm:$0xff]
  %v234 = vld [vmem:[%s1 + $0x698] sm:$0xff]
  %v235 = vld [vmem:[%s1 + $0x6a0] sm:$0xff]
  %v236 = vld [vmem:[%s1 + $0x6a8] sm:$0xff]
  %v237 = vld [vmem:[%s1 + $0x6b0] sm:$0xff]
  %v238 = vld [vmem:[%s1 + $0x6b8] sm:$0xff]
  %v239 = vld [vmem:[%s1 + $0x6c0] sm:$0xff]
  %v240 = vld [vmem:[%s1 + $0x6c8] sm:$0xff]
  %v241 = vld [vmem:[%s1 + $0x6d0] sm:$0xff]
  %v242 = vld [vmem:[%s1 + $0x6d8] sm:$0xff]
  %v243 = vld [vmem:[%s1 + $0x6e0] sm:$0xff]
  %v244 = vld [vmem:[%s1 + $0x6e8] sm:$0xff]
  %v245 = vld [vmem:[%s1 + $0x6f0] sm:$0xff]
  %v246 = vld [vmem:[%s1 + $0x6f8] sm:$0xff]
  %v247 = vld [vmem:[%s1 + $0x700] sm:$0xff]
  %v248 = vld [vmem:[%s1 + $0x708] sm:$0xff]
  %v249 = vld [vmem:[%s1 + $0x710] sm:$0xff]
  %v250 = vld [vmem:[%s1 + $0x718] sm:$0xff]
  %v251 = vld [vmem:[%s1 + $0x720] sm:$0xff]
  %v252 = vld [vmem:[%s1 + $0x728] sm:$0xff]
  %v253 = vld [vmem:[%s1 + $0x730] sm:$0xff]
  %v254 = vld [vmem:[%s1 + $0x738] sm:$0xff]
  %v255 = vld [vmem:[%s1 + $0x740] sm:$0xff]
  %v256 = vld [vmem:[%s1 + $0x748] sm:$0xff]
  %v257 = vld [vmem:[%s1 + $0x750] sm:$0xff]
  %v258 = vld [vmem:[%s1 + $0x758] sm:$0xff]
  %v259 = vld [vmem:[%s1 + $0x760] sm:$0xff]
  %v260 = vld [vmem:[%s1 + $0x768] sm:$0xff]
  %v261 = vld [vmem:[%s1 + $0x770] sm:$0xff]
  %v262 = vld [vmem:[%s1 + $0x778] sm:$0xff]
  %v263 = vld [vmem:[%s1 + $0x780] sm:$0xff]
  %v264 = vld [vmem:[%s1 + $0x788] sm:$0xff]
  %v265 = vld [vmem:[%s1 + $0x790] sm:$0xff]
  %v266 = vld [vmem:[%s1 + $0x798] sm:$0xff]
  %v267 = vld [vmem:[%s1 + $0x7a0] sm:$0xff]
  %v268 = vld [vmem:[%s1 + $0x7a8] sm:$0xff]
  %v269 = vld [vmem:[%s1 + $0x7b0] sm:$0xff]
  %v270 = vld [vmem:[%s1 + $0x7b8] sm:$0xff]
  %v271 = vld [vmem:[%s1 + $0x7c0] sm:$0xff]
  %v272 = vld [vmem:[%s1 + $0x7c8] sm:$0xff]
  %v273 = vld [vmem:[%s1 + $0x7d0] sm:$0xff]
  %v274 = vld [vmem:[%s1 + $0x7d8] sm:$0xff]
  %v275 = vld [vmem:[%s1 + $0x7e0] sm:$0xff]
  %v276 = vld [vmem:[%s1 + $0x7e8] sm:$0xff]
  %v277 = vld [vmem:[%s1 + $0x7f0] sm:$0xff]
  %v278 = vld [vmem:[%s1 + $0x7f8] sm:$0xff]
  %v279 = vld [vmem:[%s1 + $0x800] sm:$0xff]
  %v280 = vld [vmem:[%s1 + $0x808] sm:$0xff]
  %v281 = vld [vmem:[%s1 + $0x810] sm:$0xff]
  %v282 = vld [vmem:[%s1 + $0x818] sm:$0xff]
  %v283 = vld [vmem:[%s1 + $0x820] sm:$0xff]
  %v284 = vld [vmem:[%s1 + $0x828] sm:$0xff]
  %v285 = vld [vmem:[%s1 + $0x830] sm:$0xff]
  %v286 = vld [vmem:[%s1 + $0x838] sm:$0xff]
  %v287 = vld [vmem:[%s1 + $0x840] sm:$0xff]
  %v288 = vld [vmem:[%s1 + $0x848] sm:$0xff]
  %v289 = vld [vmem:[%s1 + $0x850] sm:$0xff]
  %v290 = vld [vmem:[%s1 + $0x858] sm:$0xff]
  %v291 = vld [vmem:[%s1 + $0x860] sm:$0xff]
  %v292 = vld [vmem:[%s1 + $0x868] sm:$0xff]
  %v293 = vld [vmem:[%s1 + $0x870] sm:$0xff]
  %v294 = vld [vmem:[%s1 + $0x878] sm:$0xff]
  %v295 = vld [vmem:[%s1 + $0x880] sm:$0xff]
  %v296 = vld [vmem:[%s1 + $0x888] sm:$0xff]
  %v297 = vld [vmem:[%s1 + $0x890] sm:$0xff]
  %v298 = vld [vmem:[%s1 + $0x898] sm:$0xff]
  %v299 = vld [vmem:[%s1 + $0x8a0] sm:$0xff]
  %v300 = vld [vmem:[%s1 + $0x8a8] sm:$0xff]
  %v301 = vld [vmem:[%s1 + $0x8b0] sm:$0xff]
  %v302 = vld [vmem:[%s1 + $0x8b8] sm:$0xff]
  %v303 = vld [vmem:[%s1 + $0x8c0] sm:$0xff]
  %v304 = vld [vmem:[%s1 + $0x8c8] sm:$0xff]
  %v305 = vld [vmem:[%s1 + $0x8d0] sm:$0xff]
  %v306 = vld [vmem:[%s1 + $0x8d8] sm:$0xff]
  %v307 = vld [vmem:[%s1 + $0x8e0] sm:$0xff]
  %v308 = vld [vmem:[%s1 + $0x8e8] sm:$0xff]
  %v309 = vld [vmem:[%s1 + $0x8f0] sm:$0xff]
  %v310 = vld [vmem:[%s1 + $0x8f8] sm:$0xff]
  %v316 = vunpack.c.l.b16 %v18
  %v317 = vunpack.c.h.b16 %v18
  %v318 = vunpack.c.l.b16 %v19
  %v319 = vunpack.c.h.b16 %v19
  %v320 = vunpack.c.l.b16 %v20
  %v321 = vunpack.c.h.b16 %v20
  %v322 = vunpack.c.l.b16 %v21
  %v323 = vunpack.c.h.b16 %v21
  %v324 = vunpack.c.l.b16 %v22
  %v325 = vpack.c.b16 %v316, %v316
  %v326 = vpack.c.b16 %v317, %v317
  %v327 = vpack.c.b16 %v318, %v318
  %v328 = vpack.c.b16 %v319, %v319
  %v329 = vpack.c.b16 %v320, %v320
  %v330 = vpack.c.b16 %v321, %v321
  %v331 = vpack.c.b16 %v322, %v322
  %v332 = vpack.c.b16 %v323, %v323
  %v333 = vpack.c.b16 %v324, %v324
  %v631 = vunpack.c.l.b16 %v23
  %v632 = vunpack.c.h.b16 %v23
  %v633 = vunpack.c.l.b16 %v24
  %v634 = vunpack.c.h.b16 %v24
  %v635 = vunpack.c.l.b16 %v25
  %v636 = vunpack.c.h.b16 %v25
  %v637 = vunpack.c.l.b16 %v26
  %v638 = vunpack.c.h.b16 %v26
  %v639 = vunpack.c.l.b16 %v27
  %v640 = vunpack.c.h.b16 %v27
  %v641 = vunpack.c.l.b16 %v28
  %v642 = vunpack.c.h.b16 %v28
  %v643 = vunpack.c.l.b16 %v29
  %v644 = vunpack.c.h.b16 %v29
  %v645 = vunpack.c.l.b16 %v30
  %v646 = vunpack.c.h.b16 %v30
  %v647 = vunpack.c.l.b16 %v31
  %v648 = vunpack.c.h.b16 %v31
  %v649 = vunpack.c.l.b16 %v32
  %v650 = vunpack.c.h.b16 %v32
  %v651 = vunpack.c.l.b16 %v33
  %v652 = vunpack.c.h.b16 %v33
  %v653 = vunpack.c.l.b16 %v34
  %v654 = vunpack.c.h.b16 %v34
  %v655 = vunpack.c.l.b16 %v35
  %v656 = vunpack.c.h.b16 %v35
  %v657 = vunpack.c.l.b16 %v36
  %v658 = vunpack.c.h.b16 %v36
  %v659 = vunpack.c.l.b16 %v37
  %v660 = vunpack.c.h.b16 %v37
  %v661 = vunpack.c.l.b16 %v38
  %v662 = vunpack.c.h.b16 %v38
  %v663 = vunpack.c.l.b16 %v39
  %v664 = vunpack.c.h.b16 %v39
  %v665 = vunpack.c.l.b16 %v40
  %v666 = vunpack.c.h.b16 %v40
  %v667 = vunpack.c.l.b16 %v41
  %v668 = vunpack.c.h.b16 %v41
  %v669 = vunpack.c.l.b16 %v42
  %v670 = vunpack.c.h.b16 %v42
  %v671 = vunpack.c.l.b16 %v43
  %v672 = vunpack.c.h.b16 %v43
  %v673 = vunpack.c.l.b16 %v44
  %v674 = vunpack.c.h.b16 %v44
  %v675 = vunpack.c.l.b16 %v45
  %v676 = vunpack.c.h.b16 %v45
  %v677 = vunpack.c.l.b16 %v46
  %v678 = vunpack.c.h.b16 %v46
  %v679 = vunpack.c.l.b16 %v47
  %v680 = vunpack.c.h.b16 %v47
  %v681 = vunpack.c.l.b16 %v48
  %v682 = vunpack.c.h.b16 %v48
  %v683 = vunpack.c.l.b16 %v49
  %v684 = vunpack.c.h.b16 %v49
  %v685 = vunpack.c.l.b16 %v50
  %v686 = vunpack.c.h.b16 %v50
  %v687 = vunpack.c.l.b16 %v51
  %v688 = vunpack.c.h.b16 %v51
  %v689 = vunpack.c.l.b16 %v52
  %v690 = vunpack.c.h.b16 %v52
  %v691 = vunpack.c.l.b16 %v53
  %v692 = vunpack.c.h.b16 %v53
  %v693 = vunpack.c.l.b16 %v54
  %v694 = vunpack.c.h.b16 %v54
  %v695 = vunpack.c.l.b16 %v55
  %v696 = vunpack.c.h.b16 %v55
  %v697 = vunpack.c.l.b16 %v56
  %v698 = vunpack.c.h.b16 %v56
  %v699 = vunpack.c.l.b16 %v57
  %v700 = vunpack.c.h.b16 %v57
  %v701 = vunpack.c.l.b16 %v58
  %v702 = vunpack.c.h.b16 %v58
  %v703 = vunpack.c.l.b16 %v59
  %v704 = vunpack.c.h.b16 %v59
  %v705 = vunpack.c.l.b16 %v60
  %v706 = vunpack.c.h.b16 %v60
  %v707 = vunpack.c.l.b16 %v61
  %v708 = vunpack.c.h.b16 %v61
  %v709 = vunpack.c.l.b16 %v62
  %v710 = vunpack.c.h.b16 %v62
  %v711 = vunpack.c.l.b16 %v63
  %v712 = vunpack.c.h.b16 %v63
  %v713 = vunpack.c.l.b16 %v64
  %v714 = vunpack.c.h.b16 %v64
  %v715 = vunpack.c.l.b16 %v65
  %v716 = vunpack.c.h.b16 %v65
  %v717 = vunpack.c.l.b16 %v66
  %v718 = vunpack.c.h.b16 %v66
  %v719 = vunpack.c.l.b16 %v67
  %v720 = vunpack.c.h.b16 %v67
  %v721 = vunpack.c.l.b16 %v68
  %v722 = vunpack.c.h.b16 %v68
  %v723 = vunpack.c.l.b16 %v69
  %v724 = vunpack.c.h.b16 %v69
  %v725 = vunpack.c.l.b16 %v70
  %v726 = vunpack.c.h.b16 %v70
  %v727 = vunpack.c.l.b16 %v71
  %v728 = vunpack.c.h.b16 %v71
  %v729 = vunpack.c.l.b16 %v72
  %v730 = vunpack.c.h.b16 %v72
  %v731 = vunpack.c.l.b16 %v73
  %v732 = vunpack.c.h.b16 %v73
  %v733 = vunpack.c.l.b16 %v74
  %v734 = vunpack.c.h.b16 %v74
  %v735 = vunpack.c.l.b16 %v75
  %v736 = vunpack.c.h.b16 %v75
  %v737 = vunpack.c.l.b16 %v76
  %v738 = vunpack.c.h.b16 %v76
  %v739 = vunpack.c.l.b16 %v77
  %v740 = vunpack.c.h.b16 %v77
  %v741 = vunpack.c.l.b16 %v78
  %v742 = vunpack.c.h.b16 %v78
  %v743 = vunpack.c.l.b16 %v79
  %v744 = vunpack.c.h.b16 %v79
  %v745 = vunpack.c.l.b16 %v80
  %v746 = vunpack.c.h.b16 %v80
  %v747 = vunpack.c.l.b16 %v81
  %v748 = vunpack.c.h.b16 %v81
  %v749 = vunpack.c.l.b16 %v82
  %v750 = vunpack.c.h.b16 %v82
  %v751 = vunpack.c.l.b16 %v83
  %v752 = vunpack.c.h.b16 %v83
  %v753 = vunpack.c.l.b16 %v84
  %v754 = vunpack.c.h.b16 %v84
  %v755 = vunpack.c.l.b16 %v85
  %v756 = vunpack.c.h.b16 %v85
  %v757 = vunpack.c.l.b16 %v86
  %v758 = vunpack.c.h.b16 %v86
  %v759 = vunpack.c.l.b16 %v87
  %v760 = vunpack.c.h.b16 %v87
  %v761 = vunpack.c.l.b16 %v88
  %v762 = vunpack.c.h.b16 %v88
  %v763 = vunpack.c.l.b16 %v89
  %v764 = vunpack.c.h.b16 %v89
  %v765 = vunpack.c.l.b16 %v90
  %v766 = vunpack.c.h.b16 %v90
  %v767 = vunpack.c.l.b16 %v91
  %v768 = vunpack.c.h.b16 %v91
  %v769 = vunpack.c.l.b16 %v92
  %v770 = vunpack.c.h.b16 %v92
  %v771 = vunpack.c.l.b16 %v93
  %v772 = vunpack.c.h.b16 %v93
  %v773 = vunpack.c.l.b16 %v94
  %v774 = vunpack.c.h.b16 %v94
  %v775 = vunpack.c.l.b16 %v95
  %v776 = vunpack.c.h.b16 %v95
  %v777 = vunpack.c.l.b16 %v96
  %v778 = vunpack.c.h.b16 %v96
  %v779 = vunpack.c.l.b16 %v97
  %v780 = vunpack.c.h.b16 %v97
  %v781 = vunpack.c.l.b16 %v98
  %v782 = vunpack.c.h.b16 %v98
  %v783 = vunpack.c.l.b16 %v99
  %v784 = vunpack.c.h.b16 %v99
  %v785 = vunpack.c.l.b16 %v100
  %v786 = vunpack.c.h.b16 %v100
  %v787 = vunpack.c.l.b16 %v101
  %v788 = vunpack.c.h.b16 %v101
  %v789 = vunpack.c.l.b16 %v102
  %v790 = vunpack.c.h.b16 %v102
  %v791 = vunpack.c.l.b16 %v103
  %v792 = vunpack.c.h.b16 %v103
  %v793 = vunpack.c.l.b16 %v104
  %v794 = vunpack.c.h.b16 %v104
  %v795 = vunpack.c.l.b16 %v105
  %v796 = vunpack.c.h.b16 %v105
  %v797 = vunpack.c.l.b16 %v106
  %v798 = vunpack.c.h.b16 %v106
  %v799 = vunpack.c.l.b16 %v107
  %v800 = vunpack.c.h.b16 %v107
  %v801 = vunpack.c.l.b16 %v108
  %v802 = vunpack.c.h.b16 %v108
  %v803 = vunpack.c.l.b16 %v109
  %v804 = vunpack.c.h.b16 %v109
  %v805 = vunpack.c.l.b16 %v110
  %v806 = vunpack.c.h.b16 %v110
  %v807 = vunpack.c.l.b16 %v111
  %v808 = vunpack.c.h.b16 %v111
  %v809 = vunpack.c.l.b16 %v112
  %v810 = vunpack.c.h.b16 %v112
  %v811 = vunpack.c.l.b16 %v113
  %v812 = vunpack.c.h.b16 %v113
  %v813 = vunpack.c.l.b16 %v114
  %v814 = vunpack.c.h.b16 %v114
  %v815 = vunpack.c.l.b16 %v115
  %v816 = vunpack.c.h.b16 %v115
  %v817 = vunpack.c.l.b16 %v116
  %v818 = vunpack.c.h.b16 %v116
  %v819 = vunpack.c.l.b16 %v117
  %v820 = vunpack.c.h.b16 %v117
  %v821 = vunpack.c.l.b16 %v118
  %v822 = vunpack.c.h.b16 %v118
  %v823 = vunpack.c.l.b16 %v119
  %v824 = vunpack.c.h.b16 %v119
  %v825 = vunpack.c.l.b16 %v120
  %v826 = vunpack.c.h.b16 %v120
  %v827 = vunpack.c.l.b16 %v121
  %v828 = vunpack.c.h.b16 %v121
  %v829 = vunpack.c.l.b16 %v122
  %v830 = vunpack.c.h.b16 %v122
  %v831 = vunpack.c.l.b16 %v123
  %v832 = vunpack.c.h.b16 %v123
  %v833 = vunpack.c.l.b16 %v124
  %v834 = vunpack.c.h.b16 %v124
  %v835 = vunpack.c.l.b16 %v125
  %v836 = vunpack.c.h.b16 %v125
  %v837 = vunpack.c.l.b16 %v126
  %v838 = vunpack.c.h.b16 %v126
  %v839 = vunpack.c.l.b16 %v127
  %v840 = vunpack.c.h.b16 %v127
  %v841 = vunpack.c.l.b16 %v128
  %v842 = vunpack.c.h.b16 %v128
  %v843 = vunpack.c.l.b16 %v129
  %v844 = vunpack.c.h.b16 %v129
  %v845 = vunpack.c.l.b16 %v130
  %v846 = vunpack.c.h.b16 %v130
  %v847 = vunpack.c.l.b16 %v131
  %v848 = vunpack.c.h.b16 %v131
  %v849 = vunpack.c.l.b16 %v132
  %v850 = vunpack.c.h.b16 %v132
  %v851 = vunpack.c.l.b16 %v133
  %v852 = vunpack.c.h.b16 %v133
  %v853 = vunpack.c.l.b16 %v134
  %v854 = vunpack.c.h.b16 %v134
  %v855 = vunpack.c.l.b16 %v135
  %v856 = vunpack.c.h.b16 %v135
  %v857 = vunpack.c.l.b16 %v136
  %v858 = vunpack.c.h.b16 %v136
  %v859 = vunpack.c.l.b16 %v137
  %v860 = vunpack.c.h.b16 %v137
  %v861 = vunpack.c.l.b16 %v138
  %v862 = vunpack.c.h.b16 %v138
  %v863 = vunpack.c.l.b16 %v139
  %v864 = vunpack.c.h.b16 %v139
  %v865 = vunpack.c.l.b16 %v140
  %v866 = vunpack.c.h.b16 %v140
  %v867 = vunpack.c.l.b16 %v141
  %v868 = vunpack.c.h.b16 %v141
  %v869 = vunpack.c.l.b16 %v142
  %v870 = vunpack.c.h.b16 %v142
  %v871 = vunpack.c.l.b16 %v143
  %v872 = vunpack.c.h.b16 %v143
  %v873 = vunpack.c.l.b16 %v144
  %v874 = vunpack.c.h.b16 %v144
  %v875 = vunpack.c.l.b16 %v145
  %v876 = vunpack.c.h.b16 %v145
  %v877 = vunpack.c.l.b16 %v146
  %v878 = vunpack.c.h.b16 %v146
  %v879 = vunpack.c.l.b16 %v147
  %v880 = vunpack.c.h.b16 %v147
  %v881 = vunpack.c.l.b16 %v148
  %v882 = vunpack.c.h.b16 %v148
  %v883 = vunpack.c.l.b16 %v149
  %v884 = vunpack.c.h.b16 %v149
  %v885 = vunpack.c.l.b16 %v150
  %v886 = vunpack.c.h.b16 %v150
  %v887 = vunpack.c.l.b16 %v151
  %v888 = vunpack.c.h.b16 %v151
  %v889 = vunpack.c.l.b16 %v152
  %v890 = vunpack.c.h.b16 %v152
  %v891 = vunpack.c.l.b16 %v153
  %v892 = vunpack.c.h.b16 %v153
  %v893 = vunpack.c.l.b16 %v154
  %v894 = vunpack.c.h.b16 %v154
  %v895 = vunpack.c.l.b16 %v155
  %v896 = vunpack.c.h.b16 %v155
  %v897 = vunpack.c.l.b16 %v156
  %v898 = vunpack.c.h.b16 %v156
  %v899 = vunpack.c.l.b16 %v157
  %v900 = vunpack.c.h.b16 %v157
  %v901 = vunpack.c.l.b16 %v158
  %v902 = vunpack.c.h.b16 %v158
  %v903 = vunpack.c.l.b16 %v159
  %v904 = vunpack.c.h.b16 %v159
  %v905 = vunpack.c.l.b16 %v160
  %v906 = vunpack.c.h.b16 %v160
  %v907 = vunpack.c.l.b16 %v161
  %v908 = vunpack.c.h.b16 %v161
  %v909 = vunpack.c.l.b16 %v162
  %v910 = vunpack.c.h.b16 %v162
  %v911 = vunpack.c.l.b16 %v163
  %v912 = vunpack.c.h.b16 %v163
  %v913 = vunpack.c.l.b16 %v164
  %v914 = vunpack.c.h.b16 %v164
  %v915 = vunpack.c.l.b16 %v165
  %v916 = vunpack.c.h.b16 %v165
  %v917 = vunpack.c.l.b16 %v166
  %v918 = vunpack.c.h.b16 %v166
  %v919 = vunpack.c.l.b16 %v167
  %v920 = vunpack.c.h.b16 %v167
  %v921 = vunpack.c.l.b16 %v168
  %v922 = vunpack.c.h.b16 %v168
  %v923 = vunpack.c.l.b16 %v169
  %v924 = vunpack.c.h.b16 %v169
  %v925 = vunpack.c.l.b16 %v170
  %v926 = vunpack.c.h.b16 %v170
  %v927 = vunpack.c.l.b16 %v171
  %v928 = vunpack.c.h.b16 %v171
  %v929 = vunpack.c.l.b16 %v172
  %v930 = vunpack.c.h.b16 %v172
  %v931 = vunpack.c.l.b16 %v173
  %v932 = vunpack.c.h.b16 %v173
  %v933 = vunpack.c.l.b16 %v174
  %v934 = vunpack.c.h.b16 %v174
  %v935 = vunpack.c.l.b16 %v175
  %v936 = vunpack.c.h.b16 %v175
  %v937 = vunpack.c.l.b16 %v176
  %v938 = vunpack.c.h.b16 %v176
  %v939 = vunpack.c.l.b16 %v177
  %v940 = vunpack.c.h.b16 %v177
  %v941 = vunpack.c.l.b16 %v178
  %v942 = vunpack.c.h.b16 %v178
  %v943 = vunpack.c.l.b16 %v179
  %v944 = vunpack.c.h.b16 %v179
  %v945 = vunpack.c.l.b16 %v180
  %v946 = vunpack.c.h.b16 %v180
  %v947 = vunpack.c.l.b16 %v181
  %v948 = vunpack.c.h.b16 %v181
  %v949 = vunpack.c.l.b16 %v182
  %v950 = vunpack.c.h.b16 %v182
  %v951 = vunpack.c.l.b16 %v183
  %v952 = vunpack.c.h.b16 %v183
  %v953 = vunpack.c.l.b16 %v184
  %v954 = vunpack.c.h.b16 %v184
  %v955 = vunpack.c.l.b16 %v185
  %v956 = vunpack.c.h.b16 %v185
  %v957 = vunpack.c.l.b16 %v186
  %v958 = vunpack.c.h.b16 %v186
  %v959 = vunpack.c.l.b16 %v187
  %v960 = vunpack.c.h.b16 %v187
  %v961 = vunpack.c.l.b16 %v188
  %v962 = vunpack.c.h.b16 %v188
  %v963 = vunpack.c.l.b16 %v189
  %v964 = vunpack.c.h.b16 %v189
  %v965 = vunpack.c.l.b16 %v190
  %v966 = vunpack.c.h.b16 %v190
  %v967 = vunpack.c.l.b16 %v191
  %v968 = vunpack.c.h.b16 %v191
  %v969 = vunpack.c.l.b16 %v192
  %v970 = vunpack.c.h.b16 %v192
  %v971 = vunpack.c.l.b16 %v193
  %v972 = vunpack.c.h.b16 %v193
  %v973 = vunpack.c.l.b16 %v194
  %v974 = vunpack.c.h.b16 %v194
  %v975 = vunpack.c.l.b16 %v195
  %v976 = vunpack.c.h.b16 %v195
  %v977 = vunpack.c.l.b16 %v196
  %v978 = vunpack.c.h.b16 %v196
  %v979 = vunpack.c.l.b16 %v197
  %v980 = vunpack.c.h.b16 %v197
  %v981 = vunpack.c.l.b16 %v198
  %v982 = vunpack.c.h.b16 %v198
  %v983 = vunpack.c.l.b16 %v199
  %v984 = vunpack.c.h.b16 %v199
  %v985 = vunpack.c.l.b16 %v200
  %v986 = vunpack.c.h.b16 %v200
  %v987 = vunpack.c.l.b16 %v201
  %v988 = vunpack.c.h.b16 %v201
  %v989 = vunpack.c.l.b16 %v202
  %v990 = vunpack.c.h.b16 %v202
  %v991 = vunpack.c.l.b16 %v203
  %v992 = vunpack.c.h.b16 %v203
  %v993 = vunpack.c.l.b16 %v204
  %v994 = vunpack.c.h.b16 %v204
  %v995 = vunpack.c.l.b16 %v205
  %v996 = vunpack.c.h.b16 %v205
  %v997 = vunpack.c.l.b16 %v206
  %v998 = vunpack.c.h.b16 %v206
  %v999 = vunpack.c.l.b16 %v207
  %v1000 = vunpack.c.h.b16 %v207
  %v1001 = vunpack.c.l.b16 %v208
  %v1002 = vunpack.c.h.b16 %v208
  %v1003 = vunpack.c.l.b16 %v209
  %v1004 = vunpack.c.h.b16 %v209
  %v1005 = vunpack.c.l.b16 %v210
  %v1006 = vunpack.c.h.b16 %v210
  %v1007 = vunpack.c.l.b16 %v211
  %v1008 = vunpack.c.h.b16 %v211
  %v1009 = vunpack.c.l.b16 %v212
  %v1010 = vunpack.c.h.b16 %v212
  %v1011 = vunpack.c.l.b16 %v213
  %v1012 = vunpack.c.h.b16 %v213
  %v1013 = vunpack.c.l.b16 %v214
  %v1014 = vunpack.c.h.b16 %v214
  %v1015 = vunpack.c.l.b16 %v215
  %v1016 = vunpack.c.h.b16 %v215
  %v1017 = vunpack.c.l.b16 %v216
  %v1018 = vunpack.c.h.b16 %v216
  %v1019 = vunpack.c.l.b16 %v217
  %v1020 = vunpack.c.h.b16 %v217
  %v1021 = vunpack.c.l.b16 %v218
  %v1022 = vunpack.c.h.b16 %v218
  %v1023 = vunpack.c.l.b16 %v219
  %v1024 = vunpack.c.h.b16 %v219
  %v1025 = vunpack.c.l.b16 %v220
  %v1026 = vunpack.c.h.b16 %v220
  %v1027 = vunpack.c.l.b16 %v221
  %v1028 = vunpack.c.h.b16 %v221
  %v1029 = vunpack.c.l.b16 %v222
  %v1030 = vunpack.c.h.b16 %v222
  %v1031 = vunpack.c.l.b16 %v223
  %v1032 = vunpack.c.h.b16 %v223
  %v1033 = vunpack.c.l.b16 %v224
  %v1034 = vunpack.c.h.b16 %v224
  %v1035 = vunpack.c.l.b16 %v225
  %v1036 = vunpack.c.h.b16 %v225
  %v1037 = vunpack.c.l.b16 %v226
  %v1038 = vunpack.c.h.b16 %v226
  %v1039 = vunpack.c.l.b16 %v227
  %v1040 = vunpack.c.h.b16 %v227
  %v1041 = vunpack.c.l.b16 %v228
  %v1042 = vunpack.c.h.b16 %v228
  %v1043 = vunpack.c.l.b16 %v229
  %v1044 = vunpack.c.h.b16 %v229
  %v1045 = vunpack.c.l.b16 %v230
  %v1046 = vunpack.c.h.b16 %v230
  %v1047 = vunpack.c.l.b16 %v231
  %v1048 = vunpack.c.h.b16 %v231
  %v1049 = vunpack.c.l.b16 %v232
  %v1050 = vunpack.c.h.b16 %v232
  %v1051 = vunpack.c.l.b16 %v233
  %v1052 = vunpack.c.h.b16 %v233
  %v1053 = vunpack.c.l.b16 %v234
  %v1054 = vunpack.c.h.b16 %v234
  %v1055 = vunpack.c.l.b16 %v235
  %v1056 = vunpack.c.h.b16 %v235
  %v1057 = vunpack.c.l.b16 %v236
  %v1058 = vunpack.c.h.b16 %v236
  %v1059 = vunpack.c.l.b16 %v237
  %v1060 = vunpack.c.h.b16 %v237
  %v1061 = vunpack.c.l.b16 %v238
  %v1062 = vunpack.c.h.b16 %v238
  %v1063 = vunpack.c.l.b16 %v239
  %v1064 = vunpack.c.h.b16 %v239
  %v1065 = vunpack.c.l.b16 %v240
  %v1066 = vunpack.c.h.b16 %v240
  %v1067 = vunpack.c.l.b16 %v241
  %v1068 = vunpack.c.h.b16 %v241
  %v1069 = vunpack.c.l.b16 %v242
  %v1070 = vunpack.c.h.b16 %v242
  %v1071 = vunpack.c.l.b16 %v243
  %v1072 = vunpack.c.h.b16 %v243
  %v1073 = vunpack.c.l.b16 %v244
  %v1074 = vunpack.c.h.b16 %v244
  %v1075 = vunpack.c.l.b16 %v245
  %v1076 = vunpack.c.h.b16 %v245
  %v1077 = vunpack.c.l.b16 %v246
  %v1078 = vunpack.c.h.b16 %v246
  %v1079 = vunpack.c.l.b16 %v247
  %v1080 = vunpack.c.h.b16 %v247
  %v1081 = vunpack.c.l.b16 %v248
  %v1082 = vunpack.c.h.b16 %v248
  %v1083 = vunpack.c.l.b16 %v249
  %v1084 = vunpack.c.h.b16 %v249
  %v1085 = vunpack.c.l.b16 %v250
  %v1086 = vunpack.c.h.b16 %v250
  %v1087 = vunpack.c.l.b16 %v251
  %v1088 = vunpack.c.h.b16 %v251
  %v1089 = vunpack.c.l.b16 %v252
  %v1090 = vunpack.c.h.b16 %v252
  %v1091 = vunpack.c.l.b16 %v253
  %v1092 = vunpack.c.h.b16 %v253
  %v1093 = vunpack.c.l.b16 %v254
  %v1094 = vunpack.c.h.b16 %v254
  %v1095 = vunpack.c.l.b16 %v255
  %v1096 = vunpack.c.h.b16 %v255
  %v1097 = vunpack.c.l.b16 %v256
  %v1098 = vunpack.c.h.b16 %v256
  %v1099 = vunpack.c.l.b16 %v257
  %v1100 = vunpack.c.h.b16 %v257
  %v1101 = vunpack.c.l.b16 %v258
  %v1102 = vunpack.c.h.b16 %v258
  %v1103 = vunpack.c.l.b16 %v259
  %v1104 = vunpack.c.h.b16 %v259
  %v1105 = vunpack.c.l.b16 %v260
  %v1106 = vunpack.c.h.b16 %v260
  %v1107 = vunpack.c.l.b16 %v261
  %v1108 = vunpack.c.h.b16 %v261
  %v1109 = vunpack.c.l.b16 %v262
  %v1110 = vunpack.c.h.b16 %v262
  %v1111 = vunpack.c.l.b16 %v263
  %v1112 = vunpack.c.h.b16 %v263
  %v1113 = vunpack.c.l.b16 %v264
  %v1114 = vunpack.c.h.b16 %v264
  %v1115 = vunpack.c.l.b16 %v265
  %v1116 = vunpack.c.h.b16 %v265
  %v1117 = vunpack.c.l.b16 %v266
  %v1118 = vunpack.c.h.b16 %v266
  %v1119 = vunpack.c.l.b16 %v267
  %v1120 = vunpack.c.h.b16 %v267
  %v1121 = vunpack.c.l.b16 %v268
  %v1122 = vunpack.c.h.b16 %v268
  %v1123 = vunpack.c.l.b16 %v269
  %v1124 = vunpack.c.h.b16 %v269
  %v1125 = vunpack.c.l.b16 %v270
  %v1126 = vunpack.c.h.b16 %v270
  %v1127 = vunpack.c.l.b16 %v271
  %v1128 = vunpack.c.h.b16 %v271
  %v1129 = vunpack.c.l.b16 %v272
  %v1130 = vunpack.c.h.b16 %v272
  %v1131 = vunpack.c.l.b16 %v273
  %v1132 = vunpack.c.h.b16 %v273
  %v1133 = vunpack.c.l.b16 %v274
  %v1134 = vunpack.c.h.b16 %v274
  %v1135 = vunpack.c.l.b16 %v275
  %v1136 = vunpack.c.h.b16 %v275
  %v1137 = vunpack.c.l.b16 %v276
  %v1138 = vunpack.c.h.b16 %v276
  %v1139 = vunpack.c.l.b16 %v277
  %v1140 = vunpack.c.h.b16 %v277
  %v1141 = vunpack.c.l.b16 %v278
  %v1142 = vunpack.c.h.b16 %v278
  %v1143 = vunpack.c.l.b16 %v279
  %v1144 = vunpack.c.h.b16 %v279
  %v1145 = vunpack.c.l.b16 %v280
  %v1146 = vunpack.c.h.b16 %v280
  %v1147 = vunpack.c.l.b16 %v281
  %v1148 = vunpack.c.h.b16 %v281
  %v1149 = vunpack.c.l.b16 %v282
  %v1150 = vunpack.c.h.b16 %v282
  %v1151 = vunpack.c.l.b16 %v283
  %v1152 = vunpack.c.h.b16 %v283
  %v1153 = vunpack.c.l.b16 %v284
  %v1154 = vunpack.c.h.b16 %v284
  %v1155 = vunpack.c.l.b16 %v285
  %v1156 = vunpack.c.h.b16 %v285
  %v1157 = vunpack.c.l.b16 %v286
  %v1158 = vunpack.c.h.b16 %v286
  %v1159 = vunpack.c.l.b16 %v287
  %v1160 = vunpack.c.h.b16 %v287
  %v1161 = vunpack.c.l.b16 %v288
  %v1162 = vunpack.c.h.b16 %v288
  %v1163 = vunpack.c.l.b16 %v289
  %v1164 = vunpack.c.h.b16 %v289
  %v1165 = vunpack.c.l.b16 %v290
  %v1166 = vunpack.c.h.b16 %v290
  %v1167 = vunpack.c.l.b16 %v291
  %v1168 = vunpack.c.h.b16 %v291
  %v1169 = vunpack.c.l.b16 %v292
  %v1170 = vunpack.c.h.b16 %v292
  %v1171 = vunpack.c.l.b16 %v293
  %v1172 = vunpack.c.h.b16 %v293
  %v1173 = vunpack.c.l.b16 %v294
  %v1174 = vunpack.c.h.b16 %v294
  %v1175 = vunpack.c.l.b16 %v295
  %v1176 = vunpack.c.h.b16 %v295
  %v1177 = vunpack.c.l.b16 %v296
  %v1178 = vunpack.c.h.b16 %v296
  %v1179 = vunpack.c.l.b16 %v297
  %v1180 = vunpack.c.h.b16 %v297
  %v1181 = vunpack.c.l.b16 %v298
  %v1182 = vunpack.c.h.b16 %v298
  %v1183 = vunpack.c.l.b16 %v299
  %v1184 = vunpack.c.h.b16 %v299
  %v1185 = vunpack.c.l.b16 %v300
  %v1186 = vunpack.c.h.b16 %v300
  %v1187 = vunpack.c.l.b16 %v301
  %v1188 = vunpack.c.h.b16 %v301
  %v1189 = vunpack.c.l.b16 %v302
  %v1190 = vunpack.c.h.b16 %v302
  %v1191 = vunpack.c.l.b16 %v303
  %v1192 = vunpack.c.h.b16 %v303
  %v1193 = vunpack.c.l.b16 %v304
  %v1194 = vunpack.c.h.b16 %v304
  %v1195 = vunpack.c.l.b16 %v305
  %v1196 = vunpack.c.h.b16 %v305
  %v1197 = vunpack.c.l.b16 %v306
  %v1198 = vunpack.c.h.b16 %v306
  %v1199 = vunpack.c.l.b16 %v307
  %v1200 = vunpack.c.h.b16 %v307
  %v1201 = vunpack.c.l.b16 %v308
  %v1202 = vunpack.c.h.b16 %v308
  %v1203 = vunpack.c.l.b16 %v309
  %v1204 = vunpack.c.h.b16 %v309
  %v1205 = vunpack.c.l.b16 %v310
  %v1206 = vunpack.c.h.b16 %v310
  %v1207 = vpack.c.b16 %v635, %v631
  %v1208 = vpack.c.b16 %v636, %v632
  %v1209 = vpack.c.b16 %v637, %v633
  %v1210 = vpack.c.b16 %v638, %v634
  %v1211 = vpack.c.b16 %v643, %v639
  %v1212 = vpack.c.b16 %v644, %v640
  %v1213 = vpack.c.b16 %v645, %v641
  %v1214 = vpack.c.b16 %v646, %v642
  %v1215 = vpack.c.b16 %v651, %v647
  %v1216 = vpack.c.b16 %v652, %v648
  %v1217 = vpack.c.b16 %v653, %v649
  %v1218 = vpack.c.b16 %v654, %v650
  %v1219 = vpack.c.b16 %v659, %v655
  %v1220 = vpack.c.b16 %v660, %v656
  %v1221 = vpack.c.b16 %v661, %v657
  %v1222 = vpack.c.b16 %v662, %v658
  %v1223 = vpack.c.b16 %v667, %v663
  %v1224 = vpack.c.b16 %v668, %v664
  %v1225 = vpack.c.b16 %v669, %v665
  %v1226 = vpack.c.b16 %v670, %v666
  %v1227 = vpack.c.b16 %v675, %v671
  %v1228 = vpack.c.b16 %v676, %v672
  %v1229 = vpack.c.b16 %v677, %v673
  %v1230 = vpack.c.b16 %v678, %v674
  %v1231 = vpack.c.b16 %v683, %v679
  %v1232 = vpack.c.b16 %v684, %v680
  %v1233 = vpack.c.b16 %v685, %v681
  %v1234 = vpack.c.b16 %v686, %v682
  %v1235 = vpack.c.b16 %v691, %v687
  %v1236 = vpack.c.b16 %v692, %v688
  %v1237 = vpack.c.b16 %v693, %v689
  %v1238 = vpack.c.b16 %v694, %v690
  %v1239 = vpack.c.b16 %v699, %v695
  %v1240 = vpack.c.b16 %v700, %v696
  %v1241 = vpack.c.b16 %v701, %v697
  %v1242 = vpack.c.b16 %v702, %v698
  %v1243 = vpack.c.b16 %v707, %v703
  %v1244 = vpack.c.b16 %v708, %v704
  %v1245 = vpack.c.b16 %v709, %v705
  %v1246 = vpack.c.b16 %v710, %v706
  %v1247 = vpack.c.b16 %v715, %v711
  %v1248 = vpack.c.b16 %v716, %v712
  %v1249 = vpack.c.b16 %v717, %v713
  %v1250 = vpack.c.b16 %v718, %v714
  %v1251 = vpack.c.b16 %v723, %v719
  %v1252 = vpack.c.b16 %v724, %v720
  %v1253 = vpack.c.b16 %v725, %v721
  %v1254 = vpack.c.b16 %v726, %v722
  %v1255 = vpack.c.b16 %v731, %v727
  %v1256 = vpack.c.b16 %v732, %v728
  %v1257 = vpack.c.b16 %v733, %v729
  %v1258 = vpack.c.b16 %v734, %v730
  %v1259 = vpack.c.b16 %v739, %v735
  %v1260 = vpack.c.b16 %v740, %v736
  %v1261 = vpack.c.b16 %v741, %v737
  %v1262 = vpack.c.b16 %v742, %v738
  %v1263 = vpack.c.b16 %v747, %v743
  %v1264 = vpack.c.b16 %v748, %v744
  %v1265 = vpack.c.b16 %v749, %v745
  %v1266 = vpack.c.b16 %v750, %v746
  %v1267 = vpack.c.b16 %v755, %v751
  %v1268 = vpack.c.b16 %v756, %v752
  %v1269 = vpack.c.b16 %v757, %v753
  %v1270 = vpack.c.b16 %v758, %v754
  %v1271 = vpack.c.b16 %v763, %v759
  %v1272 = vpack.c.b16 %v764, %v760
  %v1273 = vpack.c.b16 %v765, %v761
  %v1274 = vpack.c.b16 %v766, %v762
  %v1275 = vpack.c.b16 %v771, %v767
  %v1276 = vpack.c.b16 %v772, %v768
  %v1277 = vpack.c.b16 %v773, %v769
  %v1278 = vpack.c.b16 %v774, %v770
  %v1279 = vpack.c.b16 %v779, %v775
  %v1280 = vpack.c.b16 %v780, %v776
  %v1281 = vpack.c.b16 %v781, %v777
  %v1282 = vpack.c.b16 %v782, %v778
  %v1283 = vpack.c.b16 %v787, %v783
  %v1284 = vpack.c.b16 %v788, %v784
  %v1285 = vpack.c.b16 %v789, %v785
  %v1286 = vpack.c.b16 %v790, %v786
  %v1287 = vpack.c.b16 %v795, %v791
  %v1288 = vpack.c.b16 %v796, %v792
  %v1289 = vpack.c.b16 %v797, %v793
  %v1290 = vpack.c.b16 %v798, %v794
  %v1291 = vpack.c.b16 %v803, %v799
  %v1292 = vpack.c.b16 %v804, %v800
  %v1293 = vpack.c.b16 %v805, %v801
  %v1294 = vpack.c.b16 %v806, %v802
  %v1295 = vpack.c.b16 %v811, %v807
  %v1296 = vpack.c.b16 %v812, %v808
  %v1297 = vpack.c.b16 %v813, %v809
  %v1298 = vpack.c.b16 %v814, %v810
  %v1299 = vpack.c.b16 %v819, %v815
  %v1300 = vpack.c.b16 %v820, %v816
  %v1301 = vpack.c.b16 %v821, %v817
  %v1302 = vpack.c.b16 %v822, %v818
  %v1303 = vpack.c.b16 %v827, %v823
  %v1304 = vpack.c.b16 %v828, %v824
  %v1305 = vpack.c.b16 %v829, %v825
  %v1306 = vpack.c.b16 %v830, %v826
  %v1307 = vpack.c.b16 %v835, %v831
  %v1308 = vpack.c.b16 %v836, %v832
  %v1309 = vpack.c.b16 %v837, %v833
  %v1310 = vpack.c.b16 %v838, %v834
  %v1311 = vpack.c.b16 %v843, %v839
  %v1312 = vpack.c.b16 %v844, %v840
  %v1313 = vpack.c.b16 %v845, %v841
  %v1314 = vpack.c.b16 %v846, %v842
  %v1315 = vpack.c.b16 %v851, %v847
  %v1316 = vpack.c.b16 %v852, %v848
  %v1317 = vpack.c.b16 %v853, %v849
  %v1318 = vpack.c.b16 %v854, %v850
  %v1319 = vpack.c.b16 %v859, %v855
  %v1320 = vpack.c.b16 %v860, %v856
  %v1321 = vpack.c.b16 %v861, %v857
  %v1322 = vpack.c.b16 %v862, %v858
  %v1323 = vpack.c.b16 %v867, %v863
  %v1324 = vpack.c.b16 %v868, %v864
  %v1325 = vpack.c.b16 %v869, %v865
  %v1326 = vpack.c.b16 %v870, %v866
  %v1327 = vpack.c.b16 %v875, %v871
  %v1328 = vpack.c.b16 %v876, %v872
  %v1329 = vpack.c.b16 %v877, %v873
  %v1330 = vpack.c.b16 %v878, %v874
  %v1331 = vpack.c.b16 %v883, %v879
  %v1332 = vpack.c.b16 %v884, %v880
  %v1333 = vpack.c.b16 %v885, %v881
  %v1334 = vpack.c.b16 %v886, %v882
  %v1335 = vpack.c.b16 %v891, %v887
  %v1336 = vpack.c.b16 %v892, %v888
  %v1337 = vpack.c.b16 %v893, %v889
  %v1338 = vpack.c.b16 %v894, %v890
  %v1339 = vpack.c.b16 %v899, %v895
  %v1340 = vpack.c.b16 %v900, %v896
  %v1341 = vpack.c.b16 %v901, %v897
  %v1342 = vpack.c.b16 %v902, %v898
  %v1343 = vpack.c.b16 %v907, %v903
  %v1344 = vpack.c.b16 %v908, %v904
  %v1345 = vpack.c.b16 %v909, %v905
  %v1346 = vpack.c.b16 %v910, %v906
  %v1347 = vpack.c.b16 %v915, %v911
  %v1348 = vpack.c.b16 %v916, %v912
  %v1349 = vpack.c.b16 %v917, %v913
  %v1350 = vpack.c.b16 %v918, %v914
  %v1351 = vpack.c.b16 %v923, %v919
  %v1352 = vpack.c.b16 %v924, %v920
  %v1353 = vpack.c.b16 %v925, %v921
  %v1354 = vpack.c.b16 %v926, %v922
  %v1355 = vpack.c.b16 %v931, %v927
  %v1356 = vpack.c.b16 %v932, %v928
  %v1357 = vpack.c.b16 %v933, %v929
  %v1358 = vpack.c.b16 %v934, %v930
  %v1359 = vpack.c.b16 %v939, %v935
  %v1360 = vpack.c.b16 %v940, %v936
  %v1361 = vpack.c.b16 %v941, %v937
  %v1362 = vpack.c.b16 %v942, %v938
  %v1363 = vpack.c.b16 %v947, %v943
  %v1364 = vpack.c.b16 %v948, %v944
  %v1365 = vpack.c.b16 %v949, %v945
  %v1366 = vpack.c.b16 %v950, %v946
  %v1367 = vpack.c.b16 %v955, %v951
  %v1368 = vpack.c.b16 %v956, %v952
  %v1369 = vpack.c.b16 %v957, %v953
  %v1370 = vpack.c.b16 %v958, %v954
  %v1371 = vpack.c.b16 %v963, %v959
  %v1372 = vpack.c.b16 %v964, %v960
  %v1373 = vpack.c.b16 %v965, %v961
  %v1374 = vpack.c.b16 %v966, %v962
  %v1375 = vpack.c.b16 %v971, %v967
  %v1376 = vpack.c.b16 %v972, %v968
  %v1377 = vpack.c.b16 %v973, %v969
  %v1378 = vpack.c.b16 %v974, %v970
  %v1379 = vpack.c.b16 %v979, %v975
  %v1380 = vpack.c.b16 %v980, %v976
  %v1381 = vpack.c.b16 %v981, %v977
  %v1382 = vpack.c.b16 %v982, %v978
  %v1383 = vpack.c.b16 %v987, %v983
  %v1384 = vpack.c.b16 %v988, %v984
  %v1385 = vpack.c.b16 %v989, %v985
  %v1386 = vpack.c.b16 %v990, %v986
  %v1387 = vpack.c.b16 %v995, %v991
  %v1388 = vpack.c.b16 %v996, %v992
  %v1389 = vpack.c.b16 %v997, %v993
  %v1390 = vpack.c.b16 %v998, %v994
  %v1391 = vpack.c.b16 %v1003, %v999
  %v1392 = vpack.c.b16 %v1004, %v1000
  %v1393 = vpack.c.b16 %v1005, %v1001
  %v1394 = vpack.c.b16 %v1006, %v1002
  %v1395 = vpack.c.b16 %v1011, %v1007
  %v1396 = vpack.c.b16 %v1012, %v1008
  %v1397 = vpack.c.b16 %v1013, %v1009
  %v1398 = vpack.c.b16 %v1014, %v1010
  %v1399 = vpack.c.b16 %v1019, %v1015
  %v1400 = vpack.c.b16 %v1020, %v1016
  %v1401 = vpack.c.b16 %v1021, %v1017
  %v1402 = vpack.c.b16 %v1022, %v1018
  %v1403 = vpack.c.b16 %v1027, %v1023
  %v1404 = vpack.c.b16 %v1028, %v1024
  %v1405 = vpack.c.b16 %v1029, %v1025
  %v1406 = vpack.c.b16 %v1030, %v1026
  %v1407 = vpack.c.b16 %v1035, %v1031
  %v1408 = vpack.c.b16 %v1036, %v1032
  %v1409 = vpack.c.b16 %v1037, %v1033
  %v1410 = vpack.c.b16 %v1038, %v1034
  %v1411 = vpack.c.b16 %v1043, %v1039
  %v1412 = vpack.c.b16 %v1044, %v1040
  %v1413 = vpack.c.b16 %v1045, %v1041
  %v1414 = vpack.c.b16 %v1046, %v1042
  %v1415 = vpack.c.b16 %v1051, %v1047
  %v1416 = vpack.c.b16 %v1052, %v1048
  %v1417 = vpack.c.b16 %v1053, %v1049
  %v1418 = vpack.c.b16 %v1054, %v1050
  %v1419 = vpack.c.b16 %v1059, %v1055
  %v1420 = vpack.c.b16 %v1060, %v1056
  %v1421 = vpack.c.b16 %v1061, %v1057
  %v1422 = vpack.c.b16 %v1062, %v1058
  %v1423 = vpack.c.b16 %v1067, %v1063
  %v1424 = vpack.c.b16 %v1068, %v1064
  %v1425 = vpack.c.b16 %v1069, %v1065
  %v1426 = vpack.c.b16 %v1070, %v1066
  %v1427 = vpack.c.b16 %v1075, %v1071
  %v1428 = vpack.c.b16 %v1076, %v1072
  %v1429 = vpack.c.b16 %v1077, %v1073
  %v1430 = vpack.c.b16 %v1078, %v1074
  %v1431 = vpack.c.b16 %v1083, %v1079
  %v1432 = vpack.c.b16 %v1084, %v1080
  %v1433 = vpack.c.b16 %v1085, %v1081
  %v1434 = vpack.c.b16 %v1086, %v1082
  %v1435 = vpack.c.b16 %v1091, %v1087
  %v1436 = vpack.c.b16 %v1092, %v1088
  %v1437 = vpack.c.b16 %v1093, %v1089
  %v1438 = vpack.c.b16 %v1094, %v1090
  %v1439 = vpack.c.b16 %v1099, %v1095
  %v1440 = vpack.c.b16 %v1100, %v1096
  %v1441 = vpack.c.b16 %v1101, %v1097
  %v1442 = vpack.c.b16 %v1102, %v1098
  %v1443 = vpack.c.b16 %v1107, %v1103
  %v1444 = vpack.c.b16 %v1108, %v1104
  %v1445 = vpack.c.b16 %v1109, %v1105
  %v1446 = vpack.c.b16 %v1110, %v1106
  %v1447 = vpack.c.b16 %v1115, %v1111
  %v1448 = vpack.c.b16 %v1116, %v1112
  %v1449 = vpack.c.b16 %v1117, %v1113
  %v1450 = vpack.c.b16 %v1118, %v1114
  %v1451 = vpack.c.b16 %v1123, %v1119
  %v1452 = vpack.c.b16 %v1124, %v1120
  %v1453 = vpack.c.b16 %v1125, %v1121
  %v1454 = vpack.c.b16 %v1126, %v1122
  %v1455 = vpack.c.b16 %v1131, %v1127
  %v1456 = vpack.c.b16 %v1132, %v1128
  %v1457 = vpack.c.b16 %v1133, %v1129
  %v1458 = vpack.c.b16 %v1134, %v1130
  %v1459 = vpack.c.b16 %v1139, %v1135
  %v1460 = vpack.c.b16 %v1140, %v1136
  %v1461 = vpack.c.b16 %v1141, %v1137
  %v1462 = vpack.c.b16 %v1142, %v1138
  %v1463 = vpack.c.b16 %v1147, %v1143
  %v1464 = vpack.c.b16 %v1148, %v1144
  %v1465 = vpack.c.b16 %v1149, %v1145
  %v1466 = vpack.c.b16 %v1150, %v1146
  %v1467 = vpack.c.b16 %v1155, %v1151
  %v1468 = vpack.c.b16 %v1156, %v1152
  %v1469 = vpack.c.b16 %v1157, %v1153
  %v1470 = vpack.c.b16 %v1158, %v1154
  %v1471 = vpack.c.b16 %v1163, %v1159
  %v1472 = vpack.c.b16 %v1164, %v1160
  %v1473 = vpack.c.b16 %v1165, %v1161
  %v1474 = vpack.c.b16 %v1166, %v1162
  %v1475 = vpack.c.b16 %v1171, %v1167
  %v1476 = vpack.c.b16 %v1172, %v1168
  %v1477 = vpack.c.b16 %v1173, %v1169
  %v1478 = vpack.c.b16 %v1174, %v1170
  %v1479 = vpack.c.b16 %v1179, %v1175
  %v1480 = vpack.c.b16 %v1180, %v1176
  %v1481 = vpack.c.b16 %v1181, %v1177
  %v1482 = vpack.c.b16 %v1182, %v1178
  %v1483 = vpack.c.b16 %v1187, %v1183
  %v1484 = vpack.c.b16 %v1188, %v1184
  %v1485 = vpack.c.b16 %v1189, %v1185
  %v1486 = vpack.c.b16 %v1190, %v1186
  %v1487 = vpack.c.b16 %v1195, %v1191
  %v1488 = vpack.c.b16 %v1196, %v1192
  %v1489 = vpack.c.b16 %v1197, %v1193
  %v1490 = vpack.c.b16 %v1198, %v1194
  %v1491 = vpack.c.b16 %v1203, %v1199
  %v1492 = vpack.c.b16 %v1204, %v1200
  %v1493 = vpack.c.b16 %v1205, %v1201
  %v1494 = vpack.c.b16 %v1206, %v1202
  %1783 = vmatprep.subr.bf16.mxu0 %v1208
  %1784 = vmatpush1.bf16.msra.mxu0 %v1207
  %1785 = vmatprep.subr.bf16.mxu0 %v1212
  %1786 = vmatpush1.bf16.msra.mxu0 %v1211
  %1787 = vmatprep.subr.bf16.mxu0 %v1216
  %1788 = vmatpush1.bf16.msra.mxu0 %v1215
  %1789 = vmatprep.subr.bf16.mxu0 %v1220
  %1790 = vmatpush1.bf16.msra.mxu0 %v1219
  %1791 = vmatprep.subr.bf16.mxu0 %v1224
  %1792 = vmatpush1.bf16.msra.mxu0 %v1223
  %1793 = vmatprep.subr.bf16.mxu0 %v1228
  %1794 = vmatpush1.bf16.msra.mxu0 %v1227
  %1795 = vmatprep.subr.bf16.mxu0 %v1232
  %1796 = vmatpush1.bf16.msra.mxu0 %v1231
  %1797 = vmatprep.subr.bf16.mxu0 %v1236
  %1798 = vmatpush1.bf16.msra.mxu0 %v1235
  %1799 = vmatprep.subr.bf16.mxu0 %v1240
  %1800 = vmatpush1.bf16.msra.mxu0 %v1239
  %1801 = vmatprep.subr.bf16.mxu0 %v1244
  %1802 = vmatpush1.bf16.msra.mxu0 %v1243
  %1803 = vmatprep.subr.bf16.mxu0 %v1248
  %1804 = vmatpush1.bf16.msra.mxu0 %v1247
  %1805 = vmatprep.subr.bf16.mxu0 %v1252
  %1806 = vmatpush1.bf16.msra.mxu0 %v1251
  %1807 = vmatprep.subr.bf16.mxu0 %v1256
  %1808 = vmatpush1.bf16.msra.mxu0 %v1255
  %1809 = vmatprep.subr.bf16.mxu0 %v1260
  %1810 = vmatpush1.bf16.msra.mxu0 %v1259
  %1811 = vmatprep.subr.bf16.mxu0 %v1264
  %1812 = vmatpush1.bf16.msra.mxu0 %v1263
  %1813 = vmatprep.subr.bf16.mxu0 %v1268
  %1814 = vmatpush1.bf16.msra.mxu0 %v1267
  %1815 = vmatprep.mubr.bf16.mxu0 %v326
  %1816 = vmatmul.mubr.bf16.gmra.mrb[0].mxu0 %v325
  %v1817 = vpop.f32.mrb[0].mxu0
  %v1818 = vadd.f32 0.0, %v1817
  %v1819 = vpop.f32.mrb[0].mxu0
  %v1820 = vadd.f32 0.0, %v1819
  %v1821 = vpop.f32.mrb[0].mxu0
  %v1822 = vpop.f32.mrb[0].mxu0
  %1823 = vdwg.mxu0
  %1824 = vmatprep.subr.bf16.mxu0 %v1272
  %1825 = vmatpush1.bf16.msra.mxu0 %v1271
  %1826 = vmatprep.subr.bf16.mxu0 %v1276
  %1827 = vmatpush1.bf16.msra.mxu0 %v1275
  %1828 = vmatprep.subr.bf16.mxu0 %v1280
  %1829 = vmatpush1.bf16.msra.mxu0 %v1279
  %1830 = vmatprep.subr.bf16.mxu0 %v1284
  %1831 = vmatpush1.bf16.msra.mxu0 %v1283
  %1832 = vmatprep.subr.bf16.mxu0 %v1288
  %1833 = vmatpush1.bf16.msra.mxu0 %v1287
  %1834 = vmatprep.subr.bf16.mxu0 %v1292
  %1835 = vmatpush1.bf16.msra.mxu0 %v1291
  %1836 = vmatprep.subr.bf16.mxu0 %v1296
  %1837 = vmatpush1.bf16.msra.mxu0 %v1295
  %1838 = vmatprep.subr.bf16.mxu0 %v1300
  %1839 = vmatpush1.bf16.msra.mxu0 %v1299
  %1840 = vmatprep.subr.bf16.mxu0 %v1304
  %1841 = vmatpush1.bf16.msra.mxu0 %v1303
  %1842 = vmatprep.subr.bf16.mxu0 %v1308
  %1843 = vmatpush1.bf16.msra.mxu0 %v1307
  %1844 = vmatprep.subr.bf16.mxu0 %v1312
  %1845 = vmatpush1.bf16.msra.mxu0 %v1311
  %1846 = vmatprep.subr.bf16.mxu0 %v1316
  %1847 = vmatpush1.bf16.msra.mxu0 %v1315
  %1848 = vmatprep.subr.bf16.mxu0 %v1320
  %1849 = vmatpush1.bf16.msra.mxu0 %v1319
  %1850 = vmatprep.subr.bf16.mxu0 %v1324
  %1851 = vmatpush1.bf16.msra.mxu0 %v1323
  %1852 = vmatprep.subr.bf16.mxu0 %v1328
  %1853 = vmatpush1.bf16.msra.mxu0 %v1327
  %1854 = vmatprep.subr.bf16.mxu0 %v1332
  %1855 = vmatpush1.bf16.msra.mxu0 %v1331
  %1856 = vmatprep.mubr.bf16.mxu0 %v328
  %1857 = vmatmul.mubr.bf16.gmra.mrb[0].mxu0 %v327
  %v1858 = vpop.f32.mrb[0].mxu0
  %v1859 = vadd.f32 %v1818, %v1858
  %v1860 = vpop.f32.mrb[0].mxu0
  %v1861 = vadd.f32 %v1820, %v1860
  %v1862 = vpop.f32.mrb[0].mxu0
  %v1863 = vpop.f32.mrb[0].mxu0
  %1864 = vdwg.mxu0
  %1865 = vmatprep.subr.bf16.mxu0 %v1336
  %1866 = vmatpush1.bf16.msra.mxu0 %v1335
  %1867 = vmatprep.subr.bf16.mxu0 %v1340
  %1868 = vmatpush1.bf16.msra.mxu0 %v1339
  %1869 = vmatprep.subr.bf16.mxu0 %v1344
  %1870 = vmatpush1.bf16.msra.mxu0 %v1343
  %1871 = vmatprep.subr.bf16.mxu0 %v1348
  %1872 = vmatpush1.bf16.msra.mxu0 %v1347
  %1873 = vmatprep.subr.bf16.mxu0 %v1352
  %1874 = vmatpush1.bf16.msra.mxu0 %v1351
  %1875 = vmatprep.subr.bf16.mxu0 %v1356
  %1876 = vmatpush1.bf16.msra.mxu0 %v1355
  %1877 = vmatprep.subr.bf16.mxu0 %v1360
  %1878 = vmatpush1.bf16.msra.mxu0 %v1359
  %1879 = vmatprep.subr.bf16.mxu0 %v1364
  %1880 = vmatpush1.bf16.msra.mxu0 %v1363
  %1881 = vmatprep.subr.bf16.mxu0 %v1368
  %1882 = vmatpush1.bf16.msra.mxu0 %v1367
  %1883 = vmatprep.subr.bf16.mxu0 %v1372
  %1884 = vmatpush1.bf16.msra.mxu0 %v1371
  %1885 = vmatprep.subr.bf16.mxu0 %v1376
  %1886 = vmatpush1.bf16.msra.mxu0 %v1375
  %1887 = vmatprep.subr.bf16.mxu0 %v1380
  %1888 = vmatpush1.bf16.msra.mxu0 %v1379
  %1889 = vmatprep.subr.bf16.mxu0 %v1384
  %1890 = vmatpush1.bf16.msra.mxu0 %v1383
  %1891 = vmatprep.subr.bf16.mxu0 %v1388
  %1892 = vmatpush1.bf16.msra.mxu0 %v1387
  %1893 = vmatprep.subr.bf16.mxu0 %v1392
  %1894 = vmatpush1.bf16.msra.mxu0 %v1391
  %1895 = vmatprep.subr.bf16.mxu0 %v1396
  %1896 = vmatpush1.bf16.msra.mxu0 %v1395
  %1897 = vmatprep.mubr.bf16.mxu0 %v330
  %1898 = vmatmul.mubr.bf16.gmra.mrb[0].mxu0 %v329
  %v1899 = vpop.f32.mrb[0].mxu0
  %v1900 = vadd.f32 %v1859, %v1899
  %v1901 = vpop.f32.mrb[0].mxu0
  %v1902 = vadd.f32 %v1861, %v1901
  %v1903 = vpop.f32.mrb[0].mxu0
  %v1904 = vpop.f32.mrb[0].mxu0
  %1905 = vdwg.mxu0
  %1906 = vmatprep.subr.bf16.mxu0 %v1400
  %1907 = vmatpush1.bf16.msra.mxu0 %v1399
  %1908 = vmatprep.subr.bf16.mxu0 %v1404
  %1909 = vmatpush1.bf16.msra.mxu0 %v1403
  %1910 = vmatprep.subr.bf16.mxu0 %v1408
  %1911 = vmatpush1.bf16.msra.mxu0 %v1407
  %1912 = vmatprep.subr.bf16.mxu0 %v1412
  %1913 = vmatpush1.bf16.msra.mxu0 %v1411
  %1914 = vmatprep.subr.bf16.mxu0 %v1416
  %1915 = vmatpush1.bf16.msra.mxu0 %v1415
  %1916 = vmatprep.subr.bf16.mxu0 %v1420
  %1917 = vmatpush1.bf16.msra.mxu0 %v1419
  %1918 = vmatprep.subr.bf16.mxu0 %v1424
  %1919 = vmatpush1.bf16.msra.mxu0 %v1423
  %1920 = vmatprep.subr.bf16.mxu0 %v1428
  %1921 = vmatpush1.bf16.msra.mxu0 %v1427
  %1922 = vmatprep.subr.bf16.mxu0 %v1432
  %1923 = vmatpush1.bf16.msra.mxu0 %v1431
  %1924 = vmatprep.subr.bf16.mxu0 %v1436
  %1925 = vmatpush1.bf16.msra.mxu0 %v1435
  %1926 = vmatprep.subr.bf16.mxu0 %v1440
  %1927 = vmatpush1.bf16.msra.mxu0 %v1439
  %1928 = vmatprep.subr.bf16.mxu0 %v1444
  %1929 = vmatpush1.bf16.msra.mxu0 %v1443
  %1930 = vmatprep.subr.bf16.mxu0 %v1448
  %1931 = vmatpush1.bf16.msra.mxu0 %v1447
  %1932 = vmatprep.subr.bf16.mxu0 %v1452
  %1933 = vmatpush1.bf16.msra.mxu0 %v1451
  %1934 = vmatprep.subr.bf16.mxu0 %v1456
  %1935 = vmatpush1.bf16.msra.mxu0 %v1455
  %1936 = vmatprep.subr.bf16.mxu0 %v1460
  %1937 = vmatpush1.bf16.msra.mxu0 %v1459
  %1938 = vmatprep.mubr.bf16.mxu0 %v332
  %1939 = vmatmul.mubr.bf16.gmra.mrb[0].mxu0 %v331
  %v1940 = vpop.f32.mrb[0].mxu0
  %v1941 = vadd.f32 %v1900, %v1940
  %v1942 = vpop.f32.mrb[0].mxu0
  %v1943 = vadd.f32 %v1902, %v1942
  %v1944 = vpop.f32.mrb[0].mxu0
  %v1945 = vpop.f32.mrb[0].mxu0
  %1946 = vdwg.mxu0
  %1947 = vmatprep.subr.bf16.mxu0 %v1464
  %1948 = vmatpush1.bf16.msra.mxu0 %v1463
  %1949 = vmatprep.subr.bf16.mxu0 %v1468
  %1950 = vmatpush1.bf16.msra.mxu0 %v1467
  %1951 = vmatprep.subr.bf16.mxu0 %v1472
  %1952 = vmatpush1.bf16.msra.mxu0 %v1471
  %1953 = vmatprep.subr.bf16.mxu0 %v1476
  %1954 = vmatpush1.bf16.msra.mxu0 %v1475
  %1955 = vmatprep.subr.bf16.mxu0 %v1480
  %1956 = vmatpush1.bf16.msra.mxu0 %v1479
  %1957 = vmatprep.subr.bf16.mxu0 %v1484
  %1958 = vmatpush1.bf16.msra.mxu0 %v1483
  %1959 = vmatprep.subr.bf16.mxu0 %v1488
  %1960 = vmatpush1.bf16.msra.mxu0 %v1487
  %1961 = vmatprep.subr.bf16.mxu0 %v1492
  %1962 = vmatpush1.bf16.msra.mxu0 %v1491
  %1963 = vmatprep.subr.bf16.mxu0 0
  %1964 = vmatpush1.bf16.msra.mxu0 0
  %1965 = vmatprep.subr.bf16.mxu0 0
  %1966 = vmatpush1.bf16.msra.mxu0 0
  %1967 = vmatprep.subr.bf16.mxu0 0
  %1968 = vmatpush1.bf16.msra.mxu0 0
  %1969 = vmatprep.subr.bf16.mxu0 0
  %1970 = vmatpush1.bf16.msra.mxu0 0
  %1971 = vmatprep.subr.bf16.mxu0 0
  %1972 = vmatpush1.bf16.msra.mxu0 0
  %1973 = vmatprep.subr.bf16.mxu0 0
  %1974 = vmatpush1.bf16.msra.mxu0 0
  %1975 = vmatprep.subr.bf16.mxu0 0
  %1976 = vmatpush1.bf16.msra.mxu0 0
  %1977 = vmatprep.subr.bf16.mxu0 0
  %1978 = vmatpush1.bf16.msra.mxu0 0
  %1979 = vmatprep.mubr.bf16.mxu0 0
  %1980 = vmatmul.mubr.bf16.gmra.mrb[0].mxu0 %v333
  %v1981 = vpop.f32.mrb[0].mxu0
  %v1982 = vadd.f32 %v1941, %v1981
  %v1983 = vpop.f32.mrb[0].mxu0
  %v1984 = vadd.f32 %v1943, %v1983
  %v1985 = vpop.f32.mrb[0].mxu0
  %v1986 = vpop.f32.mrb[0].mxu0
  %1987 = vdwg.mxu0
  %1988 = vmatprep.subr.bf16.mxu0 %v1210
  %1989 = vmatpush1.bf16.msra.mxu0 %v1209
  %1990 = vmatprep.subr.bf16.mxu0 %v1214
  %1991 = vmatpush1.bf16.msra.mxu0 %v1213
  %1992 = vmatprep.subr.bf16.mxu0 %v1218
  %1993 = vmatpush1.bf16.msra.mxu0 %v1217
  %1994 = vmatprep.subr.bf16.mxu0 %v1222
  %1995 = vmatpush1.bf16.msra.mxu0 %v1221
  %1996 = vmatprep.subr.bf16.mxu0 %v1226
  %1997 = vmatpush1.bf16.msra.mxu0 %v1225
  %1998 = vmatprep.subr.bf16.mxu0 %v1230
  %1999 = vmatpush1.bf16.msra.mxu0 %v1229
  %2000 = vmatprep.subr.bf16.mxu0 %v1234
  %2001 = vmatpush1.bf16.msra.mxu0 %v1233
  %2002 = vmatprep.subr.bf16.mxu0 %v1238
  %2003 = vmatpush1.bf16.msra.mxu0 %v1237
  %2004 = vmatprep.subr.bf16.mxu0 %v1242
  %2005 = vmatpush1.bf16.msra.mxu0 %v1241
  %2006 = vmatprep.subr.bf16.mxu0 %v1246
  %2007 = vmatpush1.bf16.msra.mxu0 %v1245
  %2008 = vmatprep.subr.bf16.mxu0 %v1250
  %2009 = vmatpush1.bf16.msra.mxu0 %v1249
  %2010 = vmatprep.subr.bf16.mxu0 %v1254
  %2011 = vmatpush1.bf16.msra.mxu0 %v1253
  %2012 = vmatprep.subr.bf16.mxu0 %v1258
  %2013 = vmatpush1.bf16.msra.mxu0 %v1257
  %2014 = vmatprep.subr.bf16.mxu0 %v1262
  %2015 = vmatpush1.bf16.msra.mxu0 %v1261
  %2016 = vmatprep.subr.bf16.mxu0 %v1266
  %2017 = vmatpush1.bf16.msra.mxu0 %v1265
  %2018 = vmatprep.subr.bf16.mxu0 %v1270
  %2019 = vmatpush1.bf16.msra.mxu0 %v1269
  %2020 = vmatprep.mubr.bf16.mxu0 %v326
  %2021 = vmatmul.mubr.bf16.gmra.mrb[0].mxu0 %v325
  %v2022 = vpop.f32.mrb[0].mxu0
  %v2023 = vadd.f32 0.0, %v2022
  %v2024 = vpop.f32.mrb[0].mxu0
  %v2025 = vadd.f32 0.0, %v2024
  %v2026 = vpop.f32.mrb[0].mxu0
  %v2027 = vpop.f32.mrb[0].mxu0
  %2028 = vdwg.mxu0
  %2029 = vmatprep.subr.bf16.mxu0 %v1274
  %2030 = vmatpush1.bf16.msra.mxu0 %v1273
  %2031 = vmatprep.subr.bf16.mxu0 %v1278
  %2032 = vmatpush1.bf16.msra.mxu0 %v1277
  %2033 = vmatprep.subr.bf16.mxu0 %v1282
  %2034 = vmatpush1.bf16.msra.mxu0 %v1281
  %2035 = vmatprep.subr.bf16.mxu0 %v1286
  %2036 = vmatpush1.bf16.msra.mxu0 %v1285
  %2037 = vmatprep.subr.bf16.mxu0 %v1290
  %2038 = vmatpush1.bf16.msra.mxu0 %v1289
  %2039 = vmatprep.subr.bf16.mxu0 %v1294
  %2040 = vmatpush1.bf16.msra.mxu0 %v1293
  %2041 = vmatprep.subr.bf16.mxu0 %v1298
  %2042 = vmatpush1.bf16.msra.mxu0 %v1297
  %2043 = vmatprep.subr.bf16.mxu0 %v1302
  %2044 = vmatpush1.bf16.msra.mxu0 %v1301
  %2045 = vmatprep.subr.bf16.mxu0 %v1306
  %2046 = vmatpush1.bf16.msra.mxu0 %v1305
  %2047 = vmatprep.subr.bf16.mxu0 %v1310
  %2048 = vmatpush1.bf16.msra.mxu0 %v1309
  %2049 = vmatprep.subr.bf16.mxu0 %v1314
  %2050 = vmatpush1.bf16.msra.mxu0 %v1313
  %2051 = vmatprep.subr.bf16.mxu0 %v1318
  %2052 = vmatpush1.bf16.msra.mxu0 %v1317
  %2053 = vmatprep.subr.bf16.mxu0 %v1322
  %2054 = vmatpush1.bf16.msra.mxu0 %v1321
  %2055 = vmatprep.subr.bf16.mxu0 %v1326
  %2056 = vmatpush1.bf16.msra.mxu0 %v1325
  %2057 = vmatprep.subr.bf16.mxu0 %v1330
  %2058 = vmatpush1.bf16.msra.mxu0 %v1329
  %2059 = vmatprep.subr.bf16.mxu0 %v1334
  %2060 = vmatpush1.bf16.msra.mxu0 %v1333
  %2061 = vmatprep.mubr.bf16.mxu0 %v328
  %2062 = vmatmul.mubr.bf16.gmra.mrb[0].mxu0 %v327
  %v2063 = vpop.f32.mrb[0].mxu0
  %v2064 = vadd.f32 %v2023, %v2063
  %v2065 = vpop.f32.mrb[0].mxu0
  %v2066 = vadd.f32 %v2025, %v2065
  %v2067 = vpop.f32.mrb[0].mxu0
  %v2068 = vpop.f32.mrb[0].mxu0
  %2069 = vdwg.mxu0
  %2070 = vmatprep.subr.bf16.mxu0 %v1338
  %2071 = vmatpush1.bf16.msra.mxu0 %v1337
  %2072 = vmatprep.subr.bf16.mxu0 %v1342
  %2073 = vmatpush1.bf16.msra.mxu0 %v1341
  %2074 = vmatprep.subr.bf16.mxu0 %v1346
  %2075 = vmatpush1.bf16.msra.mxu0 %v1345
  %2076 = vmatprep.subr.bf16.mxu0 %v1350
  %2077 = vmatpush1.bf16.msra.mxu0 %v1349
  %2078 = vmatprep.subr.bf16.mxu0 %v1354
  %2079 = vmatpush1.bf16.msra.mxu0 %v1353
  %2080 = vmatprep.subr.bf16.mxu0 %v1358
  %2081 = vmatpush1.bf16.msra.mxu0 %v1357
  %2082 = vmatprep.subr.bf16.mxu0 %v1362
  %2083 = vmatpush1.bf16.msra.mxu0 %v1361
  %2084 = vmatprep.subr.bf16.mxu0 %v1366
  %2085 = vmatpush1.bf16.msra.mxu0 %v1365
  %2086 = vmatprep.subr.bf16.mxu0 %v1370
  %2087 = vmatpush1.bf16.msra.mxu0 %v1369
  %2088 = vmatprep.subr.bf16.mxu0 %v1374
  %2089 = vmatpush1.bf16.msra.mxu0 %v1373
  %2090 = vmatprep.subr.bf16.mxu0 %v1378
  %2091 = vmatpush1.bf16.msra.mxu0 %v1377
  %2092 = vmatprep.subr.bf16.mxu0 %v1382
  %2093 = vmatpush1.bf16.msra.mxu0 %v1381
  %2094 = vmatprep.subr.bf16.mxu0 %v1386
  %2095 = vmatpush1.bf16.msra.mxu0 %v1385
  %2096 = vmatprep.subr.bf16.mxu0 %v1390
  %2097 = vmatpush1.bf16.msra.mxu0 %v1389
  %2098 = vmatprep.subr.bf16.mxu0 %v1394
  %2099 = vmatpush1.bf16.msra.mxu0 %v1393
  %2100 = vmatprep.subr.bf16.mxu0 %v1398
  %2101 = vmatpush1.bf16.msra.mxu0 %v1397
  %2102 = vmatprep.mubr.bf16.mxu0 %v330
  %2103 = vmatmul.mubr.bf16.gmra.mrb[0].mxu0 %v329
  %v2104 = vpop.f32.mrb[0].mxu0
  %v2105 = vadd.f32 %v2064, %v2104
  %v2106 = vpop.f32.mrb[0].mxu0
  %v2107 = vadd.f32 %v2066, %v2106
  %v2108 = vpop.f32.mrb[0].mxu0
  %v2109 = vpop.f32.mrb[0].mxu0
  %2110 = vdwg.mxu0
  %2111 = vmatprep.subr.bf16.mxu0 %v1402
  %2112 = vmatpush1.bf16.msra.mxu0 %v1401
  %2113 = vmatprep.subr.bf16.mxu0 %v1406
  %2114 = vmatpush1.bf16.msra.mxu0 %v1405
  %2115 = vmatprep.subr.bf16.mxu0 %v1410
  %2116 = vmatpush1.bf16.msra.mxu0 %v1409
  %2117 = vmatprep.subr.bf16.mxu0 %v1414
  %2118 = vmatpush1.bf16.msra.mxu0 %v1413
  %2119 = vmatprep.subr.bf16.mxu0 %v1418
  %2120 = vmatpush1.bf16.msra.mxu0 %v1417
  %2121 = vmatprep.subr.bf16.mxu0 %v1422
  %2122 = vmatpush1.bf16.msra.mxu0 %v1421
  %2123 = vmatprep.subr.bf16.mxu0 %v1426
  %2124 = vmatpush1.bf16.msra.mxu0 %v1425
  %2125 = vmatprep.subr.bf16.mxu0 %v1430
  %2126 = vmatpush1.bf16.msra.mxu0 %v1429
  %2127 = vmatprep.subr.bf16.mxu0 %v1434
  %2128 = vmatpush1.bf16.msra.mxu0 %v1433
  %2129 = vmatprep.subr.bf16.mxu0 %v1438
  %2130 = vmatpush1.bf16.msra.mxu0 %v1437
  %2131 = vmatprep.subr.bf16.mxu0 %v1442
  %2132 = vmatpush1.bf16.msra.mxu0 %v1441
  %2133 = vmatprep.subr.bf16.mxu0 %v1446
  %2134 = vmatpush1.bf16.msra.mxu0 %v1445
  %2135 = vmatprep.subr.bf16.mxu0 %v1450
  %2136 = vmatpush1.bf16.msra.mxu0 %v1449
  %2137 = vmatprep.subr.bf16.mxu0 %v1454
  %2138 = vmatpush1.bf16.msra.mxu0 %v1453
  %2139 = vmatprep.subr.bf16.mxu0 %v1458
  %2140 = vmatpush1.bf16.msra.mxu0 %v1457
  %2141 = vmatprep.subr.bf16.mxu0 %v1462
  %2142 = vmatpush1.bf16.msra.mxu0 %v1461
  %2143 = vmatprep.mubr.bf16.mxu0 %v332
  %2144 = vmatmul.mubr.bf16.gmra.mrb[0].mxu0 %v331
  %v2145 = vpop.f32.mrb[0].mxu0
  %v2146 = vadd.f32 %v2105, %v2145
  %v2147 = vpop.f32.mrb[0].mxu0
  %v2148 = vadd.f32 %v2107, %v2147
  %v2149 = vpop.f32.mrb[0].mxu0
  %v2150 = vpop.f32.mrb[0].mxu0
  %2151 = vdwg.mxu0
  %2152 = vmatprep.subr.bf16.mxu0 %v1466
  %2153 = vmatpush1.bf16.msra.mxu0 %v1465
  %2154 = vmatprep.subr.bf16.mxu0 %v1470
  %2155 = vmatpush1.bf16.msra.mxu0 %v1469
  %2156 = vmatprep.subr.bf16.mxu0 %v1474
  %2157 = vmatpush1.bf16.msra.mxu0 %v1473
  %2158 = vmatprep.subr.bf16.mxu0 %v1478
  %2159 = vmatpush1.bf16.msra.mxu0 %v1477
  %2160 = vmatprep.subr.bf16.mxu0 %v1482
  %2161 = vmatpush1.bf16.msra.mxu0 %v1481
  %2162 = vmatprep.subr.bf16.mxu0 %v1486
  %2163 = vmatpush1.bf16.msra.mxu0 %v1485
  %2164 = vmatprep.subr.bf16.mxu0 %v1490
  %2165 = vmatpush1.bf16.msra.mxu0 %v1489
  %2166 = vmatprep.subr.bf16.mxu0 %v1494
  %2167 = vmatpush1.bf16.msra.mxu0 %v1493
  %2168 = vmatprep.subr.bf16.mxu0 0
  %2169 = vmatpush1.bf16.msra.mxu0 0
  %2170 = vmatprep.subr.bf16.mxu0 0
  %2171 = vmatpush1.bf16.msra.mxu0 0
  %2172 = vmatprep.subr.bf16.mxu0 0
  %2173 = vmatpush1.bf16.msra.mxu0 0
  %2174 = vmatprep.subr.bf16.mxu0 0
  %2175 = vmatpush1.bf16.msra.mxu0 0
  %2176 = vmatprep.subr.bf16.mxu0 0
  %2177 = vmatpush1.bf16.msra.mxu0 0
  %2178 = vmatprep.subr.bf16.mxu0 0
  %2179 = vmatpush1.bf16.msra.mxu0 0
  %2180 = vmatprep.subr.bf16.mxu0 0
  %2181 = vmatpush1.bf16.msra.mxu0 0
  %2182 = vmatprep.subr.bf16.mxu0 0
  %2183 = vmatpush1.bf16.msra.mxu0 0
  %2184 = vmatprep.mubr.bf16.mxu0 0
  %2185 = vmatmul.mubr.bf16.gmra.mrb[0].mxu0 %v333
  %v2186 = vpop.f32.mrb[0].mxu0
  %v2187 = vadd.f32 %v2146, %v2186
  %v2188 = vpop.f32.mrb[0].mxu0
  %v2189 = vadd.f32 %v2148, %v2188
  %v2190 = vpop.f32.mrb[0].mxu0
  %v2191 = vpop.f32.mrb[0].mxu0
  %2192 = vdwg.mxu0
  %v2193 = vrot.slane %v1982, 4
  %v2194 = vadd.f32 %v1982, %v2193
  %v2195 = vrot.slane %v2194, 2
  %v2196 = vadd.f32 %v2194, %v2195
  %v2197 = vrot.slane %v2196, 1
  %v2198 = vadd.f32 %v2196, %v2197
  %v2199 = vadd.f32 %v2198, 0.0
  %v2200 = vrot.slane %v1984, 4
  %v2201 = vadd.f32 %v1984, %v2200
  %v2202 = vrot.slane %v2201, 2
  %v2203 = vadd.f32 %v2201, %v2202
  %v2204 = vrot.slane %v2203, 1
  %v2205 = vadd.f32 %v2203, %v2204
  %v2206 = vadd.f32 %v2199, %v2205
  %v2207 = vrot.slane %v2187, 4
  %v2208 = vadd.f32 %v2187, %v2207
  %v2209 = vrot.slane %v2208, 2
  %v2210 = vadd.f32 %v2208, %v2209
  %v2211 = vrot.slane %v2210, 1
  %v2212 = vadd.f32 %v2210, %v2211
  %v2213 = vadd.f32 %v2206, %v2212
  %v2214 = vrot.slane %v2189, 4
  %v2215 = vadd.f32 %v2189, %v2214
  %v2216 = vrot.slane %v2215, 2
  %v2217 = vadd.f32 %v2215, %v2216
  %v2218 = vrot.slane %v2217, 1
  %v2219 = vadd.f32 %v2217, %v2218
  %v2220 = vadd.f32 %v2213, %v2219
  %v2221 = vmul.f32 %v2220, 0.03125
  %v2222 = vsub.f32 %v1982, %v2221
  %v2223 = vmul.f32 %v2222, %v2222
  %v2224 = vrot.slane %v2223, 4
  %v2225 = vadd.f32 %v2223, %v2224
  %v2226 = vrot.slane %v2225, 2
  %v2227 = vadd.f32 %v2225, %v2226
  %v2228 = vrot.slane %v2227, 1
  %v2229 = vadd.f32 %v2227, %v2228
  %v2230 = vadd.f32 %v2229, 0.0
  %v2231 = vsub.f32 %v1984, %v2221
  %v2232 = vmul.f32 %v2231, %v2231
  %v2233 = vrot.slane %v2232, 4
  %v2234 = vadd.f32 %v2232, %v2233
  %v2235 = vrot.slane %v2234, 2
  %v2236 = vadd.f32 %v2234, %v2235
  %v2237 = vrot.slane %v2236, 1
  %v2238 = vadd.f32 %v2236, %v2237
  %v2239 = vadd.f32 %v2230, %v2238
  %v2240 = vsub.f32 %v2187, %v2221
  %v2241 = vmul.f32 %v2240, %v2240
  %v2242 = vrot.slane %v2241, 4
  %v2243 = vadd.f32 %v2241, %v2242
  %v2244 = vrot.slane %v2243, 2
  %v2245 = vadd.f32 %v2243, %v2244
  %v2246 = vrot.slane %v2245, 1
  %v2247 = vadd.f32 %v2245, %v2246
  %v2248 = vadd.f32 %v2239, %v2247
  %v2249 = vsub.f32 %v2189, %v2221
  %v2250 = vmul.f32 %v2249, %v2249
  %v2251 = vrot.slane %v2250, 4
  %v2252 = vadd.f32 %v2250, %v2251
  %v2253 = vrot.slane %v2252, 2
  %v2254 = vadd.f32 %v2252, %v2253
  %v2255 = vrot.slane %v2254, 1
  %v2256 = vadd.f32 %v2254, %v2255
  %v2257 = vadd.f32 %v2248, %v2256
  %v2258 = vmul.f32 %v2257, 0.03125
  %v2259 = vld [vmem:[%s2] sm:$0x1]
  %v2260 = vadd.f32 %v2258, 1e-05
  %v2261 = vrsqrt.pop %v2260
  %v2262 = vmul.f32 %v2259, %v2261
  %v2263 = vld [vmem:[%s3] sm:$0x1]
  %v2264 = vmul.f32 %v2221, %v2262
  %v2265 = vsub.f32 %v2263, %v2264
  %v2266 = vlaneseq
  %v2267 = vshrl.u32 %v2266, 7
  %v2268 = vsub.s32 0, %v2267
  %v2269 = vrot.slane %v2262, %v2268
  %v2270 = vmul.f32 %v1982, %v2269
  %v2271 = vmul.f32 %v1984, %v2269
  %v2272 = vmul.f32 %v2187, %v2269
  %v2273 = vmul.f32 %v2189, %v2269
  %v2274 = vlaneseq
  %v2275 = vshrl.u32 %v2274, 7
  %v2276 = vsub.s32 0, %v2275
  %v2277 = vrot.slane %v2265, %v2276
  %v2278 = vadd.f32 %v2270, %v2277
  %v2279 = vadd.f32 %v2271, %v2277
  %v2280 = vadd.f32 %v2272, %v2277
  %v2281 = vadd.f32 %v2273, %v2277
  %v2282 = vmax.f32 %v2278, 0.0
  %v2283 = vmax.f32 %v2279, 0.0
  %v2284 = vmax.f32 %v2280, 0.0
  %v2285 = vmax.f32 %v2281, 0.0
  %v2286 = vpack.c.bf16 %v2282, %v2282
  %v2287 = vpack.c.bf16 %v2283, %v2283
  %v2288 = vpack.c.bf16 %v2284, %v2284
  %v2289 = vpack.c.bf16 %v2285, %v2285
  %v2294 = vunpack.c.l.b16 %v2286
  %v2295 = vunpack.c.l.b16 %v2287
  %v2296 = vunpack.c.l.b16 %v2288
  %v2297 = vunpack.c.l.b16 %v2289
  %v2298 = vpack.c.b16 %v2295, %v2294
  %v2299 = vpack.c.b16 %v2297, %v2296
  %2302 = vst [vmem:[%s4] sm:$0xff] %v2298
  %2303 = vst [vmem:[%s4 + $0x8] sm:$0xff] %v2299
  // Predicated region
  $region18: #{simple_seg_forward.9} parent=0 // pred_check
    _
  $region19: #{simple_seg_forward.9} parent=0 // pred_check_branch
    %2305 = sbr.rel (0) target = $region21
  $region20: #{simple_seg_forward.9} parent=0 // pred_region
    _
  $region21: #{simple_seg_forward.9} parent=0 // pred_fallthru
    _
  // Predicated region
  $region22: #{simple_seg_forward.9} parent=0 // pred_check
    _
  $region23: #{simple_seg_forward.9} parent=0 // pred_check_branch
    %2307 = sbr.rel (0) target = $region25
  $region24: #{simple_seg_forward.9} parent=0 // pred_region
    _
  $region25: #{simple_seg_forward.9} parent=0 // pred_fallthru
    _

// kernel: simple_seg_forward.10
$region0: #{simple_seg_forward.10}
  #allocation0 [shape = 'u32[]', space=smem, size = 0x4, offset = 0x4, fixed_abs, tag = 'smem constant byte address 0x4 - core index']
  #allocation1 [shape = 'u32[144,128]{1,0:T(1,128)}', space=vmem, size = 0x12000, scoped, tag = 'internal scratch']
  %s0 = inlined_call_operand.vmem [shape: bf16[32,576], index: 0, kind: input, shape index: {}]
  %s1 = inlined_call_operand.vmem [shape: bf16[576,512], index: 1, kind: input, shape index: {}]
  %s2 = inlined_call_operand.vmem [shape: f32[1,128], index: 2, kind: input, shape index: {}]
  %s3 = inlined_call_operand.vmem [shape: f32[1,128], index: 3, kind: input, shape index: {}]
  %s4 = inlined_call_operand.vmem [shape: bf16[32,512], index: 4, kind: output, shape index: {}]
  %s5 = sld [smem:[#allocation0]]
  $region26: #{simple_seg_forward.10} parent=0
    _
  %s7 = ssub.s32 1, %s5
  %s8 = scalar_select 0, %s7, %s5
  // Predicated region
  $region2: #{simple_seg_forward.10} parent=0 // pred_check
    _
  $region3: #{simple_seg_forward.10} parent=0 // pred_check_branch
    %10 = sbr.rel (0) target = $region5
  $region4: #{simple_seg_forward.10} parent=0 // pred_region
    _
  $region5: #{simple_seg_forward.10} parent=0 // pred_fallthru
    _
  // Predicated region
  $region6: #{simple_seg_forward.10} parent=0 // pred_check
    _
  $region7: #{simple_seg_forward.10} parent=0 // pred_check_branch
    %12 = sbr.rel (0) target = $region9
  $region8: #{simple_seg_forward.10} parent=0 // pred_region
    _
  $region9: #{simple_seg_forward.10} parent=0 // pred_fallthru
    _
  // Predicated region
  $region10: #{simple_seg_forward.10} parent=0 // pred_check
    _
  $region11: #{simple_seg_forward.10} parent=0 // pred_check_branch
    %14 = sbr.rel (0) target = $region13
  $region12: #{simple_seg_forward.10} parent=0 // pred_region
    _
  $region13: #{simple_seg_forward.10} parent=0 // pred_fallthru
    _
  // Predicated region
  $region14: #{simple_seg_forward.10} parent=0 // pred_check
    _
  $region15: #{simple_seg_forward.10} parent=0 // pred_check_branch
    %16 = sbr.rel (0) target = $region17
  $region16: #{simple_seg_forward.10} parent=0 // pred_region
    _
  $region17: #{simple_seg_forward.10} parent=0 // pred_fallthru
    _
  %v18 = vld [vmem:[%s0] sm:$0xff]
  %v19 = vld [vmem:[%s0 + $0x8] sm:$0xff]
  %v20 = vld [vmem:[%s0 + $0x10] sm:$0xf]
  %v21 = vld [vmem:[%s0 + $0x14] sm:$0xff]
  %v22 = vld [vmem:[%s0 + $0x1c] sm:$0xff]
  %v23 = vld [vmem:[%s0 + $0x24] sm:$0xf]
  %v24 = vld [vmem:[%s0 + $0x28] sm:$0xff]
  %v25 = vld [vmem:[%s0 + $0x30] sm:$0xff]
  %v26 = vld [vmem:[%s0 + $0x38] sm:$0xf]
  %v27 = vld [vmem:[%s0 + $0x3c] sm:$0xff]
  %v28 = vld [vmem:[%s0 + $0x44] sm:$0xff]
  %v29 = vld [vmem:[%s0 + $0x4c] sm:$0xf]
  %v30 = vld [vmem:[%s1] sm:$0xff]
  %v31 = vld [vmem:[%s1 + $0x8] sm:$0xff]
  %v32 = vld [vmem:[%s1 + $0x10] sm:$0xff]
  %v33 = vld [vmem:[%s1 + $0x18] sm:$0xff]
  %v34 = vld [vmem:[%s1 + $0x20] sm:$0xff]
  %v35 = vld [vmem:[%s1 + $0x28] sm:$0xff]
  %v36 = vld [vmem:[%s1 + $0x30] sm:$0xff]
  %v37 = vld [vmem:[%s1 + $0x38] sm:$0xff]
  %v38 = vld [vmem:[%s1 + $0x40] sm:$0xff]
  %v39 = vld [vmem:[%s1 + $0x48] sm:$0xff]
  %v40 = vld [vmem:[%s1 + $0x50] sm:$0xff]
  %v41 = vld [vmem:[%s1 + $0x58] sm:$0xff]
  %v42 = vld [vmem:[%s1 + $0x60] sm:$0xff]
  %v43 = vld [vmem:[%s1 + $0x68] sm:$0xff]
  %v44 = vld [vmem:[%s1 + $0x70] sm:$0xff]
  %v45 = vld [vmem:[%s1 + $0x78] sm:$0xff]
  %v46 = vld [vmem:[%s1 + $0x80] sm:$0xff]
  %v47 = vld [vmem:[%s1 + $0x88] sm:$0xff]
  %v48 = vld [vmem:[%s1 + $0x90] sm:$0xff]
  %v49 = vld [vmem:[%s1 + $0x98] sm:$0xff]
  %v50 = vld [vmem:[%s1 + $0xa0] sm:$0xff]
  %v51 = vld [vmem:[%s1 + $0xa8] sm:$0xff]
  %v52 = vld [vmem:[%s1 + $0xb0] sm:$0xff]
  %v53 = vld [vmem:[%s1 + $0xb8] sm:$0xff]
  %v54 = vld [vmem:[%s1 + $0xc0] sm:$0xff]
  %v55 = vld [vmem:[%s1 + $0xc8] sm:$0xff]
  %v56 = vld [vmem:[%s1 + $0xd0] sm:$0xff]
  %v57 = vld [vmem:[%s1 + $0xd8] sm:$0xff]
  %v58 = vld [vmem:[%s1 + $0xe0] sm:$0xff]
  %v59 = vld [vmem:[%s1 + $0xe8] sm:$0xff]
  %v60 = vld [vmem:[%s1 + $0xf0] sm:$0xff]
  %v61 = vld [vmem:[%s1 + $0xf8] sm:$0xff]
  %v62 = vld [vmem:[%s1 + $0x100] sm:$0xff]
  %v63 = vld [vmem:[%s1 + $0x108] sm:$0xff]
  %v64 = vld [vmem:[%s1 + $0x110] sm:$0xff]
  %v65 = vld [vmem:[%s1 + $0x118] sm:$0xff]
  %v66 = vld [vmem:[%s1 + $0x120] sm:$0xff]
  %v67 = vld [vmem:[%s1 + $0x128] sm:$0xff]
  %v68 = vld [vmem:[%s1 + $0x130] sm:$0xff]
  %v69 = vld [vmem:[%s1 + $0x138] sm:$0xff]
  %v70 = vld [vmem:[%s1 + $0x140] sm:$0xff]
  %v71 = vld [vmem:[%s1 + $0x148] sm:$0xff]
  %v72 = vld [vmem:[%s1 + $0x150] sm:$0xff]
  %v73 = vld [vmem:[%s1 + $0x158] sm:$0xff]
  %v74 = vld [vmem:[%s1 + $0x160] sm:$0xff]
  %v75 = vld [vmem:[%s1 + $0x168] sm:$0xff]
  %v76 = vld [vmem:[%s1 + $0x170] sm:$0xff]
  %v77 = vld [vmem:[%s1 + $0x178] sm:$0xff]
  %v78 = vld [vmem:[%s1 + $0x180] sm:$0xff]
  %v79 = vld [vmem:[%s1 + $0x188] sm:$0xff]
  %v80 = vld [vmem:[%s1 + $0x190] sm:$0xff]
  %v81 = vld [vmem:[%s1 + $0x198] sm:$0xff]
  %v82 = vld [vmem:[%s1 + $0x1a0] sm:$0xff]
  %v83 = vld [vmem:[%s1 + $0x1a8] sm:$0xff]
  %v84 = vld [vmem:[%s1 + $0x1b0] sm:$0xff]
  %v85 = vld [vmem:[%s1 + $0x1b8] sm:$0xff]
  %v86 = vld [vmem:[%s1 + $0x1c0] sm:$0xff]
  %v87 = vld [vmem:[%s1 + $0x1c8] sm:$0xff]
  %v88 = vld [vmem:[%s1 + $0x1d0] sm:$0xff]
  %v89 = vld [vmem:[%s1 + $0x1d8] sm:$0xff]
  %v90 = vld [vmem:[%s1 + $0x1e0] sm:$0xff]
  %v91 = vld [vmem:[%s1 + $0x1e8] sm:$0xff]
  %v92 = vld [vmem:[%s1 + $0x1f0] sm:$0xff]
  %v93 = vld [vmem:[%s1 + $0x1f8] sm:$0xff]
  %v94 = vld [vmem:[%s1 + $0x200] sm:$0xff]
  %v95 = vld [vmem:[%s1 + $0x208] sm:$0xff]
  %v96 = vld [vmem:[%s1 + $0x210] sm:$0xff]
  %v97 = vld [vmem:[%s1 + $0x218] sm:$0xff]
  %v98 = vld [vmem:[%s1 + $0x220] sm:$0xff]
  %v99 = vld [vmem:[%s1 + $0x228] sm:$0xff]
  %v100 = vld [vmem:[%s1 + $0x230] sm:$0xff]
  %v101 = vld [vmem:[%s1 + $0x238] sm:$0xff]
  %v102 = vld [vmem:[%s1 + $0x240] sm:$0xff]
  %v103 = vld [vmem:[%s1 + $0x248] sm:$0xff]
  %v104 = vld [vmem:[%s1 + $0x250] sm:$0xff]
  %v105 = vld [vmem:[%s1 + $0x258] sm:$0xff]
  %v106 = vld [vmem:[%s1 + $0x260] sm:$0xff]
  %v107 = vld [vmem:[%s1 + $0x268] sm:$0xff]
  %v108 = vld [vmem:[%s1 + $0x270] sm:$0xff]
  %v109 = vld [vmem:[%s1 + $0x278] sm:$0xff]
  %v110 = vld [vmem:[%s1 + $0x280] sm:$0xff]
  %v111 = vld [vmem:[%s1 + $0x288] sm:$0xff]
  %v112 = vld [vmem:[%s1 + $0x290] sm:$0xff]
  %v113 = vld [vmem:[%s1 + $0x298] sm:$0xff]
  %v114 = vld [vmem:[%s1 + $0x2a0] sm:$0xff]
  %v115 = vld [vmem:[%s1 + $0x2a8] sm:$0xff]
  %v116 = vld [vmem:[%s1 + $0x2b0] sm:$0xff]
  %v117 = vld [vmem:[%s1 + $0x2b8] sm:$0xff]
  %v118 = vld [vmem:[%s1 + $0x2c0] sm:$0xff]
  %v119 = vld [vmem:[%s1 + $0x2c8] sm:$0xff]
  %v120 = vld [vmem:[%s1 + $0x2d0] sm:$0xff]
  %v121 = vld [vmem:[%s1 + $0x2d8] sm:$0xff]
  %v122 = vld [vmem:[%s1 + $0x2e0] sm:$0xff]
  %v123 = vld [vmem:[%s1 + $0x2e8] sm:$0xff]
  %v124 = vld [vmem:[%s1 + $0x2f0] sm:$0xff]
  %v125 = vld [vmem:[%s1 + $0x2f8] sm:$0xff]
  %v126 = vld [vmem:[%s1 + $0x300] sm:$0xff]
  %v127 = vld [vmem:[%s1 + $0x308] sm:$0xff]
  %v128 = vld [vmem:[%s1 + $0x310] sm:$0xff]
  %v129 = vld [vmem:[%s1 + $0x318] sm:$0xff]
  %v130 = vld [vmem:[%s1 + $0x320] sm:$0xff]
  %v131 = vld [vmem:[%s1 + $0x328] sm:$0xff]
  %v132 = vld [vmem:[%s1 + $0x330] sm:$0xff]
  %v133 = vld [vmem:[%s1 + $0x338] sm:$0xff]
  %v134 = vld [vmem:[%s1 + $0x340] sm:$0xff]
  %v135 = vld [vmem:[%s1 + $0x348] sm:$0xff]
  %v136 = vld [vmem:[%s1 + $0x350] sm:$0xff]
  %v137 = vld [vmem:[%s1 + $0x358] sm:$0xff]
  %v138 = vld [vmem:[%s1 + $0x360] sm:$0xff]
  %v139 = vld [vmem:[%s1 + $0x368] sm:$0xff]
  %v140 = vld [vmem:[%s1 + $0x370] sm:$0xff]
  %v141 = vld [vmem:[%s1 + $0x378] sm:$0xff]
  %v142 = vld [vmem:[%s1 + $0x380] sm:$0xff]
  %v143 = vld [vmem:[%s1 + $0x388] sm:$0xff]
  %v144 = vld [vmem:[%s1 + $0x390] sm:$0xff]
  %v145 = vld [vmem:[%s1 + $0x398] sm:$0xff]
  %v146 = vld [vmem:[%s1 + $0x3a0] sm:$0xff]
  %v147 = vld [vmem:[%s1 + $0x3a8] sm:$0xff]
  %v148 = vld [vmem:[%s1 + $0x3b0] sm:$0xff]
  %v149 = vld [vmem:[%s1 + $0x3b8] sm:$0xff]
  %v150 = vld [vmem:[%s1 + $0x3c0] sm:$0xff]
  %v151 = vld [vmem:[%s1 + $0x3c8] sm:$0xff]
  %v152 = vld [vmem:[%s1 + $0x3d0] sm:$0xff]
  %v153 = vld [vmem:[%s1 + $0x3d8] sm:$0xff]
  %v154 = vld [vmem:[%s1 + $0x3e0] sm:$0xff]
  %v155 = vld [vmem:[%s1 + $0x3e8] sm:$0xff]
  %v156 = vld [vmem:[%s1 + $0x3f0] sm:$0xff]
  %v157 = vld [vmem:[%s1 + $0x3f8] sm:$0xff]
  %v158 = vld [vmem:[%s1 + $0x400] sm:$0xff]
  %v159 = vld [vmem:[%s1 + $0x408] sm:$0xff]
  %v160 = vld [vmem:[%s1 + $0x410] sm:$0xff]
  %v161 = vld [vmem:[%s1 + $0x418] sm:$0xff]
  %v162 = vld [vmem:[%s1 + $0x420] sm:$0xff]
  %v163 = vld [vmem:[%s1 + $0x428] sm:$0xff]
  %v164 = vld [vmem:[%s1 + $0x430] sm:$0xff]
  %v165 = vld [vmem:[%s1 + $0x438] sm:$0xff]
  %v166 = vld [vmem:[%s1 + $0x440] sm:$0xff]
  %v167 = vld [vmem:[%s1 + $0x448] sm:$0xff]
  %v168 = vld [vmem:[%s1 + $0x450] sm:$0xff]
  %v169 = vld [vmem:[%s1 + $0x458] sm:$0xff]
  %v170 = vld [vmem:[%s1 + $0x460] sm:$0xff]
  %v171 = vld [vmem:[%s1 + $0x468] sm:$0xff]
  %v172 = vld [vmem:[%s1 + $0x470] sm:$0xff]
  %v173 = vld [vmem:[%s1 + $0x478] sm:$0xff]
  %v186 = vunpack.c.l.b16 %v18
  %v187 = vunpack.c.h.b16 %v18
  %v188 = vunpack.c.l.b16 %v19
  %v189 = vunpack.c.h.b16 %v19
  %v190 = vunpack.c.l.b16 %v20
  %v191 = vunpack.c.l.b16 %v21
  %v192 = vunpack.c.h.b16 %v21
  %v193 = vunpack.c.l.b16 %v22
  %v194 = vunpack.c.h.b16 %v22
  %v195 = vunpack.c.l.b16 %v23
  %v196 = vunpack.c.l.b16 %v24
  %v197 = vunpack.c.h.b16 %v24
  %v198 = vunpack.c.l.b16 %v25
  %v199 = vunpack.c.h.b16 %v25
  %v200 = vunpack.c.l.b16 %v26
  %v201 = vunpack.c.l.b16 %v27
  %v202 = vunpack.c.h.b16 %v27
  %v203 = vunpack.c.l.b16 %v28
  %v204 = vunpack.c.h.b16 %v28
  %v205 = vunpack.c.l.b16 %v29
  %v206 = vpack.c.b16 %v191, %v186
  %v207 = vpack.c.b16 %v192, %v187
  %v208 = vpack.c.b16 %v193, %v188
  %v209 = vpack.c.b16 %v194, %v189
  %v210 = vpack.c.b16 %v195, %v190
  %v211 = vpack.c.b16 %v201, %v196
  %v212 = vpack.c.b16 %v202, %v197
  %v213 = vpack.c.b16 %v203, %v198
  %v214 = vpack.c.b16 %v204, %v199
  %v215 = vpack.c.b16 %v205, %v200
  %v368 = vunpack.c.l.b16 %v30
  %v369 = vunpack.c.h.b16 %v30
  %v370 = vunpack.c.l.b16 %v31
  %v371 = vunpack.c.h.b16 %v31
  %v372 = vunpack.c.l.b16 %v32
  %v373 = vunpack.c.h.b16 %v32
  %v374 = vunpack.c.l.b16 %v33
  %v375 = vunpack.c.h.b16 %v33
  %v376 = vunpack.c.l.b16 %v34
  %v377 = vunpack.c.h.b16 %v34
  %v378 = vunpack.c.l.b16 %v35
  %v379 = vunpack.c.h.b16 %v35
  %v380 = vunpack.c.l.b16 %v36
  %v381 = vunpack.c.h.b16 %v36
  %v382 = vunpack.c.l.b16 %v37
  %v383 = vunpack.c.h.b16 %v37
  %v384 = vunpack.c.l.b16 %v38
  %v385 = vunpack.c.h.b16 %v38
  %v386 = vunpack.c.l.b16 %v39
  %v387 = vunpack.c.h.b16 %v39
  %v388 = vunpack.c.l.b16 %v40
  %v389 = vunpack.c.h.b16 %v40
  %v390 = vunpack.c.l.b16 %v41
  %v391 = vunpack.c.h.b16 %v41
  %v392 = vunpack.c.l.b16 %v42
  %v393 = vunpack.c.h.b16 %v42
  %v394 = vunpack.c.l.b16 %v43
  %v395 = vunpack.c.h.b16 %v43
  %v396 = vunpack.c.l.b16 %v44
  %v397 = vunpack.c.h.b16 %v44
  %v398 = vunpack.c.l.b16 %v45
  %v399 = vunpack.c.h.b16 %v45
  %v400 = vunpack.c.l.b16 %v46
  %v401 = vunpack.c.h.b16 %v46
  %v402 = vunpack.c.l.b16 %v47
  %v403 = vunpack.c.h.b16 %v47
  %v404 = vunpack.c.l.b16 %v48
  %v405 = vunpack.c.h.b16 %v48
  %v406 = vunpack.c.l.b16 %v49
  %v407 = vunpack.c.h.b16 %v49
  %v408 = vunpack.c.l.b16 %v50
  %v409 = vunpack.c.h.b16 %v50
  %v410 = vunpack.c.l.b16 %v51
  %v411 = vunpack.c.h.b16 %v51
  %v412 = vunpack.c.l.b16 %v52
  %v413 = vunpack.c.h.b16 %v52
  %v414 = vunpack.c.l.b16 %v53
  %v415 = vunpack.c.h.b16 %v53
  %v416 = vunpack.c.l.b16 %v54
  %v417 = vunpack.c.h.b16 %v54
  %v418 = vunpack.c.l.b16 %v55
  %v419 = vunpack.c.h.b16 %v55
  %v420 = vunpack.c.l.b16 %v56
  %v421 = vunpack.c.h.b16 %v56
  %v422 = vunpack.c.l.b16 %v57
  %v423 = vunpack.c.h.b16 %v57
  %v424 = vunpack.c.l.b16 %v58
  %v425 = vunpack.c.h.b16 %v58
  %v426 = vunpack.c.l.b16 %v59
  %v427 = vunpack.c.h.b16 %v59
  %v428 = vunpack.c.l.b16 %v60
  %v429 = vunpack.c.h.b16 %v60
  %v430 = vunpack.c.l.b16 %v61
  %v431 = vunpack.c.h.b16 %v61
  %v432 = vunpack.c.l.b16 %v62
  %v433 = vunpack.c.h.b16 %v62
  %v434 = vunpack.c.l.b16 %v63
  %v435 = vunpack.c.h.b16 %v63
  %v436 = vunpack.c.l.b16 %v64
  %v437 = vunpack.c.h.b16 %v64
  %v438 = vunpack.c.l.b16 %v65
  %v439 = vunpack.c.h.b16 %v65
  %v440 = vunpack.c.l.b16 %v66
  %v441 = vunpack.c.h.b16 %v66
  %v442 = vunpack.c.l.b16 %v67
  %v443 = vunpack.c.h.b16 %v67
  %v444 = vunpack.c.l.b16 %v68
  %v445 = vunpack.c.h.b16 %v68
  %v446 = vunpack.c.l.b16 %v69
  %v447 = vunpack.c.h.b16 %v69
  %v448 = vunpack.c.l.b16 %v70
  %v449 = vunpack.c.h.b16 %v70
  %v450 = vunpack.c.l.b16 %v71
  %v451 = vunpack.c.h.b16 %v71
  %v452 = vunpack.c.l.b16 %v72
  %v453 = vunpack.c.h.b16 %v72
  %v454 = vunpack.c.l.b16 %v73
  %v455 = vunpack.c.h.b16 %v73
  %v456 = vunpack.c.l.b16 %v74
  %v457 = vunpack.c.h.b16 %v74
  %v458 = vunpack.c.l.b16 %v75
  %v459 = vunpack.c.h.b16 %v75
  %v460 = vunpack.c.l.b16 %v76
  %v461 = vunpack.c.h.b16 %v76
  %v462 = vunpack.c.l.b16 %v77
  %v463 = vunpack.c.h.b16 %v77
  %v464 = vunpack.c.l.b16 %v78
  %v465 = vunpack.c.h.b16 %v78
  %v466 = vunpack.c.l.b16 %v79
  %v467 = vunpack.c.h.b16 %v79
  %v468 = vunpack.c.l.b16 %v80
  %v469 = vunpack.c.h.b16 %v80
  %v470 = vunpack.c.l.b16 %v81
  %v471 = vunpack.c.h.b16 %v81
  %v472 = vunpack.c.l.b16 %v82
  %v473 = vunpack.c.h.b16 %v82
  %v474 = vunpack.c.l.b16 %v83
  %v475 = vunpack.c.h.b16 %v83
  %v476 = vunpack.c.l.b16 %v84
  %v477 = vunpack.c.h.b16 %v84
  %v478 = vunpack.c.l.b16 %v85
  %v479 = vunpack.c.h.b16 %v85
  %v480 = vunpack.c.l.b16 %v86
  %v481 = vunpack.c.h.b16 %v86
  %v482 = vunpack.c.l.b16 %v87
  %v483 = vunpack.c.h.b16 %v87
  %v484 = vunpack.c.l.b16 %v88
  %v485 = vunpack.c.h.b16 %v88
  %v486 = vunpack.c.l.b16 %v89
  %v487 = vunpack.c.h.b16 %v89
  %v488 = vunpack.c.l.b16 %v90
  %v489 = vunpack.c.h.b16 %v90
  %v490 = vunpack.c.l.b16 %v91
  %v491 = vunpack.c.h.b16 %v91
  %v492 = vunpack.c.l.b16 %v92
  %v493 = vunpack.c.h.b16 %v92
  %v494 = vunpack.c.l.b16 %v93
  %v495 = vunpack.c.h.b16 %v93
  %v496 = vunpack.c.l.b16 %v94
  %v497 = vunpack.c.h.b16 %v94
  %v498 = vunpack.c.l.b16 %v95
  %v499 = vunpack.c.h.b16 %v95
  %v500 = vunpack.c.l.b16 %v96
  %v501 = vunpack.c.h.b16 %v96
  %v502 = vunpack.c.l.b16 %v97
  %v503 = vunpack.c.h.b16 %v97
  %v504 = vunpack.c.l.b16 %v98
  %v505 = vunpack.c.h.b16 %v98
  %v506 = vunpack.c.l.b16 %v99
  %v507 = vunpack.c.h.b16 %v99
  %v508 = vunpack.c.l.b16 %v100
  %v509 = vunpack.c.h.b16 %v100
  %v510 = vunpack.c.l.b16 %v101
  %v511 = vunpack.c.h.b16 %v101
  %v512 = vunpack.c.l.b16 %v102
  %v513 = vunpack.c.h.b16 %v102
  %v514 = vunpack.c.l.b16 %v103
  %v515 = vunpack.c.h.b16 %v103
  %v516 = vunpack.c.l.b16 %v104
  %v517 = vunpack.c.h.b16 %v104
  %v518 = vunpack.c.l.b16 %v105
  %v519 = vunpack.c.h.b16 %v105
  %v520 = vunpack.c.l.b16 %v106
  %v521 = vunpack.c.h.b16 %v106
  %v522 = vunpack.c.l.b16 %v107
  %v523 = vunpack.c.h.b16 %v107
  %v524 = vunpack.c.l.b16 %v108
  %v525 = vunpack.c.h.b16 %v108
  %v526 = vunpack.c.l.b16 %v109
  %v527 = vunpack.c.h.b16 %v109
  %v528 = vunpack.c.l.b16 %v110
  %v529 = vunpack.c.h.b16 %v110
  %v530 = vunpack.c.l.b16 %v111
  %v531 = vunpack.c.h.b16 %v111
  %v532 = vunpack.c.l.b16 %v112
  %v533 = vunpack.c.h.b16 %v112
  %v534 = vunpack.c.l.b16 %v113
  %v535 = vunpack.c.h.b16 %v113
  %v536 = vunpack.c.l.b16 %v114
  %v537 = vunpack.c.h.b16 %v114
  %v538 = vunpack.c.l.b16 %v115
  %v539 = vunpack.c.h.b16 %v115
  %v540 = vunpack.c.l.b16 %v116
  %v541 = vunpack.c.h.b16 %v116
  %v542 = vunpack.c.l.b16 %v117
  %v543 = vunpack.c.h.b16 %v117
  %v544 = vunpack.c.l.b16 %v118
  %v545 = vunpack.c.h.b16 %v118
  %v546 = vunpack.c.l.b16 %v119
  %v547 = vunpack.c.h.b16 %v119
  %v548 = vunpack.c.l.b16 %v120
  %v549 = vunpack.c.h.b16 %v120
  %v550 = vunpack.c.l.b16 %v121
  %v551 = vunpack.c.h.b16 %v121
  %v552 = vunpack.c.l.b16 %v122
  %v553 = vunpack.c.h.b16 %v122
  %v554 = vunpack.c.l.b16 %v123
  %v555 = vunpack.c.h.b16 %v123
  %v556 = vunpack.c.l.b16 %v124
  %v557 = vunpack.c.h.b16 %v124
  %v558 = vunpack.c.l.b16 %v125
  %v559 = vunpack.c.h.b16 %v125
  %v560 = vunpack.c.l.b16 %v126
  %v561 = vunpack.c.h.b16 %v126
  %v562 = vunpack.c.l.b16 %v127
  %v563 = vunpack.c.h.b16 %v127
  %v564 = vunpack.c.l.b16 %v128
  %v565 = vunpack.c.h.b16 %v128
  %v566 = vunpack.c.l.b16 %v129
  %v567 = vunpack.c.h.b16 %v129
  %v568 = vunpack.c.l.b16 %v130
  %v569 = vunpack.c.h.b16 %v130
  %v570 = vunpack.c.l.b16 %v131
  %v571 = vunpack.c.h.b16 %v131
  %v572 = vunpack.c.l.b16 %v132
  %v573 = vunpack.c.h.b16 %v132
  %v574 = vunpack.c.l.b16 %v133
  %v575 = vunpack.c.h.b16 %v133
  %v576 = vunpack.c.l.b16 %v134
  %v577 = vunpack.c.h.b16 %v134
  %v578 = vunpack.c.l.b16 %v135
  %v579 = vunpack.c.h.b16 %v135
  %v580 = vunpack.c.l.b16 %v136
  %v581 = vunpack.c.h.b16 %v136
  %v582 = vunpack.c.l.b16 %v137
  %v583 = vunpack.c.h.b16 %v137
  %v584 = vunpack.c.l.b16 %v138
  %v585 = vunpack.c.h.b16 %v138
  %v586 = vunpack.c.l.b16 %v139
  %v587 = vunpack.c.h.b16 %v139
  %v588 = vunpack.c.l.b16 %v140
  %v589 = vunpack.c.h.b16 %v140
  %v590 = vunpack.c.l.b16 %v141
  %v591 = vunpack.c.h.b16 %v141
  %v592 = vunpack.c.l.b16 %v142
  %v593 = vunpack.c.h.b16 %v142
  %v594 = vunpack.c.l.b16 %v143
  %v595 = vunpack.c.h.b16 %v143
  %v596 = vunpack.c.l.b16 %v144
  %v597 = vunpack.c.h.b16 %v144
  %v598 = vunpack.c.l.b16 %v145
  %v599 = vunpack.c.h.b16 %v145
  %v600 = vunpack.c.l.b16 %v146
  %v601 = vunpack.c.h.b16 %v146
  %v602 = vunpack.c.l.b16 %v147
  %v603 = vunpack.c.h.b16 %v147
  %v604 = vunpack.c.l.b16 %v148
  %v605 = vunpack.c.h.b16 %v148
  %v606 = vunpack.c.l.b16 %v149
  %v607 = vunpack.c.h.b16 %v149
  %v608 = vunpack.c.l.b16 %v150
  %v609 = vunpack.c.h.b16 %v150
  %v610 = vunpack.c.l.b16 %v151
  %v611 = vunpack.c.h.b16 %v151
  %v612 = vunpack.c.l.b16 %v152
  %v613 = vunpack.c.h.b16 %v152
  %v614 = vunpack.c.l.b16 %v153
  %v615 = vunpack.c.h.b16 %v153
  %v616 = vunpack.c.l.b16 %v154
  %v617 = vunpack.c.h.b16 %v154
  %v618 = vunpack.c.l.b16 %v155
  %v619 = vunpack.c.h.b16 %v155
  %v620 = vunpack.c.l.b16 %v156
  %v621 = vunpack.c.h.b16 %v156
  %v622 = vunpack.c.l.b16 %v157
  %v623 = vunpack.c.h.b16 %v157
  %v624 = vunpack.c.l.b16 %v158
  %v625 = vunpack.c.h.b16 %v158
  %v626 = vunpack.c.l.b16 %v159
  %v627 = vunpack.c.h.b16 %v159
  %v628 = vunpack.c.l.b16 %v160
  %v629 = vunpack.c.h.b16 %v160
  %v630 = vunpack.c.l.b16 %v161
  %v631 = vunpack.c.h.b16 %v161
  %v632 = vunpack.c.l.b16 %v162
  %v633 = vunpack.c.h.b16 %v162
  %v634 = vunpack.c.l.b16 %v163
  %v635 = vunpack.c.h.b16 %v163
  %v636 = vunpack.c.l.b16 %v164
  %v637 = vunpack.c.h.b16 %v164
  %v638 = vunpack.c.l.b16 %v165
  %v639 = vunpack.c.h.b16 %v165
  %v640 = vunpack.c.l.b16 %v166
  %v641 = vunpack.c.h.b16 %v166
  %v642 = vunpack.c.l.b16 %v167
  %v643 = vunpack.c.h.b16 %v167
  %v644 = vunpack.c.l.b16 %v168
  %v645 = vunpack.c.h.b16 %v168
  %v646 = vunpack.c.l.b16 %v169
  %v647 = vunpack.c.h.b16 %v169
  %v648 = vunpack.c.l.b16 %v170
  %v649 = vunpack.c.h.b16 %v170
  %v650 = vunpack.c.l.b16 %v171
  %v651 = vunpack.c.h.b16 %v171
  %v652 = vunpack.c.l.b16 %v172
  %v653 = vunpack.c.h.b16 %v172
  %v654 = vunpack.c.l.b16 %v173
  %v655 = vunpack.c.h.b16 %v173
  %v656 = vpack.c.b16 %v372, %v368
  %v657 = vpack.c.b16 %v373, %v369
  %v658 = vpack.c.b16 %v374, %v370
  %v659 = vpack.c.b16 %v375, %v371
  %v660 = vpack.c.b16 %v380, %v376
  %v661 = vpack.c.b16 %v381, %v377
  %v662 = vpack.c.b16 %v382, %v378
  %v663 = vpack.c.b16 %v383, %v379
  %v664 = vpack.c.b16 %v388, %v384
  %v665 = vpack.c.b16 %v389, %v385
  %v666 = vpack.c.b16 %v390, %v386
  %v667 = vpack.c.b16 %v391, %v387
  %v668 = vpack.c.b16 %v396, %v392
  %v669 = vpack.c.b16 %v397, %v393
  %v670 = vpack.c.b16 %v398, %v394
  %v671 = vpack.c.b16 %v399, %v395
  %v672 = vpack.c.b16 %v404, %v400
  %v673 = vpack.c.b16 %v405, %v401
  %v674 = vpack.c.b16 %v406, %v402
  %v675 = vpack.c.b16 %v407, %v403
  %v676 = vpack.c.b16 %v412, %v408
  %v677 = vpack.c.b16 %v413, %v409
  %v678 = vpack.c.b16 %v414, %v410
  %v679 = vpack.c.b16 %v415, %v411
  %v680 = vpack.c.b16 %v420, %v416
  %v681 = vpack.c.b16 %v421, %v417
  %v682 = vpack.c.b16 %v422, %v418
  %v683 = vpack.c.b16 %v423, %v419
  %v684 = vpack.c.b16 %v428, %v424
  %v685 = vpack.c.b16 %v429, %v425
  %v686 = vpack.c.b16 %v430, %v426
  %v687 = vpack.c.b16 %v431, %v427
  %v688 = vpack.c.b16 %v436, %v432
  %v689 = vpack.c.b16 %v437, %v433
  %v690 = vpack.c.b16 %v438, %v434
  %v691 = vpack.c.b16 %v439, %v435
  %v692 = vpack.c.b16 %v444, %v440
  %v693 = vpack.c.b16 %v445, %v441
  %v694 = vpack.c.b16 %v446, %v442
  %v695 = vpack.c.b16 %v447, %v443
  %v696 = vpack.c.b16 %v452, %v448
  %v697 = vpack.c.b16 %v453, %v449
  %v698 = vpack.c.b16 %v454, %v450
  %v699 = vpack.c.b16 %v455, %v451
  %v700 = vpack.c.b16 %v460, %v456
  %v701 = vpack.c.b16 %v461, %v457
  %v702 = vpack.c.b16 %v462, %v458
  %v703 = vpack.c.b16 %v463, %v459
  %v704 = vpack.c.b16 %v468, %v464
  %v705 = vpack.c.b16 %v469, %v465
  %v706 = vpack.c.b16 %v470, %v466
  %v707 = vpack.c.b16 %v471, %v467
  %v708 = vpack.c.b16 %v476, %v472
  %v709 = vpack.c.b16 %v477, %v473
  %v710 = vpack.c.b16 %v478, %v474
  %v711 = vpack.c.b16 %v479, %v475
  %v712 = vpack.c.b16 %v484, %v480
  %v713 = vpack.c.b16 %v485, %v481
  %v714 = vpack.c.b16 %v486, %v482
  %v715 = vpack.c.b16 %v487, %v483
  %v716 = vpack.c.b16 %v492, %v488
  %v717 = vpack.c.b16 %v493, %v489
  %v718 = vpack.c.b16 %v494, %v490
  %v719 = vpack.c.b16 %v495, %v491
  %v720 = vpack.c.b16 %v500, %v496
  %v721 = vpack.c.b16 %v501, %v497
  %v722 = vpack.c.b16 %v502, %v498
  %v723 = vpack.c.b16 %v503, %v499
  %v724 = vpack.c.b16 %v508, %v504
  %v725 = vpack.c.b16 %v509, %v505
  %v726 = vpack.c.b16 %v510, %v506
  %v727 = vpack.c.b16 %v511, %v507
  %v728 = vpack.c.b16 %v516, %v512
  %v729 = vpack.c.b16 %v517, %v513
  %v730 = vpack.c.b16 %v518, %v514
  %v731 = vpack.c.b16 %v519, %v515
  %v732 = vpack.c.b16 %v524, %v520
  %v733 = vpack.c.b16 %v525, %v521
  %v734 = vpack.c.b16 %v526, %v522
  %v735 = vpack.c.b16 %v527, %v523
  %v736 = vpack.c.b16 %v532, %v528
  %v737 = vpack.c.b16 %v533, %v529
  %v738 = vpack.c.b16 %v534, %v530
  %v739 = vpack.c.b16 %v535, %v531
  %v740 = vpack.c.b16 %v540, %v536
  %v741 = vpack.c.b16 %v541, %v537
  %v742 = vpack.c.b16 %v542, %v538
  %v743 = vpack.c.b16 %v543, %v539
  %v744 = vpack.c.b16 %v548, %v544
  %v745 = vpack.c.b16 %v549, %v545
  %v746 = vpack.c.b16 %v550, %v546
  %v747 = vpack.c.b16 %v551, %v547
  %v748 = vpack.c.b16 %v556, %v552
  %v749 = vpack.c.b16 %v557, %v553
  %v750 = vpack.c.b16 %v558, %v554
  %v751 = vpack.c.b16 %v559, %v555
  %v752 = vpack.c.b16 %v564, %v560
  %v753 = vpack.c.b16 %v565, %v561
  %v754 = vpack.c.b16 %v566, %v562
  %v755 = vpack.c.b16 %v567, %v563
  %v756 = vpack.c.b16 %v572, %v568
  %v757 = vpack.c.b16 %v573, %v569
  %v758 = vpack.c.b16 %v574, %v570
  %v759 = vpack.c.b16 %v575, %v571
  %v760 = vpack.c.b16 %v580, %v576
  %v761 = vpack.c.b16 %v581, %v577
  %v762 = vpack.c.b16 %v582, %v578
  %v763 = vpack.c.b16 %v583, %v579
  %v764 = vpack.c.b16 %v588, %v584
  %v765 = vpack.c.b16 %v589, %v585
  %v766 = vpack.c.b16 %v590, %v586
  %v767 = vpack.c.b16 %v591, %v587
  %v768 = vpack.c.b16 %v596, %v592
  %v769 = vpack.c.b16 %v597, %v593
  %v770 = vpack.c.b16 %v598, %v594
  %v771 = vpack.c.b16 %v599, %v595
  %v772 = vpack.c.b16 %v604, %v600
  %v773 = vpack.c.b16 %v605, %v601
  %v774 = vpack.c.b16 %v606, %v602
  %v775 = vpack.c.b16 %v607, %v603
  %v776 = vpack.c.b16 %v612, %v608
  %v777 = vpack.c.b16 %v613, %v609
  %v778 = vpack.c.b16 %v614, %v610
  %v779 = vpack.c.b16 %v615, %v611
  %v780 = vpack.c.b16 %v620, %v616
  %v781 = vpack.c.b16 %v621, %v617
  %v782 = vpack.c.b16 %v622, %v618
  %v783 = vpack.c.b16 %v623, %v619
  %v784 = vpack.c.b16 %v628, %v624
  %v785 = vpack.c.b16 %v629, %v625
  %v786 = vpack.c.b16 %v630, %v626
  %v787 = vpack.c.b16 %v631, %v627
  %v788 = vpack.c.b16 %v636, %v632
  %v789 = vpack.c.b16 %v637, %v633
  %v790 = vpack.c.b16 %v638, %v634
  %v791 = vpack.c.b16 %v639, %v635
  %v792 = vpack.c.b16 %v644, %v640
  %v793 = vpack.c.b16 %v645, %v641
  %v794 = vpack.c.b16 %v646, %v642
  %v795 = vpack.c.b16 %v647, %v643
  %v796 = vpack.c.b16 %v652, %v648
  %v797 = vpack.c.b16 %v653, %v649
  %v798 = vpack.c.b16 %v654, %v650
  %v799 = vpack.c.b16 %v655, %v651
  %vm944 = vcmask 523264
  %v946 = vsel %vm944, %v210, 0
  %v949 = vsel %vm944, %v215, 0
  %951 = vmatprep.subr.bf16.mxu0 %v657
  %952 = vmatpush1.bf16.msra.mxu0 %v656
  %953 = vmatprep.subr.bf16.mxu0 %v661
  %954 = vmatpush1.bf16.msra.mxu0 %v660
  %955 = vmatprep.subr.bf16.mxu0 %v665
  %956 = vmatpush1.bf16.msra.mxu0 %v664
  %957 = vmatprep.subr.bf16.mxu0 %v669
  %958 = vmatpush1.bf16.msra.mxu0 %v668
  %959 = vmatprep.subr.bf16.mxu0 %v673
  %960 = vmatpush1.bf16.msra.mxu0 %v672
  %961 = vmatprep.subr.bf16.mxu0 %v677
  %962 = vmatpush1.bf16.msra.mxu0 %v676
  %963 = vmatprep.subr.bf16.mxu0 %v681
  %964 = vmatpush1.bf16.msra.mxu0 %v680
  %965 = vmatprep.subr.bf16.mxu0 %v685
  %966 = vmatpush1.bf16.msra.mxu0 %v684
  %967 = vmatprep.subr.bf16.mxu0 %v689
  %968 = vmatpush1.bf16.msra.mxu0 %v688
  %969 = vmatprep.subr.bf16.mxu0 %v693
  %970 = vmatpush1.bf16.msra.mxu0 %v692
  %971 = vmatprep.subr.bf16.mxu0 %v697
  %972 = vmatpush1.bf16.msra.mxu0 %v696
  %973 = vmatprep.subr.bf16.mxu0 %v701
  %974 = vmatpush1.bf16.msra.mxu0 %v700
  %975 = vmatprep.subr.bf16.mxu0 %v705
  %976 = vmatpush1.bf16.msra.mxu0 %v704
  %977 = vmatprep.subr.bf16.mxu0 %v709
  %978 = vmatpush1.bf16.msra.mxu0 %v708
  %979 = vmatprep.subr.bf16.mxu0 %v713
  %980 = vmatpush1.bf16.msra.mxu0 %v712
  %981 = vmatprep.subr.bf16.mxu0 %v717
  %982 = vmatpush1.bf16.msra.mxu0 %v716
  %983 = vmatprep.mubr.bf16.mxu0 %v207
  %984 = vmatmul.mubr.bf16.gmra.mrb[0].mxu0 %v206
  %v985 = vpop.f32.mrb[0].mxu0
  %v986 = vadd.f32 0.0, %v985
  %v987 = vpop.f32.mrb[0].mxu0
  %v988 = vadd.f32 0.0, %v987
  %v989 = vpop.f32.mrb[0].mxu0
  %v990 = vadd.f32 0.0, %v989
  %v991 = vpop.f32.mrb[0].mxu0
  %v992 = vadd.f32 0.0, %v991
  %993 = vmatprep.mubr.bf16.mxu0 %v212
  %994 = vmatmul.mubr.bf16.gmra.mrb[0].mxu0 %v211
  %v995 = vpop.f32.mrb[0].mxu0
  %v996 = vadd.f32 0.0, %v995
  %v997 = vpop.f32.mrb[0].mxu0
  %v998 = vadd.f32 0.0, %v997
  %v999 = vpop.f32.mrb[0].mxu0
  %v1000 = vadd.f32 0.0, %v999
  %v1001 = vpop.f32.mrb[0].mxu0
  %v1002 = vadd.f32 0.0, %v1001
  %1003 = vdwg.mxu0
  %1004 = vmatprep.subr.bf16.mxu0 %v721
  %1005 = vmatpush1.bf16.msra.mxu0 %v720
  %1006 = vmatprep.subr.bf16.mxu0 %v725
  %1007 = vmatpush1.bf16.msra.mxu0 %v724
  %1008 = vmatprep.subr.bf16.mxu0 %v729
  %1009 = vmatpush1.bf16.msra.mxu0 %v728
  %1010 = vmatprep.subr.bf16.mxu0 %v733
  %1011 = vmatpush1.bf16.msra.mxu0 %v732
  %1012 = vmatprep.subr.bf16.mxu0 %v737
  %1013 = vmatpush1.bf16.msra.mxu0 %v736
  %1014 = vmatprep.subr.bf16.mxu0 %v741
  %1015 = vmatpush1.bf16.msra.mxu0 %v740
  %1016 = vmatprep.subr.bf16.mxu0 %v745
  %1017 = vmatpush1.bf16.msra.mxu0 %v744
  %1018 = vmatprep.subr.bf16.mxu0 %v749
  %1019 = vmatpush1.bf16.msra.mxu0 %v748
  %1020 = vmatprep.subr.bf16.mxu0 %v753
  %1021 = vmatpush1.bf16.msra.mxu0 %v752
  %1022 = vmatprep.subr.bf16.mxu0 %v757
  %1023 = vmatpush1.bf16.msra.mxu0 %v756
  %1024 = vmatprep.subr.bf16.mxu0 %v761
  %1025 = vmatpush1.bf16.msra.mxu0 %v760
  %1026 = vmatprep.subr.bf16.mxu0 %v765
  %1027 = vmatpush1.bf16.msra.mxu0 %v764
  %1028 = vmatprep.subr.bf16.mxu0 %v769
  %1029 = vmatpush1.bf16.msra.mxu0 %v768
  %1030 = vmatprep.subr.bf16.mxu0 %v773
  %1031 = vmatpush1.bf16.msra.mxu0 %v772
  %1032 = vmatprep.subr.bf16.mxu0 %v777
  %1033 = vmatpush1.bf16.msra.mxu0 %v776
  %1034 = vmatprep.subr.bf16.mxu0 %v781
  %1035 = vmatpush1.bf16.msra.mxu0 %v780
  %1036 = vmatprep.mubr.bf16.mxu0 %v209
  %1037 = vmatmul.mubr.bf16.gmra.mrb[0].mxu0 %v208
  %v1038 = vpop.f32.mrb[0].mxu0
  %v1039 = vadd.f32 %v986, %v1038
  %v1040 = vpop.f32.mrb[0].mxu0
  %v1041 = vadd.f32 %v988, %v1040
  %v1042 = vpop.f32.mrb[0].mxu0
  %v1043 = vadd.f32 %v990, %v1042
  %v1044 = vpop.f32.mrb[0].mxu0
  %v1045 = vadd.f32 %v992, %v1044
  %1046 = vmatprep.mubr.bf16.mxu0 %v214
  %1047 = vmatmul.mubr.bf16.gmra.mrb[0].mxu0 %v213
  %v1048 = vpop.f32.mrb[0].mxu0
  %v1049 = vadd.f32 %v996, %v1048
  %v1050 = vpop.f32.mrb[0].mxu0
  %v1051 = vadd.f32 %v998, %v1050
  %v1052 = vpop.f32.mrb[0].mxu0
  %v1053 = vadd.f32 %v1000, %v1052
  %v1054 = vpop.f32.mrb[0].mxu0
  %v1055 = vadd.f32 %v1002, %v1054
  %1056 = vdwg.mxu0
  %1057 = vmatprep.subr.bf16.mxu0 %v785
  %1058 = vmatpush1.bf16.msra.mxu0 %v784
  %1059 = vmatprep.subr.bf16.mxu0 %v789
  %1060 = vmatpush1.bf16.msra.mxu0 %v788
  %1061 = vmatprep.subr.bf16.mxu0 %v793
  %1062 = vmatpush1.bf16.msra.mxu0 %v792
  %1063 = vmatprep.subr.bf16.mxu0 %v797
  %1064 = vmatpush1.bf16.msra.mxu0 %v796
  %1065 = vmatprep.subr.bf16.mxu0 0
  %1066 = vmatpush1.bf16.msra.mxu0 0
  %1067 = vmatprep.subr.bf16.mxu0 0
  %1068 = vmatpush1.bf16.msra.mxu0 0
  %1069 = vmatprep.subr.bf16.mxu0 0
  %1070 = vmatpush1.bf16.msra.mxu0 0
  %1071 = vmatprep.subr.bf16.mxu0 0
  %1072 = vmatpush1.bf16.msra.mxu0 0
  %1073 = vmatprep.subr.bf16.mxu0 0
  %1074 = vmatpush1.bf16.msra.mxu0 0
  %1075 = vmatprep.subr.bf16.mxu0 0
  %1076 = vmatpush1.bf16.msra.mxu0 0
  %1077 = vmatprep.subr.bf16.mxu0 0
  %1078 = vmatpush1.bf16.msra.mxu0 0
  %1079 = vmatprep.subr.bf16.mxu0 0
  %1080 = vmatpush1.bf16.msra.mxu0 0
  %1081 = vmatprep.subr.bf16.mxu0 0
  %1082 = vmatpush1.bf16.msra.mxu0 0
  %1083 = vmatprep.subr.bf16.mxu0 0
  %1084 = vmatpush1.bf16.msra.mxu0 0
  %1085 = vmatprep.subr.bf16.mxu0 0
  %1086 = vmatpush1.bf16.msra.mxu0 0
  %1087 = vmatprep.subr.bf16.mxu0 0
  %1088 = vmatpush1.bf16.msra.mxu0 0
  %1089 = vmatprep.mubr.bf16.mxu0 0
  %1090 = vmatmul.mubr.bf16.gmra.mrb[0].mxu0 %v946
  %v1091 = vpop.f32.mrb[0].mxu0
  %v1092 = vadd.f32 %v1039, %v1091
  %v1093 = vpop.f32.mrb[0].mxu0
  %v1094 = vadd.f32 %v1041, %v1093
  %v1095 = vpop.f32.mrb[0].mxu0
  %v1096 = vadd.f32 %v1043, %v1095
  %v1097 = vpop.f32.mrb[0].mxu0
  %v1098 = vadd.f32 %v1045, %v1097
  %1099 = vmatprep.mubr.bf16.mxu0 0
  %1100 = vmatmul.mubr.bf16.gmra.mrb[0].mxu0 %v949
  %v1101 = vpop.f32.mrb[0].mxu0
  %v1102 = vadd.f32 %v1049, %v1101
  %v1103 = vpop.f32.mrb[0].mxu0
  %v1104 = vadd.f32 %v1051, %v1103
  %v1105 = vpop.f32.mrb[0].mxu0
  %v1106 = vadd.f32 %v1053, %v1105
  %v1107 = vpop.f32.mrb[0].mxu0
  %v1108 = vadd.f32 %v1055, %v1107
  %1109 = vdwg.mxu0
  %1110 = vmatprep.subr.bf16.mxu0 %v659
  %1111 = vmatpush1.bf16.msra.mxu0 %v658
  %1112 = vmatprep.subr.bf16.mxu0 %v663
  %1113 = vmatpush1.bf16.msra.mxu0 %v662
  %1114 = vmatprep.subr.bf16.mxu0 %v667
  %1115 = vmatpush1.bf16.msra.mxu0 %v666
  %1116 = vmatprep.subr.bf16.mxu0 %v671
  %1117 = vmatpush1.bf16.msra.mxu0 %v670
  %1118 = vmatprep.subr.bf16.mxu0 %v675
  %1119 = vmatpush1.bf16.msra.mxu0 %v674
  %1120 = vmatprep.subr.bf16.mxu0 %v679
  %1121 = vmatpush1.bf16.msra.mxu0 %v678
  %1122 = vmatprep.subr.bf16.mxu0 %v683
  %1123 = vmatpush1.bf16.msra.mxu0 %v682
  %1124 = vmatprep.subr.bf16.mxu0 %v687
  %1125 = vmatpush1.bf16.msra.mxu0 %v686
  %1126 = vmatprep.subr.bf16.mxu0 %v691
  %1127 = vmatpush1.bf16.msra.mxu0 %v690
  %1128 = vmatprep.subr.bf16.mxu0 %v695
  %1129 = vmatpush1.bf16.msra.mxu0 %v694
  %1130 = vmatprep.subr.bf16.mxu0 %v699
  %1131 = vmatpush1.bf16.msra.mxu0 %v698
  %1132 = vmatprep.subr.bf16.mxu0 %v703
  %1133 = vmatpush1.bf16.msra.mxu0 %v702
  %1134 = vmatprep.subr.bf16.mxu0 %v707
  %1135 = vmatpush1.bf16.msra.mxu0 %v706
  %1136 = vmatprep.subr.bf16.mxu0 %v711
  %1137 = vmatpush1.bf16.msra.mxu0 %v710
  %1138 = vmatprep.subr.bf16.mxu0 %v715
  %1139 = vmatpush1.bf16.msra.mxu0 %v714
  %1140 = vmatprep.subr.bf16.mxu0 %v719
  %1141 = vmatpush1.bf16.msra.mxu0 %v718
  %1142 = vmatprep.mubr.bf16.mxu0 %v207
  %1143 = vmatmul.mubr.bf16.gmra.mrb[0].mxu0 %v206
  %v1144 = vpop.f32.mrb[0].mxu0
  %v1145 = vadd.f32 0.0, %v1144
  %v1146 = vpop.f32.mrb[0].mxu0
  %v1147 = vadd.f32 0.0, %v1146
  %v1148 = vpop.f32.mrb[0].mxu0
  %v1149 = vadd.f32 0.0, %v1148
  %v1150 = vpop.f32.mrb[0].mxu0
  %v1151 = vadd.f32 0.0, %v1150
  %1152 = vmatprep.mubr.bf16.mxu0 %v212
  %1153 = vmatmul.mubr.bf16.gmra.mrb[0].mxu0 %v211
  %v1154 = vpop.f32.mrb[0].mxu0
  %v1155 = vadd.f32 0.0, %v1154
  %v1156 = vpop.f32.mrb[0].mxu0
  %v1157 = vadd.f32 0.0, %v1156
  %v1158 = vpop.f32.mrb[0].mxu0
  %v1159 = vadd.f32 0.0, %v1158
  %v1160 = vpop.f32.mrb[0].mxu0
  %v1161 = vadd.f32 0.0, %v1160
  %1162 = vdwg.mxu0
  %1163 = vmatprep.subr.bf16.mxu0 %v723
  %1164 = vmatpush1.bf16.msra.mxu0 %v722
  %1165 = vmatprep.subr.bf16.mxu0 %v727
  %1166 = vmatpush1.bf16.msra.mxu0 %v726
  %1167 = vmatprep.subr.bf16.mxu0 %v731
  %1168 = vmatpush1.bf16.msra.mxu0 %v730
  %1169 = vmatprep.subr.bf16.mxu0 %v735
  %1170 = vmatpush1.bf16.msra.mxu0 %v734
  %1171 = vmatprep.subr.bf16.mxu0 %v739
  %1172 = vmatpush1.bf16.msra.mxu0 %v738
  %1173 = vmatprep.subr.bf16.mxu0 %v743
  %1174 = vmatpush1.bf16.msra.mxu0 %v742
  %1175 = vmatprep.subr.bf16.mxu0 %v747
  %1176 = vmatpush1.bf16.msra.mxu0 %v746
  %1177 = vmatprep.subr.bf16.mxu0 %v751
  %1178 = vmatpush1.bf16.msra.mxu0 %v750
  %1179 = vmatprep.subr.bf16.mxu0 %v755
  %1180 = vmatpush1.bf16.msra.mxu0 %v754
  %1181 = vmatprep.subr.bf16.mxu0 %v759
  %1182 = vmatpush1.bf16.msra.mxu0 %v758
  %1183 = vmatprep.subr.bf16.mxu0 %v763
  %1184 = vmatpush1.bf16.msra.mxu0 %v762
  %1185 = vmatprep.subr.bf16.mxu0 %v767
  %1186 = vmatpush1.bf16.msra.mxu0 %v766
  %1187 = vmatprep.subr.bf16.mxu0 %v771
  %1188 = vmatpush1.bf16.msra.mxu0 %v770
  %1189 = vmatprep.subr.bf16.mxu0 %v775
  %1190 = vmatpush1.bf16.msra.mxu0 %v774
  %1191 = vmatprep.subr.bf16.mxu0 %v779
  %1192 = vmatpush1.bf16.msra.mxu0 %v778
  %1193 = vmatprep.subr.bf16.mxu0 %v783
  %1194 = vmatpush1.bf16.msra.mxu0 %v782
  %1195 = vmatprep.mubr.bf16.mxu0 %v209
  %1196 = vmatmul.mubr.bf16.gmra.mrb[0].mxu0 %v208
  %v1197 = vpop.f32.mrb[0].mxu0
  %v1198 = vadd.f32 %v1145, %v1197
  %v1199 = vpop.f32.mrb[0].mxu0
  %v1200 = vadd.f32 %v1147, %v1199
  %v1201 = vpop.f32.mrb[0].mxu0
  %v1202 = vadd.f32 %v1149, %v1201
  %v1203 = vpop.f32.mrb[0].mxu0
  %v1204 = vadd.f32 %v1151, %v1203
  %1205 = vmatprep.mubr.bf16.mxu0 %v214
  %1206 = vmatmul.mubr.bf16.gmra.mrb[0].mxu0 %v213
  %v1207 = vpop.f32.mrb[0].mxu0
  %v1208 = vadd.f32 %v1155, %v1207
  %v1209 = vpop.f32.mrb[0].mxu0
  %v1210 = vadd.f32 %v1157, %v1209
  %v1211 = vpop.f32.mrb[0].mxu0
  %v1212 = vadd.f32 %v1159, %v1211
  %v1213 = vpop.f32.mrb[0].mxu0
  %v1214 = vadd.f32 %v1161, %v1213
  %1215 = vdwg.mxu0
  %1216 = vmatprep.subr.bf16.mxu0 %v787
  %1217 = vmatpush1.bf16.msra.mxu0 %v786
  %1218 = vmatprep.subr.bf16.mxu0 %v791
  %1219 = vmatpush1.bf16.msra.mxu0 %v790
  %1220 = vmatprep.subr.bf16.mxu0 %v795
  %1221 = vmatpush1.bf16.msra.mxu0 %v794
  %1222 = vmatprep.subr.bf16.mxu0 %v799
  %1223 = vmatpush1.bf16.msra.mxu0 %v798
  %1224 = vmatprep.subr.bf16.mxu0 0
  %1225 = vmatpush1.bf16.msra.mxu0 0
  %1226 = vmatprep.subr.bf16.mxu0 0
  %1227 = vmatpush1.bf16.msra.mxu0 0
  %1228 = vmatprep.subr.bf16.mxu0 0
  %1229 = vmatpush1.bf16.msra.mxu0 0
  %1230 = vmatprep.subr.bf16.mxu0 0
  %1231 = vmatpush1.bf16.msra.mxu0 0
  %1232 = vmatprep.subr.bf16.mxu0 0
  %1233 = vmatpush1.bf16.msra.mxu0 0
  %1234 = vmatprep.subr.bf16.mxu0 0
  %1235 = vmatpush1.bf16.msra.mxu0 0
  %1236 = vmatprep.subr.bf16.mxu0 0
  %1237 = vmatpush1.bf16.msra.mxu0 0
  %1238 = vmatprep.subr.bf16.mxu0 0
  %1239 = vmatpush1.bf16.msra.mxu0 0
  %1240 = vmatprep.subr.bf16.mxu0 0
  %1241 = vmatpush1.bf16.msra.mxu0 0
  %1242 = vmatprep.subr.bf16.mxu0 0
  %1243 = vmatpush1.bf16.msra.mxu0 0
  %1244 = vmatprep.subr.bf16.mxu0 0
  %1245 = vmatpush1.bf16.msra.mxu0 0
  %1246 = vmatprep.subr.bf16.mxu0 0
  %1247 = vmatpush1.bf16.msra.mxu0 0
  %1248 = vmatprep.mubr.bf16.mxu0 0
  %1249 = vmatmul.mubr.bf16.gmra.mrb[0].mxu0 %v946
  %v1250 = vpop.f32.mrb[0].mxu0
  %v1251 = vadd.f32 %v1198, %v1250
  %v1252 = vpop.f32.mrb[0].mxu0
  %v1253 = vadd.f32 %v1200, %v1252
  %v1254 = vpop.f32.mrb[0].mxu0
  %v1255 = vadd.f32 %v1202, %v1254
  %v1256 = vpop.f32.mrb[0].mxu0
  %v1257 = vadd.f32 %v1204, %v1256
  %1258 = vmatprep.mubr.bf16.mxu0 0
  %1259 = vmatmul.mubr.bf16.gmra.mrb[0].mxu0 %v949
  %v1260 = vpop.f32.mrb[0].mxu0
  %v1261 = vadd.f32 %v1208, %v1260
  %v1262 = vpop.f32.mrb[0].mxu0
  %v1263 = vadd.f32 %v1210, %v1262
  %v1264 = vpop.f32.mrb[0].mxu0
  %v1265 = vadd.f32 %v1212, %v1264
  %v1266 = vpop.f32.mrb[0].mxu0
  %v1267 = vadd.f32 %v1214, %v1266
  %1268 = vdwg.mxu0
  %v1269 = vadd.f32 %v1092, %v1096
  %v1270 = vadd.f32 %v1269, %v1102
  %v1271 = vadd.f32 %v1270, %v1106
  %v1272 = vrot.slane %v1271, 4
  %v1273 = vadd.f32 %v1271, %v1272
  %v1274 = vrot.slane %v1273, 2
  %v1275 = vadd.f32 %v1273, %v1274
  %v1276 = vrot.slane %v1275, 1
  %v1277 = vadd.f32 %v1275, %v1276
  %v1278 = vadd.f32 %v1277, 0.0
  %v1279 = vadd.f32 %v1094, %v1098
  %v1280 = vadd.f32 %v1279, %v1104
  %v1281 = vadd.f32 %v1280, %v1108
  %v1282 = vrot.slane %v1281, 4
  %v1283 = vadd.f32 %v1281, %v1282
  %v1284 = vrot.slane %v1283, 2
  %v1285 = vadd.f32 %v1283, %v1284
  %v1286 = vrot.slane %v1285, 1
  %v1287 = vadd.f32 %v1285, %v1286
  %v1288 = vadd.f32 %v1278, %v1287
  %v1289 = vadd.f32 %v1251, %v1255
  %v1290 = vadd.f32 %v1289, %v1261
  %v1291 = vadd.f32 %v1290, %v1265
  %v1292 = vrot.slane %v1291, 4
  %v1293 = vadd.f32 %v1291, %v1292
  %v1294 = vrot.slane %v1293, 2
  %v1295 = vadd.f32 %v1293, %v1294
  %v1296 = vrot.slane %v1295, 1
  %v1297 = vadd.f32 %v1295, %v1296
  %v1298 = vadd.f32 %v1288, %v1297
  %v1299 = vadd.f32 %v1253, %v1257
  %v1300 = vadd.f32 %v1299, %v1263
  %v1301 = vadd.f32 %v1300, %v1267
  %v1302 = vrot.slane %v1301, 4
  %v1303 = vadd.f32 %v1301, %v1302
  %v1304 = vrot.slane %v1303, 2
  %v1305 = vadd.f32 %v1303, %v1304
  %v1306 = vrot.slane %v1305, 1
  %v1307 = vadd.f32 %v1305, %v1306
  %v1308 = vadd.f32 %v1298, %v1307
  %v1309 = vmul.f32 %v1308, 0.0078125
  %v1310 = vsub.f32 %v1092, %v1309
  %v1311 = vsub.f32 %v1096, %v1309
  %v1312 = vsub.f32 %v1102, %v1309
  %v1313 = vsub.f32 %v1106, %v1309
  %v1314 = vmul.f32 %v1310, %v1310
  %v1315 = vmul.f32 %v1311, %v1311
  %v1316 = vmul.f32 %v1312, %v1312
  %v1317 = vmul.f32 %v1313, %v1313
  %v1318 = vadd.f32 %v1314, %v1315
  %v1319 = vadd.f32 %v1318, %v1316
  %v1320 = vadd.f32 %v1319, %v1317
  %v1321 = vrot.slane %v1320, 4
  %v1322 = vadd.f32 %v1320, %v1321
  %v1323 = vrot.slane %v1322, 2
  %v1324 = vadd.f32 %v1322, %v1323
  %v1325 = vrot.slane %v1324, 1
  %v1326 = vadd.f32 %v1324, %v1325
  %v1327 = vadd.f32 %v1326, 0.0
  %v1328 = vsub.f32 %v1094, %v1309
  %v1329 = vsub.f32 %v1098, %v1309
  %v1330 = vsub.f32 %v1104, %v1309
  %v1331 = vsub.f32 %v1108, %v1309
  %v1332 = vmul.f32 %v1328, %v1328
  %v1333 = vmul.f32 %v1329, %v1329
  %v1334 = vmul.f32 %v1330, %v1330
  %v1335 = vmul.f32 %v1331, %v1331
  %v1336 = vadd.f32 %v1332, %v1333
  %v1337 = vadd.f32 %v1336, %v1334
  %v1338 = vadd.f32 %v1337, %v1335
  %v1339 = vrot.slane %v1338, 4
  %v1340 = vadd.f32 %v1338, %v1339
  %v1341 = vrot.slane %v1340, 2
  %v1342 = vadd.f32 %v1340, %v1341
  %v1343 = vrot.slane %v1342, 1
  %v1344 = vadd.f32 %v1342, %v1343
  %v1345 = vadd.f32 %v1327, %v1344
  %v1346 = vsub.f32 %v1251, %v1309
  %v1347 = vsub.f32 %v1255, %v1309
  %v1348 = vsub.f32 %v1261, %v1309
  %v1349 = vsub.f32 %v1265, %v1309
  %v1350 = vmul.f32 %v1346, %v1346
  %v1351 = vmul.f32 %v1347, %v1347
  %v1352 = vmul.f32 %v1348, %v1348
  %v1353 = vmul.f32 %v1349, %v1349
  %v1354 = vadd.f32 %v1350, %v1351
  %v1355 = vadd.f32 %v1354, %v1352
  %v1356 = vadd.f32 %v1355, %v1353
  %v1357 = vrot.slane %v1356, 4
  %v1358 = vadd.f32 %v1356, %v1357
  %v1359 = vrot.slane %v1358, 2
  %v1360 = vadd.f32 %v1358, %v1359
  %v1361 = vrot.slane %v1360, 1
  %v1362 = vadd.f32 %v1360, %v1361
  %v1363 = vadd.f32 %v1345, %v1362
  %v1364 = vsub.f32 %v1253, %v1309
  %v1365 = vsub.f32 %v1257, %v1309
  %v1366 = vsub.f32 %v1263, %v1309
  %v1367 = vsub.f32 %v1267, %v1309
  %v1368 = vmul.f32 %v1364, %v1364
  %v1369 = vmul.f32 %v1365, %v1365
  %v1370 = vmul.f32 %v1366, %v1366
  %v1371 = vmul.f32 %v1367, %v1367
  %v1372 = vadd.f32 %v1368, %v1369
  %v1373 = vadd.f32 %v1372, %v1370
  %v1374 = vadd.f32 %v1373, %v1371
  %v1375 = vrot.slane %v1374, 4
  %v1376 = vadd.f32 %v1374, %v1375
  %v1377 = vrot.slane %v1376, 2
  %v1378 = vadd.f32 %v1376, %v1377
  %v1379 = vrot.slane %v1378, 1
  %v1380 = vadd.f32 %v1378, %v1379
  %v1381 = vadd.f32 %v1363, %v1380
  %v1382 = vmul.f32 %v1381, 0.0078125
  %v1383 = vld [vmem:[%s2] sm:$0x1]
  %v1384 = vadd.f32 %v1382, 1e-05
  %v1385 = vrsqrt.pop %v1384
  %v1386 = vmul.f32 %v1383, %v1385
  %v1387 = vld [vmem:[%s3] sm:$0x1]
  %v1388 = vmul.f32 %v1309, %v1386
  %v1389 = vsub.f32 %v1387, %v1388
  %v1390 = vlaneseq
  %v1391 = vshrl.u32 %v1390, 7
  %v1392 = vsub.s32 0, %v1391
  %v1393 = vrot.slane %v1386, %v1392
  %v1394 = vmul.f32 %v1092, %v1393
  %v1395 = vmul.f32 %v1094, %v1393
  %v1396 = vmul.f32 %v1251, %v1393
  %v1397 = vmul.f32 %v1253, %v1393
  %v1398 = vmul.f32 %v1096, %v1393
  %v1399 = vmul.f32 %v1098, %v1393
  %v1400 = vmul.f32 %v1255, %v1393
  %v1401 = vmul.f32 %v1257, %v1393
  %v1402 = vmul.f32 %v1102, %v1393
  %v1403 = vmul.f32 %v1104, %v1393
  %v1404 = vmul.f32 %v1261, %v1393
  %v1405 = vmul.f32 %v1263, %v1393
  %v1406 = vmul.f32 %v1106, %v1393
  %v1407 = vmul.f32 %v1108, %v1393
  %v1408 = vmul.f32 %v1265, %v1393
  %v1409 = vmul.f32 %v1267, %v1393
  %v1410 = vlaneseq
  %v1411 = vshrl.u32 %v1410, 7
  %v1412 = vsub.s32 0, %v1411
  %v1413 = vrot.slane %v1389, %v1412
  %v1414 = vadd.f32 %v1394, %v1413
  %v1415 = vadd.f32 %v1395, %v1413
  %v1416 = vadd.f32 %v1396, %v1413
  %v1417 = vadd.f32 %v1397, %v1413
  %v1418 = vadd.f32 %v1398, %v1413
  %v1419 = vadd.f32 %v1399, %v1413
  %v1420 = vadd.f32 %v1400, %v1413
  %v1421 = vadd.f32 %v1401, %v1413
  %v1422 = vadd.f32 %v1402, %v1413
  %v1423 = vadd.f32 %v1403, %v1413
  %v1424 = vadd.f32 %v1404, %v1413
  %v1425 = vadd.f32 %v1405, %v1413
  %v1426 = vadd.f32 %v1406, %v1413
  %v1427 = vadd.f32 %v1407, %v1413
  %v1428 = vadd.f32 %v1408, %v1413
  %v1429 = vadd.f32 %v1409, %v1413
  %v1430 = vmax.f32 %v1414, 0.0
  %v1431 = vmax.f32 %v1415, 0.0
  %v1432 = vmax.f32 %v1416, 0.0
  %v1433 = vmax.f32 %v1417, 0.0
  %v1434 = vmax.f32 %v1418, 0.0
  %v1435 = vmax.f32 %v1419, 0.0
  %v1436 = vmax.f32 %v1420, 0.0
  %v1437 = vmax.f32 %v1421, 0.0
  %v1438 = vmax.f32 %v1422, 0.0
  %v1439 = vmax.f32 %v1423, 0.0
  %v1440 = vmax.f32 %v1424, 0.0
  %v1441 = vmax.f32 %v1425, 0.0
  %v1442 = vmax.f32 %v1426, 0.0
  %v1443 = vmax.f32 %v1427, 0.0
  %v1444 = vmax.f32 %v1428, 0.0
  %v1445 = vmax.f32 %v1429, 0.0
  %v1446 = vpack.c.bf16 %v1434, %v1430
  %v1447 = vpack.c.bf16 %v1435, %v1431
  %v1448 = vpack.c.bf16 %v1436, %v1432
  %v1449 = vpack.c.bf16 %v1437, %v1433
  %v1450 = vpack.c.bf16 %v1442, %v1438
  %v1451 = vpack.c.bf16 %v1443, %v1439
  %v1452 = vpack.c.bf16 %v1444, %v1440
  %v1453 = vpack.c.bf16 %v1445, %v1441
  %v1462 = vunpack.c.l.b16 %v1446
  %v1463 = vunpack.c.l.b16 %v1447
  %v1464 = vunpack.c.l.b16 %v1448
  %v1465 = vunpack.c.l.b16 %v1449
  %v1466 = vunpack.c.h.b16 %v1446
  %v1467 = vunpack.c.h.b16 %v1447
  %v1468 = vunpack.c.h.b16 %v1448
  %v1469 = vunpack.c.h.b16 %v1449
  %v1470 = vunpack.c.l.b16 %v1450
  %v1471 = vunpack.c.l.b16 %v1451
  %v1472 = vunpack.c.l.b16 %v1452
  %v1473 = vunpack.c.l.b16 %v1453
  %v1474 = vunpack.c.h.b16 %v1450
  %v1475 = vunpack.c.h.b16 %v1451
  %v1476 = vunpack.c.h.b16 %v1452
  %v1477 = vunpack.c.h.b16 %v1453
  %v1478 = vpack.c.b16 %v1463, %v1462
  %v1479 = vpack.c.b16 %v1465, %v1464
  %v1480 = vpack.c.b16 %v1467, %v1466
  %v1481 = vpack.c.b16 %v1469, %v1468
  %v1482 = vpack.c.b16 %v1471, %v1470
  %v1483 = vpack.c.b16 %v1473, %v1472
  %v1484 = vpack.c.b16 %v1475, %v1474
  %v1485 = vpack.c.b16 %v1477, %v1476
  %1494 = vst [vmem:[%s4] sm:$0xff] %v1478
  %1495 = vst [vmem:[%s4 + $0x8] sm:$0xff] %v1479
  %1496 = vst [vmem:[%s4 + $0x10] sm:$0xff] %v1480
  %1497 = vst [vmem:[%s4 + $0x18] sm:$0xff] %v1481
  %1498 = vst [vmem:[%s4 + $0x20] sm:$0xff] %v1482
  %1499 = vst [vmem:[%s4 + $0x28] sm:$0xff] %v1483
  %1500 = vst [vmem:[%s4 + $0x30] sm:$0xff] %v1484
  %1501 = vst [vmem:[%s4 + $0x38] sm:$0xff] %v1485
  // Predicated region
  $region18: #{simple_seg_forward.10} parent=0 // pred_check
    _
  $region19: #{simple_seg_forward.10} parent=0 // pred_check_branch
    %1503 = sbr.rel (0) target = $region21
  $region20: #{simple_seg_forward.10} parent=0 // pred_region
    _
  $region21: #{simple_seg_forward.10} parent=0 // pred_fallthru
    _
  // Predicated region
  $region22: #{simple_seg_forward.10} parent=0 // pred_check
    _
  $region23: #{simple_seg_forward.10} parent=0 // pred_check_branch
    %1505 = sbr.rel (0) target = $region25
  $region24: #{simple_seg_forward.10} parent=0 // pred_region
    _
  $region25: #{simple_seg_forward.10} parent=0 // pred_fallthru
    _

// kernel: tile.8
$region0: #{tile.8}
  #allocation0 [shape = 's32[1]{0}', space=sflag, size = 0x4, scoped, tag = 'scoped memory for tile.8']
  %s0 = inlined_call_operand.vmem [shape: f32[128], index: 0, kind: input, shape index: {}]
  %s1 = inlined_call_operand.vmem [shape: f32[4,128], index: 1, kind: output, shape index: {}]
  // Predicated region
  $region2: #{tile.8} parent=0 // pred_check
    _
  $region3: #{tile.8} parent=0 // pred_check_branch
    %3 = sbr.rel (0) target = $region5
  $region4: #{tile.8} parent=0 // pred_region
    _
  $region5: #{tile.8} parent=0 // pred_fallthru
    _
  %v4 = vld [vmem:[%s0] ss:$0 sm:$0xff]
  %5 = vst [vmem:[%s1] sm:$0xf] %v4

// kernel: simple_seg_forward.11
$region0: #{simple_seg_forward.11}
  #allocation0 [shape = 'u32[]', space=smem, size = 0x4, offset = 0x4, fixed_abs, tag = 'smem constant byte address 0x4 - core index']
  #allocation1 [shape = 'u32[144,128]{1,0:T(1,128)}', space=vmem, size = 0x12000, scoped, tag = 'internal scratch']
  %s0 = inlined_call_operand.vmem [shape: bf16[128,288], index: 0, kind: input, shape index: {}]
  %s1 = inlined_call_operand.vmem [shape: bf16[288,512], index: 1, kind: input, shape index: {}]
  %s2 = inlined_call_operand.vmem [shape: f32[1,512], index: 2, kind: input, shape index: {}]
  %s3 = inlined_call_operand.vmem [shape: f32[128,512], index: 3, kind: output, shape index: {}]
  %s4 = sld [smem:[#allocation0]]
  $region22: #{simple_seg_forward.11} parent=0
    _
  %s6 = ssub.s32 1, %s4
  %s7 = scalar_select 0, %s6, %s4
  // Predicated region
  $region2: #{simple_seg_forward.11} parent=0 // pred_check
    _
  $region3: #{simple_seg_forward.11} parent=0 // pred_check_branch
    %9 = sbr.rel (0) target = $region5
  $region4: #{simple_seg_forward.11} parent=0 // pred_region
    _
  $region5: #{simple_seg_forward.11} parent=0 // pred_fallthru
    _
  // Predicated region
  $region6: #{simple_seg_forward.11} parent=0 // pred_check
    _
  $region7: #{simple_seg_forward.11} parent=0 // pred_check_branch
    %11 = sbr.rel (0) target = $region9
  $region8: #{simple_seg_forward.11} parent=0 // pred_region
    _
  $region9: #{simple_seg_forward.11} parent=0 // pred_fallthru
    _
  // Predicated region
  $region10: #{simple_seg_forward.11} parent=0 // pred_check
    _
  $region11: #{simple_seg_forward.11} parent=0 // pred_check_branch
    %13 = sbr.rel (0) target = $region13
  $region12: #{simple_seg_forward.11} parent=0 // pred_region
    _
  $region13: #{simple_seg_forward.11} parent=0 // pred_fallthru
    _
  %v15 = vld [vmem:[%s0] sm:$0xff]
  %v16 = vld [vmem:[%s0 + $0x8] sm:$0xf]
  %v17 = vld [vmem:[%s0 + $0xc] sm:$0xff]
  %v18 = vld [vmem:[%s0 + $0x14] sm:$0xf]
  %v19 = vld [vmem:[%s0 + $0x18] sm:$0xff]
  %v20 = vld [vmem:[%s0 + $0x20] sm:$0xf]
  %v21 = vld [vmem:[%s0 + $0x24] sm:$0xff]
  %v22 = vld [vmem:[%s0 + $0x2c] sm:$0xf]
  %v23 = vld [vmem:[%s0 + $0x30] sm:$0xff]
  %v24 = vld [vmem:[%s0 + $0x38] sm:$0xf]
  %v25 = vld [vmem:[%s0 + $0x3c] sm:$0xff]
  %v26 = vld [vmem:[%s0 + $0x44] sm:$0xf]
  %v27 = vld [vmem:[%s0 + $0x48] sm:$0xff]
  %v28 = vld [vmem:[%s0 + $0x50] sm:$0xf]
  %v29 = vld [vmem:[%s0 + $0x54] sm:$0xff]
  %v30 = vld [vmem:[%s0 + $0x5c] sm:$0xf]
  %v31 = vld [vmem:[%s0 + $0x60] sm:$0xff]
  %v32 = vld [vmem:[%s0 + $0x68] sm:$0xf]
  %v33 = vld [vmem:[%s0 + $0x6c] sm:$0xff]
  %v34 = vld [vmem:[%s0 + $0x74] sm:$0xf]
  %v35 = vld [vmem:[%s0 + $0x78] sm:$0xff]
  %v36 = vld [vmem:[%s0 + $0x80] sm:$0xf]
  %v37 = vld [vmem:[%s0 + $0x84] sm:$0xff]
  %v38 = vld [vmem:[%s0 + $0x8c] sm:$0xf]
  %v39 = vld [vmem:[%s0 + $0x90] sm:$0xff]
  %v40 = vld [vmem:[%s0 + $0x98] sm:$0xf]
  %v41 = vld [vmem:[%s0 + $0x9c] sm:$0xff]
  %v42 = vld [vmem:[%s0 + $0xa4] sm:$0xf]
  %v43 = vld [vmem:[%s0 + $0xa8] sm:$0xff]
  %v44 = vld [vmem:[%s0 + $0xb0] sm:$0xf]
  %v45 = vld [vmem:[%s0 + $0xb4] sm:$0xff]
  %v46 = vld [vmem:[%s0 + $0xbc] sm:$0xf]
  %v47 = vld [vmem:[%s1] sm:$0xff]
  %v48 = vld [vmem:[%s1 + $0x8] sm:$0xff]
  %v49 = vld [vmem:[%s1 + $0x10] sm:$0xff]
  %v50 = vld [vmem:[%s1 + $0x18] sm:$0xff]
  %v51 = vld [vmem:[%s1 + $0x20] sm:$0xff]
  %v52 = vld [vmem:[%s1 + $0x28] sm:$0xff]
  %v53 = vld [vmem:[%s1 + $0x30] sm:$0xff]
  %v54 = vld [vmem:[%s1 + $0x38] sm:$0xff]
  %v55 = vld [vmem:[%s1 + $0x40] sm:$0xff]
  %v56 = vld [vmem:[%s1 + $0x48] sm:$0xff]
  %v57 = vld [vmem:[%s1 + $0x50] sm:$0xff]
  %v58 = vld [vmem:[%s1 + $0x58] sm:$0xff]
  %v59 = vld [vmem:[%s1 + $0x60] sm:$0xff]
  %v60 = vld [vmem:[%s1 + $0x68] sm:$0xff]
  %v61 = vld [vmem:[%s1 + $0x70] sm:$0xff]
  %v62 = vld [vmem:[%s1 + $0x78] sm:$0xff]
  %v63 = vld [vmem:[%s1 + $0x80] sm:$0xff]
  %v64 = vld [vmem:[%s1 + $0x88] sm:$0xff]
  %v65 = vld [vmem:[%s1 + $0x90] sm:$0xff]
  %v66 = vld [vmem:[%s1 + $0x98] sm:$0xff]
  %v67 = vld [vmem:[%s1 + $0xa0] sm:$0xff]
  %v68 = vld [vmem:[%s1 + $0xa8] sm:$0xff]
  %v69 = vld [vmem:[%s1 + $0xb0] sm:$0xff]
  %v70 = vld [vmem:[%s1 + $0xb8] sm:$0xff]
  %v71 = vld [vmem:[%s1 + $0xc0] sm:$0xff]
  %v72 = vld [vmem:[%s1 + $0xc8] sm:$0xff]
  %v73 = vld [vmem:[%s1 + $0xd0] sm:$0xff]
  %v74 = vld [vmem:[%s1 + $0xd8] sm:$0xff]
  %v75 = vld [vmem:[%s1 + $0xe0] sm:$0xff]
  %v76 = vld [vmem:[%s1 + $0xe8] sm:$0xff]
  %v77 = vld [vmem:[%s1 + $0xf0] sm:$0xff]
  %v78 = vld [vmem:[%s1 + $0xf8] sm:$0xff]
  %v79 = vld [vmem:[%s1 + $0x100] sm:$0xff]
  %v80 = vld [vmem:[%s1 + $0x108] sm:$0xff]
  %v81 = vld [vmem:[%s1 + $0x110] sm:$0xff]
  %v82 = vld [vmem:[%s1 + $0x118] sm:$0xff]
  %v83 = vld [vmem:[%s1 + $0x120] sm:$0xff]
  %v84 = vld [vmem:[%s1 + $0x128] sm:$0xff]
  %v85 = vld [vmem:[%s1 + $0x130] sm:$0xff]
  %v86 = vld [vmem:[%s1 + $0x138] sm:$0xff]
  %v87 = vld [vmem:[%s1 + $0x140] sm:$0xff]
  %v88 = vld [vmem:[%s1 + $0x148] sm:$0xff]
  %v89 = vld [vmem:[%s1 + $0x150] sm:$0xff]
  %v90 = vld [vmem:[%s1 + $0x158] sm:$0xff]
  %v91 = vld [vmem:[%s1 + $0x160] sm:$0xff]
  %v92 = vld [vmem:[%s1 + $0x168] sm:$0xff]
  %v93 = vld [vmem:[%s1 + $0x170] sm:$0xff]
  %v94 = vld [vmem:[%s1 + $0x178] sm:$0xff]
  %v95 = vld [vmem:[%s1 + $0x180] sm:$0xff]
  %v96 = vld [vmem:[%s1 + $0x188] sm:$0xff]
  %v97 = vld [vmem:[%s1 + $0x190] sm:$0xff]
  %v98 = vld [vmem:[%s1 + $0x198] sm:$0xff]
  %v99 = vld [vmem:[%s1 + $0x1a0] sm:$0xff]
  %v100 = vld [vmem:[%s1 + $0x1a8] sm:$0xff]
  %v101 = vld [vmem:[%s1 + $0x1b0] sm:$0xff]
  %v102 = vld [vmem:[%s1 + $0x1b8] sm:$0xff]
  %v103 = vld [vmem:[%s1 + $0x1c0] sm:$0xff]
  %v104 = vld [vmem:[%s1 + $0x1c8] sm:$0xff]
  %v105 = vld [vmem:[%s1 + $0x1d0] sm:$0xff]
  %v106 = vld [vmem:[%s1 + $0x1d8] sm:$0xff]
  %v107 = vld [vmem:[%s1 + $0x1e0] sm:$0xff]
  %v108 = vld [vmem:[%s1 + $0x1e8] sm:$0xff]
  %v109 = vld [vmem:[%s1 + $0x1f0] sm:$0xff]
  %v110 = vld [vmem:[%s1 + $0x1f8] sm:$0xff]
  %v111 = vld [vmem:[%s1 + $0x200] sm:$0xff]
  %v112 = vld [vmem:[%s1 + $0x208] sm:$0xff]
  %v113 = vld [vmem:[%s1 + $0x210] sm:$0xff]
  %v114 = vld [vmem:[%s1 + $0x218] sm:$0xff]
  %v115 = vld [vmem:[%s1 + $0x220] sm:$0xff]
  %v116 = vld [vmem:[%s1 + $0x228] sm:$0xff]
  %v117 = vld [vmem:[%s1 + $0x230] sm:$0xff]
  %v118 = vld [vmem:[%s1 + $0x238] sm:$0xff]
  %v119 = vld [vmem:[%s2] sm:$0xf]
  %v121 = vlaneseq
  %v122 = vshrl.u32 %v121, 7
  %v123 = vsub.s32 0, %v122
  %v124 = vrot.slane %v119, %v123
  %v125 = vlaneseq
  %v126 = vshrl.u32 %v125, 7
  %v127 = vsub.s32 1, %v126
  %v128 = vrot.slane %v119, %v127
  %v129 = vlaneseq
  %v130 = vshrl.u32 %v129, 7
  %v131 = vsub.s32 2, %v130
  %v132 = vrot.slane %v119, %v131
  %v133 = vlaneseq
  %v134 = vshrl.u32 %v133, 7
  %v135 = vsub.s32 3, %v134
  %v136 = vrot.slane %v119, %v135
  %v173 = vunpack.c.l.b16 %v15
  %v174 = vunpack.c.h.b16 %v15
  %v175 = vunpack.c.l.b16 %v16
  %v176 = vunpack.c.l.b16 %v17
  %v177 = vunpack.c.h.b16 %v17
  %v178 = vunpack.c.l.b16 %v18
  %v179 = vunpack.c.l.b16 %v19
  %v180 = vunpack.c.h.b16 %v19
  %v181 = vunpack.c.l.b16 %v20
  %v182 = vunpack.c.l.b16 %v21
  %v183 = vunpack.c.h.b16 %v21
  %v184 = vunpack.c.l.b16 %v22
  %v185 = vunpack.c.l.b16 %v23
  %v186 = vunpack.c.h.b16 %v23
  %v187 = vunpack.c.l.b16 %v24
  %v188 = vunpack.c.l.b16 %v25
  %v189 = vunpack.c.h.b16 %v25
  %v190 = vunpack.c.l.b16 %v26
  %v191 = vunpack.c.l.b16 %v27
  %v192 = vunpack.c.h.b16 %v27
  %v193 = vunpack.c.l.b16 %v28
  %v194 = vunpack.c.l.b16 %v29
  %v195 = vunpack.c.h.b16 %v29
  %v196 = vunpack.c.l.b16 %v30
  %v197 = vunpack.c.l.b16 %v31
  %v198 = vunpack.c.h.b16 %v31
  %v199 = vunpack.c.l.b16 %v32
  %v200 = vunpack.c.l.b16 %v33
  %v201 = vunpack.c.h.b16 %v33
  %v202 = vunpack.c.l.b16 %v34
  %v203 = vunpack.c.l.b16 %v35
  %v204 = vunpack.c.h.b16 %v35
  %v205 = vunpack.c.l.b16 %v36
  %v206 = vunpack.c.l.b16 %v37
  %v207 = vunpack.c.h.b16 %v37
  %v208 = vunpack.c.l.b16 %v38
  %v209 = vunpack.c.l.b16 %v39
  %v210 = vunpack.c.h.b16 %v39
  %v211 = vunpack.c.l.b16 %v40
  %v212 = vunpack.c.l.b16 %v41
  %v213 = vunpack.c.h.b16 %v41
  %v214 = vunpack.c.l.b16 %v42
  %v215 = vunpack.c.l.b16 %v43
  %v216 = vunpack.c.h.b16 %v43
  %v217 = vunpack.c.l.b16 %v44
  %v218 = vunpack.c.l.b16 %v45
  %v219 = vunpack.c.h.b16 %v45
  %v220 = vunpack.c.l.b16 %v46
  %v221 = vpack.c.b16 %v176, %v173
  %v222 = vpack.c.b16 %v177, %v174
  %v223 = vpack.c.b16 %v178, %v175
  %v224 = vpack.c.b16 %v182, %v179
  %v225 = vpack.c.b16 %v183, %v180
  %v226 = vpack.c.b16 %v184, %v181
  %v227 = vpack.c.b16 %v188, %v185
  %v228 = vpack.c.b16 %v189, %v186
  %v229 = vpack.c.b16 %v190, %v187
  %v230 = vpack.c.b16 %v194, %v191
  %v231 = vpack.c.b16 %v195, %v192
  %v232 = vpack.c.b16 %v196, %v193
  %v233 = vpack.c.b16 %v200, %v197
  %v234 = vpack.c.b16 %v201, %v198
  %v235 = vpack.c.b16 %v202, %v199
  %v236 = vpack.c.b16 %v206, %v203
  %v237 = vpack.c.b16 %v207, %v204
  %v238 = vpack.c.b16 %v208, %v205
  %v239 = vpack.c.b16 %v212, %v209
  %v240 = vpack.c.b16 %v213, %v210
  %v241 = vpack.c.b16 %v214, %v211
  %v242 = vpack.c.b16 %v218, %v215
  %v243 = vpack.c.b16 %v219, %v216
  %v244 = vpack.c.b16 %v220, %v217
  %v333 = vunpack.c.l.b16 %v47
  %v334 = vunpack.c.h.b16 %v47
  %v335 = vunpack.c.l.b16 %v48
  %v336 = vunpack.c.h.b16 %v48
  %v337 = vunpack.c.l.b16 %v49
  %v338 = vunpack.c.h.b16 %v49
  %v339 = vunpack.c.l.b16 %v50
  %v340 = vunpack.c.h.b16 %v50
  %v341 = vunpack.c.l.b16 %v51
  %v342 = vunpack.c.h.b16 %v51
  %v343 = vunpack.c.l.b16 %v52
  %v344 = vunpack.c.h.b16 %v52
  %v345 = vunpack.c.l.b16 %v53
  %v346 = vunpack.c.h.b16 %v53
  %v347 = vunpack.c.l.b16 %v54
  %v348 = vunpack.c.h.b16 %v54
  %v349 = vunpack.c.l.b16 %v55
  %v350 = vunpack.c.h.b16 %v55
  %v351 = vunpack.c.l.b16 %v56
  %v352 = vunpack.c.h.b16 %v56
  %v353 = vunpack.c.l.b16 %v57
  %v354 = vunpack.c.h.b16 %v57
  %v355 = vunpack.c.l.b16 %v58
  %v356 = vunpack.c.h.b16 %v58
  %v357 = vunpack.c.l.b16 %v59
  %v358 = vunpack.c.h.b16 %v59
  %v359 = vunpack.c.l.b16 %v60
  %v360 = vunpack.c.h.b16 %v60
  %v361 = vunpack.c.l.b16 %v61
  %v362 = vunpack.c.h.b16 %v61
  %v363 = vunpack.c.l.b16 %v62
  %v364 = vunpack.c.h.b16 %v62
  %v365 = vunpack.c.l.b16 %v63
  %v366 = vunpack.c.h.b16 %v63
  %v367 = vunpack.c.l.b16 %v64
  %v368 = vunpack.c.h.b16 %v64
  %v369 = vunpack.c.l.b16 %v65
  %v370 = vunpack.c.h.b16 %v65
  %v371 = vunpack.c.l.b16 %v66
  %v372 = vunpack.c.h.b16 %v66
  %v373 = vunpack.c.l.b16 %v67
  %v374 = vunpack.c.h.b16 %v67
  %v375 = vunpack.c.l.b16 %v68
  %v376 = vunpack.c.h.b16 %v68
  %v377 = vunpack.c.l.b16 %v69
  %v378 = vunpack.c.h.b16 %v69
  %v379 = vunpack.c.l.b16 %v70
  %v380 = vunpack.c.h.b16 %v70
  %v381 = vunpack.c.l.b16 %v71
  %v382 = vunpack.c.h.b16 %v71
  %v383 = vunpack.c.l.b16 %v72
  %v384 = vunpack.c.h.b16 %v72
  %v385 = vunpack.c.l.b16 %v73
  %v386 = vunpack.c.h.b16 %v73
  %v387 = vunpack.c.l.b16 %v74
  %v388 = vunpack.c.h.b16 %v74
  %v389 = vunpack.c.l.b16 %v75
  %v390 = vunpack.c.h.b16 %v75
  %v391 = vunpack.c.l.b16 %v76
  %v392 = vunpack.c.h.b16 %v76
  %v393 = vunpack.c.l.b16 %v77
  %v394 = vunpack.c.h.b16 %v77
  %v395 = vunpack.c.l.b16 %v78
  %v396 = vunpack.c.h.b16 %v78
  %v397 = vunpack.c.l.b16 %v79
  %v398 = vunpack.c.h.b16 %v79
  %v399 = vunpack.c.l.b16 %v80
  %v400 = vunpack.c.h.b16 %v80
  %v401 = vunpack.c.l.b16 %v81
  %v402 = vunpack.c.h.b16 %v81
  %v403 = vunpack.c.l.b16 %v82
  %v404 = vunpack.c.h.b16 %v82
  %v405 = vunpack.c.l.b16 %v83
  %v406 = vunpack.c.h.b16 %v83
  %v407 = vunpack.c.l.b16 %v84
  %v408 = vunpack.c.h.b16 %v84
  %v409 = vunpack.c.l.b16 %v85
  %v410 = vunpack.c.h.b16 %v85
  %v411 = vunpack.c.l.b16 %v86
  %v412 = vunpack.c.h.b16 %v86
  %v413 = vunpack.c.l.b16 %v87
  %v414 = vunpack.c.h.b16 %v87
  %v415 = vunpack.c.l.b16 %v88
  %v416 = vunpack.c.h.b16 %v88
  %v417 = vunpack.c.l.b16 %v89
  %v418 = vunpack.c.h.b16 %v89
  %v419 = vunpack.c.l.b16 %v90
  %v420 = vunpack.c.h.b16 %v90
  %v421 = vunpack.c.l.b16 %v91
  %v422 = vunpack.c.h.b16 %v91
  %v423 = vunpack.c.l.b16 %v92
  %v424 = vunpack.c.h.b16 %v92
  %v425 = vunpack.c.l.b16 %v93
  %v426 = vunpack.c.h.b16 %v93
  %v427 = vunpack.c.l.b16 %v94
  %v428 = vunpack.c.h.b16 %v94
  %v429 = vunpack.c.l.b16 %v95
  %v430 = vunpack.c.h.b16 %v95
  %v431 = vunpack.c.l.b16 %v96
  %v432 = vunpack.c.h.b16 %v96
  %v433 = vunpack.c.l.b16 %v97
  %v434 = vunpack.c.h.b16 %v97
  %v435 = vunpack.c.l.b16 %v98
  %v436 = vunpack.c.h.b16 %v98
  %v437 = vunpack.c.l.b16 %v99
  %v438 = vunpack.c.h.b16 %v99
  %v439 = vunpack.c.l.b16 %v100
  %v440 = vunpack.c.h.b16 %v100
  %v441 = vunpack.c.l.b16 %v101
  %v442 = vunpack.c.h.b16 %v101
  %v443 = vunpack.c.l.b16 %v102
  %v444 = vunpack.c.h.b16 %v102
  %v445 = vunpack.c.l.b16 %v103
  %v446 = vunpack.c.h.b16 %v103
  %v447 = vunpack.c.l.b16 %v104
  %v448 = vunpack.c.h.b16 %v104
  %v449 = vunpack.c.l.b16 %v105
  %v450 = vunpack.c.h.b16 %v105
  %v451 = vunpack.c.l.b16 %v106
  %v452 = vunpack.c.h.b16 %v106
  %v453 = vunpack.c.l.b16 %v107
  %v454 = vunpack.c.h.b16 %v107
  %v455 = vunpack.c.l.b16 %v108
  %v456 = vunpack.c.h.b16 %v108
  %v457 = vunpack.c.l.b16 %v109
  %v458 = vunpack.c.h.b16 %v109
  %v459 = vunpack.c.l.b16 %v110
  %v460 = vunpack.c.h.b16 %v110
  %v461 = vunpack.c.l.b16 %v111
  %v462 = vunpack.c.h.b16 %v111
  %v463 = vunpack.c.l.b16 %v112
  %v464 = vunpack.c.h.b16 %v112
  %v465 = vunpack.c.l.b16 %v113
  %v466 = vunpack.c.h.b16 %v113
  %v467 = vunpack.c.l.b16 %v114
  %v468 = vunpack.c.h.b16 %v114
  %v469 = vunpack.c.l.b16 %v115
  %v470 = vunpack.c.h.b16 %v115
  %v471 = vunpack.c.l.b16 %v116
  %v472 = vunpack.c.h.b16 %v116
  %v473 = vunpack.c.l.b16 %v117
  %v474 = vunpack.c.h.b16 %v117
  %v475 = vunpack.c.l.b16 %v118
  %v476 = vunpack.c.h.b16 %v118
  %v477 = vpack.c.b16 %v337, %v333
  %v478 = vpack.c.b16 %v338, %v334
  %v479 = vpack.c.b16 %v339, %v335
  %v480 = vpack.c.b16 %v340, %v336
  %v481 = vpack.c.b16 %v345, %v341
  %v482 = vpack.c.b16 %v346, %v342
  %v483 = vpack.c.b16 %v347, %v343
  %v484 = vpack.c.b16 %v348, %v344
  %v485 = vpack.c.b16 %v353, %v349
  %v486 = vpack.c.b16 %v354, %v350
  %v487 = vpack.c.b16 %v355, %v351
  %v488 = vpack.c.b16 %v356, %v352
  %v489 = vpack.c.b16 %v361, %v357
  %v490 = vpack.c.b16 %v362, %v358
  %v491 = vpack.c.b16 %v363, %v359
  %v492 = vpack.c.b16 %v364, %v360
  %v493 = vpack.c.b16 %v369, %v365
  %v494 = vpack.c.b16 %v370, %v366
  %v495 = vpack.c.b16 %v371, %v367
  %v496 = vpack.c.b16 %v372, %v368
  %v497 = vpack.c.b16 %v377, %v373
  %v498 = vpack.c.b16 %v378, %v374
  %v499 = vpack.c.b16 %v379, %v375
  %v500 = vpack.c.b16 %v380, %v376
  %v501 = vpack.c.b16 %v385, %v381
  %v502 = vpack.c.b16 %v386, %v382
  %v503 = vpack.c.b16 %v387, %v383
  %v504 = vpack.c.b16 %v388, %v384
  %v505 = vpack.c.b16 %v393, %v389
  %v506 = vpack.c.b16 %v394, %v390
  %v507 = vpack.c.b16 %v395, %v391
  %v508 = vpack.c.b16 %v396, %v392
  %v509 = vpack.c.b16 %v401, %v397
  %v510 = vpack.c.b16 %v402, %v398
  %v511 = vpack.c.b16 %v403, %v399
  %v512 = vpack.c.b16 %v404, %v400
  %v513 = vpack.c.b16 %v409, %v405
  %v514 = vpack.c.b16 %v410, %v406
  %v515 = vpack.c.b16 %v411, %v407
  %v516 = vpack.c.b16 %v412, %v408
  %v517 = vpack.c.b16 %v417, %v413
  %v518 = vpack.c.b16 %v418, %v414
  %v519 = vpack.c.b16 %v419, %v415
  %v520 = vpack.c.b16 %v420, %v416
  %v521 = vpack.c.b16 %v425, %v421
  %v522 = vpack.c.b16 %v426, %v422
  %v523 = vpack.c.b16 %v427, %v423
  %v524 = vpack.c.b16 %v428, %v424
  %v525 = vpack.c.b16 %v433, %v429
  %v526 = vpack.c.b16 %v434, %v430
  %v527 = vpack.c.b16 %v435, %v431
  %v528 = vpack.c.b16 %v436, %v432
  %v529 = vpack.c.b16 %v441, %v437
  %v530 = vpack.c.b16 %v442, %v438
  %v531 = vpack.c.b16 %v443, %v439
  %v532 = vpack.c.b16 %v444, %v440
  %v533 = vpack.c.b16 %v449, %v445
  %v534 = vpack.c.b16 %v450, %v446
  %v535 = vpack.c.b16 %v451, %v447
  %v536 = vpack.c.b16 %v452, %v448
  %v537 = vpack.c.b16 %v457, %v453
  %v538 = vpack.c.b16 %v458, %v454
  %v539 = vpack.c.b16 %v459, %v455
  %v540 = vpack.c.b16 %v460, %v456
  %v541 = vpack.c.b16 %v465, %v461
  %v542 = vpack.c.b16 %v466, %v462
  %v543 = vpack.c.b16 %v467, %v463
  %v544 = vpack.c.b16 %v468, %v464
  %v545 = vpack.c.b16 %v473, %v469
  %v546 = vpack.c.b16 %v474, %v470
  %v547 = vpack.c.b16 %v475, %v471
  %v548 = vpack.c.b16 %v476, %v472
  %vm621 = vcmask 261120
  %v623 = vsel %vm621, %v223, 0
  %v626 = vsel %vm621, %v226, 0
  %v629 = vsel %vm621, %v229, 0
  %v632 = vsel %vm621, %v232, 0
  %v635 = vsel %vm621, %v235, 0
  %v638 = vsel %vm621, %v238, 0
  %v641 = vsel %vm621, %v241, 0
  %v644 = vsel %vm621, %v244, 0
  %646 = vmatprep.subr.bf16.mxu0 %v478
  %647 = vmatpush1.bf16.msra.mxu0 %v477
  %648 = vmatprep.subr.bf16.mxu0 %v482
  %649 = vmatpush1.bf16.msra.mxu0 %v481
  %650 = vmatprep.subr.bf16.mxu0 %v486
  %651 = vmatpush1.bf16.msra.mxu0 %v485
  %652 = vmatprep.subr.bf16.mxu0 %v490
  %653 = vmatpush1.bf16.msra.mxu0 %v489
  %654 = vmatprep.subr.bf16.mxu0 %v494
  %655 = vmatpush1.bf16.msra.mxu0 %v493
  %656 = vmatprep.subr.bf16.mxu0 %v498
  %657 = vmatpush1.bf16.msra.mxu0 %v497
  %658 = vmatprep.subr.bf16.mxu0 %v502
  %659 = vmatpush1.bf16.msra.mxu0 %v501
  %660 = vmatprep.subr.bf16.mxu0 %v506
  %661 = vmatpush1.bf16.msra.mxu0 %v505
  %662 = vmatprep.subr.bf16.mxu0 %v510
  %663 = vmatpush1.bf16.msra.mxu0 %v509
  %664 = vmatprep.subr.bf16.mxu0 %v514
  %665 = vmatpush1.bf16.msra.mxu0 %v513
  %666 = vmatprep.subr.bf16.mxu0 %v518
  %667 = vmatpush1.bf16.msra.mxu0 %v517
  %668 = vmatprep.subr.bf16.mxu0 %v522
  %669 = vmatpush1.bf16.msra.mxu0 %v521
  %670 = vmatprep.subr.bf16.mxu0 %v526
  %671 = vmatpush1.bf16.msra.mxu0 %v525
  %672 = vmatprep.subr.bf16.mxu0 %v530
  %673 = vmatpush1.bf16.msra.mxu0 %v529
  %674 = vmatprep.subr.bf16.mxu0 %v534
  %675 = vmatpush1.bf16.msra.mxu0 %v533
  %676 = vmatprep.subr.bf16.mxu0 %v538
  %677 = vmatpush1.bf16.msra.mxu0 %v537
  %678 = vmatprep.mubr.bf16.mxu0 %v222
  %679 = vmatmul.mubr.bf16.gmra.mrb[0].mxu0 %v221
  %v680 = vpop.f32.mrb[0].mxu0
  %v681 = vadd.f32 %v124, %v680
  %v682 = vpop.f32.mrb[0].mxu0
  %v683 = vadd.f32 %v128, %v682
  %v684 = vpop.f32.mrb[0].mxu0
  %v685 = vadd.f32 %v124, %v684
  %v686 = vpop.f32.mrb[0].mxu0
  %v687 = vadd.f32 %v128, %v686
  %688 = vmatprep.mubr.bf16.mxu0 %v225
  %689 = vmatmul.mubr.bf16.gmra.mrb[0].mxu0 %v224
  %v690 = vpop.f32.mrb[0].mxu0
  %v691 = vadd.f32 %v124, %v690
  %v692 = vpop.f32.mrb[0].mxu0
  %v693 = vadd.f32 %v128, %v692
  %v694 = vpop.f32.mrb[0].mxu0
  %v695 = vadd.f32 %v124, %v694
  %v696 = vpop.f32.mrb[0].mxu0
  %v697 = vadd.f32 %v128, %v696
  %698 = vmatprep.mubr.bf16.mxu0 %v228
  %699 = vmatmul.mubr.bf16.gmra.mrb[0].mxu0 %v227
  %v700 = vpop.f32.mrb[0].mxu0
  %v701 = vadd.f32 %v124, %v700
  %v702 = vpop.f32.mrb[0].mxu0
  %v703 = vadd.f32 %v128, %v702
  %v704 = vpop.f32.mrb[0].mxu0
  %v705 = vadd.f32 %v124, %v704
  %v706 = vpop.f32.mrb[0].mxu0
  %v707 = vadd.f32 %v128, %v706
  %708 = vmatprep.mubr.bf16.mxu0 %v231
  %709 = vmatmul.mubr.bf16.gmra.mrb[0].mxu0 %v230
  %v710 = vpop.f32.mrb[0].mxu0
  %v711 = vadd.f32 %v124, %v710
  %v712 = vpop.f32.mrb[0].mxu0
  %v713 = vadd.f32 %v128, %v712
  %v714 = vpop.f32.mrb[0].mxu0
  %v715 = vadd.f32 %v124, %v714
  %v716 = vpop.f32.mrb[0].mxu0
  %v717 = vadd.f32 %v128, %v716
  %718 = vmatprep.mubr.bf16.mxu0 %v234
  %719 = vmatmul.mubr.bf16.gmra.mrb[0].mxu0 %v233
  %v720 = vpop.f32.mrb[0].mxu0
  %v721 = vadd.f32 %v124, %v720
  %v722 = vpop.f32.mrb[0].mxu0
  %v723 = vadd.f32 %v128, %v722
  %v724 = vpop.f32.mrb[0].mxu0
  %v725 = vadd.f32 %v124, %v724
  %v726 = vpop.f32.mrb[0].mxu0
  %v727 = vadd.f32 %v128, %v726
  %728 = vmatprep.mubr.bf16.mxu0 %v237
  %729 = vmatmul.mubr.bf16.gmra.mrb[0].mxu0 %v236
  %v730 = vpop.f32.mrb[0].mxu0
  %v731 = vadd.f32 %v124, %v730
  %v732 = vpop.f32.mrb[0].mxu0
  %v733 = vadd.f32 %v128, %v732
  %v734 = vpop.f32.mrb[0].mxu0
  %v735 = vadd.f32 %v124, %v734
  %v736 = vpop.f32.mrb[0].mxu0
  %v737 = vadd.f32 %v128, %v736
  %738 = vmatprep.mubr.bf16.mxu0 %v240
  %739 = vmatmul.mubr.bf16.gmra.mrb[0].mxu0 %v239
  %v740 = vpop.f32.mrb[0].mxu0
  %v741 = vadd.f32 %v124, %v740
  %v742 = vpop.f32.mrb[0].mxu0
  %v743 = vadd.f32 %v128, %v742
  %v744 = vpop.f32.mrb[0].mxu0
  %v745 = vadd.f32 %v124, %v744
  %v746 = vpop.f32.mrb[0].mxu0
  %v747 = vadd.f32 %v128, %v746
  %748 = vmatprep.mubr.bf16.mxu0 %v243
  %749 = vmatmul.mubr.bf16.gmra.mrb[0].mxu0 %v242
  %v750 = vpop.f32.mrb[0].mxu0
  %v751 = vadd.f32 %v124, %v750
  %v752 = vpop.f32.mrb[0].mxu0
  %v753 = vadd.f32 %v128, %v752
  %v754 = vpop.f32.mrb[0].mxu0
  %v755 = vadd.f32 %v124, %v754
  %v756 = vpop.f32.mrb[0].mxu0
  %v757 = vadd.f32 %v128, %v756
  %758 = vdwg.mxu0
  %759 = vmatprep.subr.bf16.mxu0 %v542
  %760 = vmatpush1.bf16.msra.mxu0 %v541
  %761 = vmatprep.subr.bf16.mxu0 %v546
  %762 = vmatpush1.bf16.msra.mxu0 %v545
  %763 = vmatprep.subr.bf16.mxu0 0
  %764 = vmatpush1.bf16.msra.mxu0 0
  %765 = vmatprep.subr.bf16.mxu0 0
  %766 = vmatpush1.bf16.msra.mxu0 0
  %767 = vmatprep.subr.bf16.mxu0 0
  %768 = vmatpush1.bf16.msra.mxu0 0
  %769 = vmatprep.subr.bf16.mxu0 0
  %770 = vmatpush1.bf16.msra.mxu0 0
  %771 = vmatprep.subr.bf16.mxu0 0
  %772 = vmatpush1.bf16.msra.mxu0 0
  %773 = vmatprep.subr.bf16.mxu0 0
  %774 = vmatpush1.bf16.msra.mxu0 0
  %775 = vmatprep.subr.bf16.mxu0 0
  %776 = vmatpush1.bf16.msra.mxu0 0
  %777 = vmatprep.subr.bf16.mxu0 0
  %778 = vmatpush1.bf16.msra.mxu0 0
  %779 = vmatprep.subr.bf16.mxu0 0
  %780 = vmatpush1.bf16.msra.mxu0 0
  %781 = vmatprep.subr.bf16.mxu0 0
  %782 = vmatpush1.bf16.msra.mxu0 0
  %783 = vmatprep.subr.bf16.mxu0 0
  %784 = vmatpush1.bf16.msra.mxu0 0
  %785 = vmatprep.subr.bf16.mxu0 0
  %786 = vmatpush1.bf16.msra.mxu0 0
  %787 = vmatprep.subr.bf16.mxu0 0
  %788 = vmatpush1.bf16.msra.mxu0 0
  %789 = vmatprep.subr.bf16.mxu0 0
  %790 = vmatpush1.bf16.msra.mxu0 0
  %791 = vmatprep.mubr.bf16.mxu0 0
  %792 = vmatmul.mubr.bf16.gmra.mrb[0].mxu0 %v623
  %v793 = vpop.f32.mrb[0].mxu0
  %v794 = vadd.f32 %v681, %v793
  %v795 = vpop.f32.mrb[0].mxu0
  %v796 = vadd.f32 %v683, %v795
  %v797 = vpop.f32.mrb[0].mxu0
  %v798 = vadd.f32 %v685, %v797
  %v799 = vpop.f32.mrb[0].mxu0
  %v800 = vadd.f32 %v687, %v799
  %801 = vmatprep.mubr.bf16.mxu0 0
  %802 = vmatmul.mubr.bf16.gmra.mrb[0].mxu0 %v626
  %v803 = vpop.f32.mrb[0].mxu0
  %v804 = vadd.f32 %v691, %v803
  %v805 = vpop.f32.mrb[0].mxu0
  %v806 = vadd.f32 %v693, %v805
  %v807 = vpop.f32.mrb[0].mxu0
  %v808 = vadd.f32 %v695, %v807
  %v809 = vpop.f32.mrb[0].mxu0
  %v810 = vadd.f32 %v697, %v809
  %811 = vmatprep.mubr.bf16.mxu0 0
  %812 = vmatmul.mubr.bf16.gmra.mrb[0].mxu0 %v629
  %v813 = vpop.f32.mrb[0].mxu0
  %v814 = vadd.f32 %v701, %v813
  %v815 = vpop.f32.mrb[0].mxu0
  %v816 = vadd.f32 %v703, %v815
  %v817 = vpop.f32.mrb[0].mxu0
  %v818 = vadd.f32 %v705, %v817
  %v819 = vpop.f32.mrb[0].mxu0
  %v820 = vadd.f32 %v707, %v819
  %821 = vmatprep.mubr.bf16.mxu0 0
  %822 = vmatmul.mubr.bf16.gmra.mrb[0].mxu0 %v632
  %v823 = vpop.f32.mrb[0].mxu0
  %v824 = vadd.f32 %v711, %v823
  %v825 = vpop.f32.mrb[0].mxu0
  %v826 = vadd.f32 %v713, %v825
  %v827 = vpop.f32.mrb[0].mxu0
  %v828 = vadd.f32 %v715, %v827
  %v829 = vpop.f32.mrb[0].mxu0
  %v830 = vadd.f32 %v717, %v829
  %831 = vmatprep.mubr.bf16.mxu0 0
  %832 = vmatmul.mubr.bf16.gmra.mrb[0].mxu0 %v635
  %v833 = vpop.f32.mrb[0].mxu0
  %v834 = vadd.f32 %v721, %v833
  %v835 = vpop.f32.mrb[0].mxu0
  %v836 = vadd.f32 %v723, %v835
  %v837 = vpop.f32.mrb[0].mxu0
  %v838 = vadd.f32 %v725, %v837
  %v839 = vpop.f32.mrb[0].mxu0
  %v840 = vadd.f32 %v727, %v839
  %841 = vmatprep.mubr.bf16.mxu0 0
  %842 = vmatmul.mubr.bf16.gmra.mrb[0].mxu0 %v638
  %v843 = vpop.f32.mrb[0].mxu0
  %v844 = vadd.f32 %v731, %v843
  %v845 = vpop.f32.mrb[0].mxu0
  %v846 = vadd.f32 %v733, %v845
  %v847 = vpop.f32.mrb[0].mxu0
  %v848 = vadd.f32 %v735, %v847
  %v849 = vpop.f32.mrb[0].mxu0
  %v850 = vadd.f32 %v737, %v849
  %851 = vmatprep.mubr.bf16.mxu0 0
  %852 = vmatmul.mubr.bf16.gmra.mrb[0].mxu0 %v641
  %v853 = vpop.f32.mrb[0].mxu0
  %v854 = vadd.f32 %v741, %v853
  %v855 = vpop.f32.mrb[0].mxu0
  %v856 = vadd.f32 %v743, %v855
  %v857 = vpop.f32.mrb[0].mxu0
  %v858 = vadd.f32 %v745, %v857
  %v859 = vpop.f32.mrb[0].mxu0
  %v860 = vadd.f32 %v747, %v859
  %861 = vmatprep.mubr.bf16.mxu0 0
  %862 = vmatmul.mubr.bf16.gmra.mrb[0].mxu0 %v644
  %v863 = vpop.f32.mrb[0].mxu0
  %v864 = vadd.f32 %v751, %v863
  %v865 = vpop.f32.mrb[0].mxu0
  %v866 = vadd.f32 %v753, %v865
  %v867 = vpop.f32.mrb[0].mxu0
  %v868 = vadd.f32 %v755, %v867
  %v869 = vpop.f32.mrb[0].mxu0
  %v870 = vadd.f32 %v757, %v869
  %871 = vdwg.mxu0
  %872 = vmatprep.subr.bf16.mxu0 %v480
  %873 = vmatpush1.bf16.msra.mxu0 %v479
  %874 = vmatprep.subr.bf16.mxu0 %v484
  %875 = vmatpush1.bf16.msra.mxu0 %v483
  %876 = vmatprep.subr.bf16.mxu0 %v488
  %877 = vmatpush1.bf16.msra.mxu0 %v487
  %878 = vmatprep.subr.bf16.mxu0 %v492
  %879 = vmatpush1.bf16.msra.mxu0 %v491
  %880 = vmatprep.subr.bf16.mxu0 %v496
  %881 = vmatpush1.bf16.msra.mxu0 %v495
  %882 = vmatprep.subr.bf16.mxu0 %v500
  %883 = vmatpush1.bf16.msra.mxu0 %v499
  %884 = vmatprep.subr.bf16.mxu0 %v504
  %885 = vmatpush1.bf16.msra.mxu0 %v503
  %886 = vmatprep.subr.bf16.mxu0 %v508
  %887 = vmatpush1.bf16.msra.mxu0 %v507
  %888 = vmatprep.subr.bf16.mxu0 %v512
  %889 = vmatpush1.bf16.msra.mxu0 %v511
  %890 = vmatprep.subr.bf16.mxu0 %v516
  %891 = vmatpush1.bf16.msra.mxu0 %v515
  %892 = vmatprep.subr.bf16.mxu0 %v520
  %893 = vmatpush1.bf16.msra.mxu0 %v519
  %894 = vmatprep.subr.bf16.mxu0 %v524
  %895 = vmatpush1.bf16.msra.mxu0 %v523
  %896 = vmatprep.subr.bf16.mxu0 %v528
  %897 = vmatpush1.bf16.msra.mxu0 %v527
  %898 = vmatprep.subr.bf16.mxu0 %v532
  %899 = vmatpush1.bf16.msra.mxu0 %v531
  %900 = vmatprep.subr.bf16.mxu0 %v536
  %901 = vmatpush1.bf16.msra.mxu0 %v535
  %902 = vmatprep.subr.bf16.mxu0 %v540
  %903 = vmatpush1.bf16.msra.mxu0 %v539
  %904 = vmatprep.mubr.bf16.mxu0 %v222
  %905 = vmatmul.mubr.bf16.gmra.mrb[0].mxu0 %v221
  %v906 = vpop.f32.mrb[0].mxu0
  %v907 = vadd.f32 %v132, %v906
  %v908 = vpop.f32.mrb[0].mxu0
  %v909 = vadd.f32 %v136, %v908
  %v910 = vpop.f32.mrb[0].mxu0
  %v911 = vadd.f32 %v132, %v910
  %v912 = vpop.f32.mrb[0].mxu0
  %v913 = vadd.f32 %v136, %v912
  %914 = vmatprep.mubr.bf16.mxu0 %v225
  %915 = vmatmul.mubr.bf16.gmra.mrb[0].mxu0 %v224
  %v916 = vpop.f32.mrb[0].mxu0
  %v917 = vadd.f32 %v132, %v916
  %v918 = vpop.f32.mrb[0].mxu0
  %v919 = vadd.f32 %v136, %v918
  %v920 = vpop.f32.mrb[0].mxu0
  %v921 = vadd.f32 %v132, %v920
  %v922 = vpop.f32.mrb[0].mxu0
  %v923 = vadd.f32 %v136, %v922
  %924 = vmatprep.mubr.bf16.mxu0 %v228
  %925 = vmatmul.mubr.bf16.gmra.mrb[0].mxu0 %v227
  %v926 = vpop.f32.mrb[0].mxu0
  %v927 = vadd.f32 %v132, %v926
  %v928 = vpop.f32.mrb[0].mxu0
  %v929 = vadd.f32 %v136, %v928
  %v930 = vpop.f32.mrb[0].mxu0
  %v931 = vadd.f32 %v132, %v930
  %v932 = vpop.f32.mrb[0].mxu0
  %v933 = vadd.f32 %v136, %v932
  %934 = vmatprep.mubr.bf16.mxu0 %v231
  %935 = vmatmul.mubr.bf16.gmra.mrb[0].mxu0 %v230
  %v936 = vpop.f32.mrb[0].mxu0
  %v937 = vadd.f32 %v132, %v936
  %v938 = vpop.f32.mrb[0].mxu0
  %v939 = vadd.f32 %v136, %v938
  %v940 = vpop.f32.mrb[0].mxu0
  %v941 = vadd.f32 %v132, %v940
  %v942 = vpop.f32.mrb[0].mxu0
  %v943 = vadd.f32 %v136, %v942
  %944 = vmatprep.mubr.bf16.mxu0 %v234
  %945 = vmatmul.mubr.bf16.gmra.mrb[0].mxu0 %v233
  %v946 = vpop.f32.mrb[0].mxu0
  %v947 = vadd.f32 %v132, %v946
  %v948 = vpop.f32.mrb[0].mxu0
  %v949 = vadd.f32 %v136, %v948
  %v950 = vpop.f32.mrb[0].mxu0
  %v951 = vadd.f32 %v132, %v950
  %v952 = vpop.f32.mrb[0].mxu0
  %v953 = vadd.f32 %v136, %v952
  %954 = vmatprep.mubr.bf16.mxu0 %v237
  %955 = vmatmul.mubr.bf16.gmra.mrb[0].mxu0 %v236
  %v956 = vpop.f32.mrb[0].mxu0
  %v957 = vadd.f32 %v132, %v956
  %v958 = vpop.f32.mrb[0].mxu0
  %v959 = vadd.f32 %v136, %v958
  %v960 = vpop.f32.mrb[0].mxu0
  %v961 = vadd.f32 %v132, %v960
  %v962 = vpop.f32.mrb[0].mxu0
  %v963 = vadd.f32 %v136, %v962
  %964 = vmatprep.mubr.bf16.mxu0 %v240
  %965 = vmatmul.mubr.bf16.gmra.mrb[0].mxu0 %v239
  %v966 = vpop.f32.mrb[0].mxu0
  %v967 = vadd.f32 %v132, %v966
  %v968 = vpop.f32.mrb[0].mxu0
  %v969 = vadd.f32 %v136, %v968
  %v970 = vpop.f32.mrb[0].mxu0
  %v971 = vadd.f32 %v132, %v970
  %v972 = vpop.f32.mrb[0].mxu0
  %v973 = vadd.f32 %v136, %v972
  %974 = vmatprep.mubr.bf16.mxu0 %v243
  %975 = vmatmul.mubr.bf16.gmra.mrb[0].mxu0 %v242
  %v976 = vpop.f32.mrb[0].mxu0
  %v977 = vadd.f32 %v132, %v976
  %v978 = vpop.f32.mrb[0].mxu0
  %v979 = vadd.f32 %v136, %v978
  %v980 = vpop.f32.mrb[0].mxu0
  %v981 = vadd.f32 %v132, %v980
  %v982 = vpop.f32.mrb[0].mxu0
  %v983 = vadd.f32 %v136, %v982
  %984 = vdwg.mxu0
  %985 = vmatprep.subr.bf16.mxu0 %v544
  %986 = vmatpush1.bf16.msra.mxu0 %v543
  %987 = vmatprep.subr.bf16.mxu0 %v548
  %988 = vmatpush1.bf16.msra.mxu0 %v547
  %989 = vmatprep.subr.bf16.mxu0 0
  %990 = vmatpush1.bf16.msra.mxu0 0
  %991 = vmatprep.subr.bf16.mxu0 0
  %992 = vmatpush1.bf16.msra.mxu0 0
  %993 = vmatprep.subr.bf16.mxu0 0
  %994 = vmatpush1.bf16.msra.mxu0 0
  %995 = vmatprep.subr.bf16.mxu0 0
  %996 = vmatpush1.bf16.msra.mxu0 0
  %997 = vmatprep.subr.bf16.mxu0 0
  %998 = vmatpush1.bf16.msra.mxu0 0
  %999 = vmatprep.subr.bf16.mxu0 0
  %1000 = vmatpush1.bf16.msra.mxu0 0
  %1001 = vmatprep.subr.bf16.mxu0 0
  %1002 = vmatpush1.bf16.msra.mxu0 0
  %1003 = vmatprep.subr.bf16.mxu0 0
  %1004 = vmatpush1.bf16.msra.mxu0 0
  %1005 = vmatprep.subr.bf16.mxu0 0
  %1006 = vmatpush1.bf16.msra.mxu0 0
  %1007 = vmatprep.subr.bf16.mxu0 0
  %1008 = vmatpush1.bf16.msra.mxu0 0
  %1009 = vmatprep.subr.bf16.mxu0 0
  %1010 = vmatpush1.bf16.msra.mxu0 0
  %1011 = vmatprep.subr.bf16.mxu0 0
  %1012 = vmatpush1.bf16.msra.mxu0 0
  %1013 = vmatprep.subr.bf16.mxu0 0
  %1014 = vmatpush1.bf16.msra.mxu0 0
  %1015 = vmatprep.subr.bf16.mxu0 0
  %1016 = vmatpush1.bf16.msra.mxu0 0
  %1017 = vmatprep.mubr.bf16.mxu0 0
  %1018 = vmatmul.mubr.bf16.gmra.mrb[0].mxu0 %v623
  %v1019 = vpop.f32.mrb[0].mxu0
  %v1020 = vadd.f32 %v907, %v1019
  %v1021 = vpop.f32.mrb[0].mxu0
  %v1022 = vadd.f32 %v909, %v1021
  %v1023 = vpop.f32.mrb[0].mxu0
  %v1024 = vadd.f32 %v911, %v1023
  %v1025 = vpop.f32.mrb[0].mxu0
  %v1026 = vadd.f32 %v913, %v1025
  %1027 = vmatprep.mubr.bf16.mxu0 0
  %1028 = vmatmul.mubr.bf16.gmra.mrb[0].mxu0 %v626
  %v1029 = vpop.f32.mrb[0].mxu0
  %v1030 = vadd.f32 %v917, %v1029
  %v1031 = vpop.f32.mrb[0].mxu0
  %v1032 = vadd.f32 %v919, %v1031
  %v1033 = vpop.f32.mrb[0].mxu0
  %v1034 = vadd.f32 %v921, %v1033
  %v1035 = vpop.f32.mrb[0].mxu0
  %v1036 = vadd.f32 %v923, %v1035
  %1037 = vmatprep.mubr.bf16.mxu0 0
  %1038 = vmatmul.mubr.bf16.gmra.mrb[0].mxu0 %v629
  %v1039 = vpop.f32.mrb[0].mxu0
  %v1040 = vadd.f32 %v927, %v1039
  %v1041 = vpop.f32.mrb[0].mxu0
  %v1042 = vadd.f32 %v929, %v1041
  %v1043 = vpop.f32.mrb[0].mxu0
  %v1044 = vadd.f32 %v931, %v1043
  %v1045 = vpop.f32.mrb[0].mxu0
  %v1046 = vadd.f32 %v933, %v1045
  %1047 = vmatprep.mubr.bf16.mxu0 0
  %1048 = vmatmul.mubr.bf16.gmra.mrb[0].mxu0 %v632
  %v1049 = vpop.f32.mrb[0].mxu0
  %v1050 = vadd.f32 %v937, %v1049
  %v1051 = vpop.f32.mrb[0].mxu0
  %v1052 = vadd.f32 %v939, %v1051
  %v1053 = vpop.f32.mrb[0].mxu0
  %v1054 = vadd.f32 %v941, %v1053
  %v1055 = vpop.f32.mrb[0].mxu0
  %v1056 = vadd.f32 %v943, %v1055
  %1057 = vmatprep.mubr.bf16.mxu0 0
  %1058 = vmatmul.mubr.bf16.gmra.mrb[0].mxu0 %v635
  %v1059 = vpop.f32.mrb[0].mxu0
  %v1060 = vadd.f32 %v947, %v1059
  %v1061 = vpop.f32.mrb[0].mxu0
  %v1062 = vadd.f32 %v949, %v1061
  %v1063 = vpop.f32.mrb[0].mxu0
  %v1064 = vadd.f32 %v951, %v1063
  %v1065 = vpop.f32.mrb[0].mxu0
  %v1066 = vadd.f32 %v953, %v1065
  %1067 = vmatprep.mubr.bf16.mxu0 0
  %1068 = vmatmul.mubr.bf16.gmra.mrb[0].mxu0 %v638
  %v1069 = vpop.f32.mrb[0].mxu0
  %v1070 = vadd.f32 %v957, %v1069
  %v1071 = vpop.f32.mrb[0].mxu0
  %v1072 = vadd.f32 %v959, %v1071
  %v1073 = vpop.f32.mrb[0].mxu0
  %v1074 = vadd.f32 %v961, %v1073
  %v1075 = vpop.f32.mrb[0].mxu0
  %v1076 = vadd.f32 %v963, %v1075
  %1077 = vmatprep.mubr.bf16.mxu0 0
  %1078 = vmatmul.mubr.bf16.gmra.mrb[0].mxu0 %v641
  %v1079 = vpop.f32.mrb[0].mxu0
  %v1080 = vadd.f32 %v967, %v1079
  %v1081 = vpop.f32.mrb[0].mxu0
  %v1082 = vadd.f32 %v969, %v1081
  %v1083 = vpop.f32.mrb[0].mxu0
  %v1084 = vadd.f32 %v971, %v1083
  %v1085 = vpop.f32.mrb[0].mxu0
  %v1086 = vadd.f32 %v973, %v1085
  %1087 = vmatprep.mubr.bf16.mxu0 0
  %1088 = vmatmul.mubr.bf16.gmra.mrb[0].mxu0 %v644
  %v1089 = vpop.f32.mrb[0].mxu0
  %v1090 = vadd.f32 %v977, %v1089
  %v1091 = vpop.f32.mrb[0].mxu0
  %v1092 = vadd.f32 %v979, %v1091
  %v1093 = vpop.f32.mrb[0].mxu0
  %v1094 = vadd.f32 %v981, %v1093
  %v1095 = vpop.f32.mrb[0].mxu0
  %v1096 = vadd.f32 %v983, %v1095
  %1097 = vdwg.mxu0
  %1098 = vst [vmem:[%s3] sm:$0xff] %v794
  %1099 = vst [vmem:[%s3 + $0x8] sm:$0xff] %v796
  %1100 = vst [vmem:[%s3 + $0x10] sm:$0xff] %v1020
  %1101 = vst [vmem:[%s3 + $0x18] sm:$0xff] %v1022
  %1102 = vst [vmem:[%s3 + $0x20] sm:$0xff] %v798
  %1103 = vst [vmem:[%s3 + $0x28] sm:$0xff] %v800
  %1104 = vst [vmem:[%s3 + $0x30] sm:$0xff] %v1024
  %1105 = vst [vmem:[%s3 + $0x38] sm:$0xff] %v1026
  %1106 = vst [vmem:[%s3 + $0x40] sm:$0xff] %v804
  %1107 = vst [vmem:[%s3 + $0x48] sm:$0xff] %v806
  %1108 = vst [vmem:[%s3 + $0x50] sm:$0xff] %v1030
  %1109 = vst [vmem:[%s3 + $0x58] sm:$0xff] %v1032
  %1110 = vst [vmem:[%s3 + $0x60] sm:$0xff] %v808
  %1111 = vst [vmem:[%s3 + $0x68] sm:$0xff] %v810
  %1112 = vst [vmem:[%s3 + $0x70] sm:$0xff] %v1034
  %1113 = vst [vmem:[%s3 + $0x78] sm:$0xff] %v1036
  %1114 = vst [vmem:[%s3 + $0x80] sm:$0xff] %v814
  %1115 = vst [vmem:[%s3 + $0x88] sm:$0xff] %v816
  %1116 = vst [vmem:[%s3 + $0x90] sm:$0xff] %v1040
  %1117 = vst [vmem:[%s3 + $0x98] sm:$0xff] %v1042
  %1118 = vst [vmem:[%s3 + $0xa0] sm:$0xff] %v818
  %1119 = vst [vmem:[%s3 + $0xa8] sm:$0xff] %v820
  %1120 = vst [vmem:[%s3 + $0xb0] sm:$0xff] %v1044
  %1121 = vst [vmem:[%s3 + $0xb8] sm:$0xff] %v1046
  %1122 = vst [vmem:[%s3 + $0xc0] sm:$0xff] %v824
  %1123 = vst [vmem:[%s3 + $0xc8] sm:$0xff] %v826
  %1124 = vst [vmem:[%s3 + $0xd0] sm:$0xff] %v1050
  %1125 = vst [vmem:[%s3 + $0xd8] sm:$0xff] %v1052
  %1126 = vst [vmem:[%s3 + $0xe0] sm:$0xff] %v828
  %1127 = vst [vmem:[%s3 + $0xe8] sm:$0xff] %v830
  %1128 = vst [vmem:[%s3 + $0xf0] sm:$0xff] %v1054
  %1129 = vst [vmem:[%s3 + $0xf8] sm:$0xff] %v1056
  %1130 = vst [vmem:[%s3 + $0x100] sm:$0xff] %v834
  %1131 = vst [vmem:[%s3 + $0x108] sm:$0xff] %v836
  %1132 = vst [vmem:[%s3 + $0x110] sm:$0xff] %v1060
  %1133 = vst [vmem:[%s3 + $0x118] sm:$0xff] %v1062
  %1134 = vst [vmem:[%s3 + $0x120] sm:$0xff] %v838
  %1135 = vst [vmem:[%s3 + $0x128] sm:$0xff] %v840
  %1136 = vst [vmem:[%s3 + $0x130] sm:$0xff] %v1064
  %1137 = vst [vmem:[%s3 + $0x138] sm:$0xff] %v1066
  %1138 = vst [vmem:[%s3 + $0x140] sm:$0xff] %v844
  %1139 = vst [vmem:[%s3 + $0x148] sm:$0xff] %v846
  %1140 = vst [vmem:[%s3 + $0x150] sm:$0xff] %v1070
  %1141 = vst [vmem:[%s3 + $0x158] sm:$0xff] %v1072
  %1142 = vst [vmem:[%s3 + $0x160] sm:$0xff] %v848
  %1143 = vst [vmem:[%s3 + $0x168] sm:$0xff] %v850
  %1144 = vst [vmem:[%s3 + $0x170] sm:$0xff] %v1074
  %1145 = vst [vmem:[%s3 + $0x178] sm:$0xff] %v1076
  %1146 = vst [vmem:[%s3 + $0x180] sm:$0xff] %v854
  %1147 = vst [vmem:[%s3 + $0x188] sm:$0xff] %v856
  %1148 = vst [vmem:[%s3 + $0x190] sm:$0xff] %v1080
  %1149 = vst [vmem:[%s3 + $0x198] sm:$0xff] %v1082
  %1150 = vst [vmem:[%s3 + $0x1a0] sm:$0xff] %v858
  %1151 = vst [vmem:[%s3 + $0x1a8] sm:$0xff] %v860
  %1152 = vst [vmem:[%s3 + $0x1b0] sm:$0xff] %v1084
  %1153 = vst [vmem:[%s3 + $0x1b8] sm:$0xff] %v1086
  %1154 = vst [vmem:[%s3 + $0x1c0] sm:$0xff] %v864
  %1155 = vst [vmem:[%s3 + $0x1c8] sm:$0xff] %v866
  %1156 = vst [vmem:[%s3 + $0x1d0] sm:$0xff] %v1090
  %1157 = vst [vmem:[%s3 + $0x1d8] sm:$0xff] %v1092
  %1158 = vst [vmem:[%s3 + $0x1e0] sm:$0xff] %v868
  %1159 = vst [vmem:[%s3 + $0x1e8] sm:$0xff] %v870
  %1160 = vst [vmem:[%s3 + $0x1f0] sm:$0xff] %v1094
  %1161 = vst [vmem:[%s3 + $0x1f8] sm:$0xff] %v1096
  // Predicated region
  $region14: #{simple_seg_forward.11} parent=0 // pred_check
    _
  $region15: #{simple_seg_forward.11} parent=0 // pred_check_branch
    %1163 = sbr.rel (0) target = $region17
  $region16: #{simple_seg_forward.11} parent=0 // pred_region
    _
  $region17: #{simple_seg_forward.11} parent=0 // pred_fallthru
    _
  // Predicated region
  $region18: #{simple_seg_forward.11} parent=0 // pred_check
    _
  $region19: #{simple_seg_forward.11} parent=0 // pred_check_branch
    %1165 = sbr.rel (0) target = $region21
  $region20: #{simple_seg_forward.11} parent=0 // pred_region
    _
  $region21: #{simple_seg_forward.11} parent=0 // pred_fallthru
    _

</llo_original>
